<compile_context>
chip_gen: v6e
topology: v6e:2x2x1
jax: 0.10.0
libtpu: 0.0.40
codegen_flags: <defaults>
</compile_context>

<pallas_src>
import math
from functools import partial

import jax
import jax.numpy as jnp
from jax import lax
from jax.experimental import pallas as pl
from jax.experimental.pallas import tpu as pltpu


# ----------------------------- per-generation tuning -----------------------------

def _round_up(x, m):
    return (x + m - 1) // m * m


def _tpu_params():
    """Tile / VMEM preferences per TPU generation."""
    vmem = 64 * 1024 * 1024
    kind = ""
    try:
        vmem = pltpu.get_tpu_info().vmem_capacity_bytes
    except Exception:
        pass
    try:
        kind = jax.devices()[0].device_kind.lower()
    except Exception:
        pass
    big_vmem = vmem >= 100 * 1024 * 1024          # v5e / v6e: 128 MiB physical
    is_v5e = ("v5 lite" in kind) or ("v5e" in kind) or ("v5lite" in kind)
    return {
        # scoped-VMEM cap: generous on 128 MiB parts, conservative on v7x (64 MiB)
        "vmem_limit": (96 if big_vmem else 48) * 1024 * 1024,
        # (tm, tn, tk) matmul tile preferences
        "mm_tiles": (512, 512, 1024) if big_vmem else (256, 512, 512),
        # flash-attention q/kv block: 256 fills the 256x256 MXU on v6e/v7x
        "attn_block": 128 if is_v5e else 256,
    }


_GEN = _tpu_params()
_VMEM_LIMIT = _GEN["vmem_limit"]
_MM_TILES = _GEN["mm_tiles"]
_ATTN_BLOCK = _GEN["attn_block"]


def _choose_tile(dim, pref, align):
    """Pick a tile (multiple of `align`, <= pref) and a padded dim the tile
    divides.  Prefers large tiles with bounded padding waste over exact but
    degenerate (tiny) divisors, so awkward N/K don't collapse to 128-wide
    tiles."""
    padded = _round_up(dim, align)
    if padded <= pref:
        return padded, padded
    # 1) largest exact divisor that is still a healthy fraction of `pref`
    for cand in range(pref, max(align, pref // 2) - 1, -align):
        if padded % cand == 0:
            return cand, padded
    # 2) otherwise pad the dim to a large tile with bounded waste
    for cand in range(pref, align - 1, -align):
        p = _round_up(padded, cand)
        if p - padded <= cand // 2:
            return cand, p
    # 3) degenerate fallback: exact small divisor
    for cand in range(pref, align - 1, -align):
        if padded % cand == 0:
            return cand, padded
    return align, padded


def _pad2(a, rows, cols):
    r, c = a.shape
    if r == rows and c == cols:
        return a
    return jnp.pad(a, ((0, rows - r), (0, cols - c)))


# ----------------------------- matmul kernel -----------------------------

def _gelu_tanh(x):
    # GELU (tanh approximation) — matches nn.GELU(approximate='tanh') in nanoGPT.
    c = math.sqrt(2.0 / math.pi)
    return 0.5 * x * (1.0 + jnp.tanh(c * (x + 0.044715 * x * x * x)))


def _matmul_kernel(*refs, has_bias, has_residual, activation, transpose_rhs):
    # refs: x, w, [bias], [residual], out, acc_scratch
    x_ref, w_ref = refs[0], refs[1]
    i = 2
    b_ref = None
    r_ref = None
    if has_bias:
        b_ref = refs[i]
        i += 1
    if has_residual:
        r_ref = refs[i]
        i += 1
    o_ref = refs[i]
    acc_ref = refs[i + 1]

    k = pl.program_id(2)

    @pl.when(k == 0)
    def _init():
        acc_ref[...] = jnp.zeros_like(acc_ref)

    if transpose_rhs:
        # w tile is (tn, tk): contract on the last dim of both operands — the
        # MXU consumes the transposed operand natively (no XLU transpose).
        acc_ref[...] += lax.dot_general(
            x_ref[...], w_ref[...], (((1,), (1,)), ((), ())),
            preferred_element_type=jnp.float32)
    else:
        acc_ref[...] += jnp.dot(x_ref[...], w_ref[...],
                                preferred_element_type=jnp.float32)

    @pl.when(k == pl.num_programs(2) - 1)
    def _finalize():
        acc = acc_ref[...]
        if has_bias:
            acc = acc + b_ref[...].astype(jnp.float32)
        if activation == "gelu":
            acc = _gelu_tanh(acc)
        if has_residual:
            acc = acc + r_ref[...].astype(jnp.float32)
        o_ref[...] = acc.astype(o_ref.dtype)


def matmul_pallas(x, w, bias=None, residual=None, activation=None,
                  transpose_rhs=False, out_dtype=None):
    """out = act(x @ W + bias) + residual, tiled & pipelined on the MXU.

    x: (M, K).  W: (K, N) or, if transpose_rhs, (N, K).  bias: (N,) or None.
    residual: (M, N) or None.  f32 accumulation in VMEM scratch.
    """
    M, K = x.shape
    if transpose_rhs:
        N, Kw = w.shape
    else:
        Kw, N = w.shape
    assert Kw == K
    out_dtype = out_dtype or x.dtype

    tm_pref, tn_pref, tk_pref = _MM_TILES
    tm, Mp = _choose_tile(M, tm_pref, 16)     # 16-row alignment for bf16 packing
    tn, Np = _choose_tile(N, tn_pref, 128)
    tk, Kp = _choose_tile(K, tk_pref, 128)

    xp = _pad2(x, Mp, Kp)
    if transpose_rhs:
        wp = _pad2(w, Np, Kp)
        w_spec = pl.BlockSpec((tn, tk), lambda i, j, k: (j, k))
    else:
        wp = _pad2(w, Kp, Np)
        w_spec = pl.BlockSpec((tk, tn), lambda i, j, k: (k, j))

    operands = [xp, wp]
    in_specs = [pl.BlockSpec((tm, tk), lambda i, j, k: (i, k)), w_spec]
    if bias is not None:
        operands.append(_pad2(bias.reshape(1, N), 1, Np))
        in_specs.append(pl.BlockSpec((1, tn), lambda i, j, k: (0, j)))
    if residual is not None:
        operands.append(_pad2(residual, Mp, Np))
        in_specs.append(pl.BlockSpec((tm, tn), lambda i, j, k: (i, j)))

    out = pl.pallas_call(
        partial(_matmul_kernel,
                has_bias=bias is not None,
                has_residual=residual is not None,
                activation=activation,
                transpose_rhs=transpose_rhs),
        out_shape=jax.ShapeDtypeStruct((Mp, Np), out_dtype),
        grid=(Mp // tm, Np // tn, Kp // tk),
        in_specs=in_specs,
        out_specs=pl.BlockSpec((tm, tn), lambda i, j, k: (i, j)),
        scratch_shapes=[pltpu.VMEM((tm, tn), jnp.float32)],
        compiler_params=pltpu.CompilerParams(
            dimension_semantics=("parallel", "parallel", "arbitrary"),
            vmem_limit_bytes=_VMEM_LIMIT),
    )(*operands)

    if Mp != M or Np != N:
        out = out[:M, :N]
    return out


# ----------------------------- layernorm kernel -----------------------------

def _layernorm_kernel(x_ref, g_ref, b_ref, o_ref, *, eps):
    x = x_ref[...].astype(jnp.float32)
    mean = jnp.mean(x, axis=-1, keepdims=True)
    xc = x - mean
    var = jnp.mean(xc * xc, axis=-1, keepdims=True)   # biased variance (torch LN)
    y = xc * lax.rsqrt(var + eps)
    o_ref[...] = (y * g_ref[...].astype(jnp.float32)
                  + b_ref[...].astype(jnp.float32)).astype(o_ref.dtype)


def layernorm_pallas(x, g, b, eps=1e-5):
    """x: (M, C), g/b: (C,) -> (M, C). Row-tiled, f32 statistics.

    Row tile is sized against the scoped-VMEM budget (input + output blocks,
    double-buffered), so large-C configs stay inside v7x's 64 MiB VMEM.
    """
    M, C = x.shape
    per_row_bytes = 4 * C * jnp.dtype(x.dtype).itemsize   # (in+out) * 2 buffers
    budget_rows = max(16, (_VMEM_LIMIT // 4) // max(per_row_bytes, 1))
    pref_rows = max(16, (int(min(1024, budget_rows)) // 16) * 16)
    tm, Mp = _choose_tile(M, pref_rows, 16)
    xp = x if Mp == M else jnp.pad(x, ((0, Mp - M), (0, 0)))
    out = pl.pallas_call(
        partial(_layernorm_kernel, eps=eps),
        out_shape=jax.ShapeDtypeStruct((Mp, C), x.dtype),
        grid=(Mp // tm,),
        in_specs=[pl.BlockSpec((tm, C), lambda i: (i, 0)),
                  pl.BlockSpec((1, C), lambda i: (0, 0)),
                  pl.BlockSpec((1, C), lambda i: (0, 0))],
        out_specs=pl.BlockSpec((tm, C), lambda i: (i, 0)),
        compiler_params=pltpu.CompilerParams(
            dimension_semantics=("parallel",),
            vmem_limit_bytes=_VMEM_LIMIT),
    )(xp, g.reshape(1, C), b.reshape(1, C))
    return out[:M] if Mp != M else out
    # TODO(synk): optionally fuse LayerNorm into the following matmul prologue
    # when K == C fits a single K tile (saves one activation read+write pass).


# ----------------------------- flash attention kernel -----------------------------

def _flash_attn_kernel(qi_ref, ki_ref, q_ref, k_ref, v_ref, o_ref,
                       m_sc, l_sc, acc_sc, *, gh, hd, tq, tk):
    # qi_ref / ki_ref: SMEM tables mapping the packed-triangle step -> (qi, ki).
    t = pl.program_id(2)
    qi = qi_ref[t]
    ki = ki_ref[t]

    @pl.when(ki == 0)
    def _init():
        m_sc[...] = jnp.full_like(m_sc, -jnp.inf)
        l_sc[...] = jnp.zeros_like(l_sc)
        acc_sc[...] = jnp.zeros_like(acc_sc)

    def _update(masked):
        q = q_ref[0]                        # (tq, gh*hd) bf16 (lane-dense block)
        k = k_ref[0]                        # (tk, gh*hd)
        v = v_ref[0]                        # (tk, gh*hd)
        for h in range(gh):                 # per-head online softmax
            qh = q[:, h * hd:(h + 1) * hd]
            kh = k[:, h * hd:(h + 1) * hd]
            vh = v[:, h * hd:(h + 1) * hd]
            # Contract last dims (no k.T / XLU transpose).  The 1/sqrt(hd)
            # softmax scale is folded into the Q projection weights.
            s = lax.dot_general(qh, kh, (((1,), (1,)), ((), ())),
                                preferred_element_type=jnp.float32)
            if masked:
                # Diagonal block only (tk == tq): local causal mask.  Padded
                # key columns are zero-valued and lie above the diagonal for
                # every real query row, so no extra pad mask is needed.
                row = lax.broadcasted_iota(jnp.int32, (tq, tk), 0)
                col = lax.broadcasted_iota(jnp.int32, (tq, tk), 1)
                s = jnp.where(col <= row, s, -jnp.inf)
            m_prev = m_sc[h]
            m_new = jnp.maximum(m_prev, jnp.max(s, axis=-1, keepdims=True))
            alpha = jnp.exp(m_prev - m_new)
            p = jnp.exp(s - m_new)
            l_sc[h] = alpha * l_sc[h] + jnp.sum(p, axis=-1, keepdims=True)
            acc_sc[h] = alpha * acc_sc[h] + jnp.dot(
                p.astype(vh.dtype), vh, preferred_element_type=jnp.float32)
            m_sc[h] = m_new

    # Strictly-below-diagonal kv blocks are fully visible: no mask VPU work.
    @pl.when(ki < qi)
    def _off_diag():
        _update(masked=False)

    # Diagonal block: apply the causal mask; the packed lower-triangle grid
    # makes it the last block for this query tile, so normalize and store the
    # full lane-dense (tq, gh*hd) output here.
    @pl.when(ki == qi)
    def _diag_finalize():
        _update(masked=True)
        outs = []
        for h in range(gh):
            outs.append(acc_sc[h] * (1.0 / l_sc[h]))   # exact normalization
        o_ref[0] = jnp.concatenate(outs, axis=-1).astype(o_ref.dtype)


def flash_attention_pallas(qkv3, n_head):
    """qkv3: (B, T, 3C) packed c_attn output ([q | k | v], heads contiguous in
    each section).  Returns (B, T, C) causal self-attention output in the same
    row layout (no head transposes).  Assumes 1/sqrt(head_dim) is folded into
    the Q projection."""
    B, T, C3 = qkv3.shape
    C = C3 // 3
    assert C % n_head == 0
    hd = C // n_head

    # Heads per grid step: keep the block's last dim lane-dense (>=128 lanes)
    # when head_dim < 128.
    gh = 1
    if hd < 128 and 128 % hd == 0 and n_head % (128 // hd) == 0:
        gh = 128 // hd
    W = gh * hd
    n_groups = C // W

    tq, Tp = _choose_tile(T, _ATTN_BLOCK, 16)
    tk = tq                        # diagonal-only masking relies on tk == tq
    if Tp != T:
        qkv3 = jnp.pad(qkv3, ((0, 0), (0, Tp - T), (0, 0)))
    nq = Tp // tq

    # Packed lower-triangle grid: flat step t -> (qi, ki) via SMEM tables so
    # no grid steps are wasted on the skipped upper triangle.
    qi_list, ki_list = [], []
    for qi in range(nq):
        for ki in range(qi + 1):
            qi_list.append(qi)
            ki_list.append(ki)
    qi_map = jnp.asarray(qi_list, dtype=jnp.int32)
    ki_map = jnp.asarray(ki_list, dtype=jnp.int32)
    n_steps = len(qi_list)

    # Column-offset index maps read q/k/v straight out of the packed buffer:
    # q group g -> col block g, k -> n_groups + g, v -> 2*n_groups + g.
    q_spec = pl.BlockSpec((1, tq, W), lambda b, g, t, qi_m, ki_m: (b, qi_m[t], g))
    k_spec = pl.BlockSpec((1, tk, W),
                          lambda b, g, t, qi_m, ki_m: (b, ki_m[t], n_groups + g))
    v_spec = pl.BlockSpec((1, tk, W),
                          lambda b, g, t, qi_m, ki_m: (b, ki_m[t], 2 * n_groups + g))
    o_spec = pl.BlockSpec((1, tq, W), lambda b, g, t, qi_m, ki_m: (b, qi_m[t], g))

    out = pl.pallas_call(
        partial(_flash_attn_kernel, gh=gh, hd=hd, tq=tq, tk=tk),
        out_shape=jax.ShapeDtypeStruct((B, Tp, C), qkv3.dtype),
        grid_spec=pltpu.PrefetchScalarGridSpec(
            num_scalar_prefetch=2,
            grid=(B, n_groups, n_steps),
            in_specs=[q_spec, k_spec, v_spec],
            out_specs=o_spec,
            scratch_shapes=[pltpu.VMEM((gh, tq, 1), jnp.float32),
                            pltpu.VMEM((gh, tq, 1), jnp.float32),
                            pltpu.VMEM((gh, tq, hd), jnp.float32)]),
        compiler_params=pltpu.CompilerParams(
            dimension_semantics=("parallel", "parallel", "arbitrary"),
            vmem_limit_bytes=_VMEM_LIMIT),
    )(qi_map, ki_map, qkv3, qkv3, qkv3)

    if Tp != T:
        out = out[:, :T, :]
    return out


# ----------------------------- model glue -----------------------------

def init_params(key, cfg):
    C = cfg["n_embd"]
    V = cfg["vocab_size"]
    S = cfg["block_size"]
    L = cfg["n_layer"]
    H = cfg["n_head"]
    assert C % H == 0
    hd = C // H
    std = 0.02
    proj_std = 0.02 * (2 * L) ** -0.5  # NANOGPT_SCALE_INIT for c_proj layers
    wdt = jnp.bfloat16                 # bf16 MXU operands; f32 accumulation in-kernel
    attn_scale = 1.0 / math.sqrt(hd)

    keys = iter(jax.random.split(key, 2 + 4 * L))
    params = {
        "wte": (std * jax.random.normal(next(keys), (V, C), jnp.float32)).astype(wdt),
        "wpe": (std * jax.random.normal(next(keys), (S, C), jnp.float32)).astype(wdt),
        "ln_f_g": jnp.ones((C,), jnp.float32),
        "ln_f_b": jnp.zeros((C,), jnp.float32),
        "h": [],
    }
    for _ in range(L):
        aw = std * jax.random.normal(next(keys), (C, 3 * C), jnp.float32)
        # Fold the 1/sqrt(head_dim) softmax scale into the Q projection columns
        # (mathematically identical; removes a (tq x tk) multiply per flash step).
        aw = aw.at[:, :C].multiply(attn_scale)
        ab = jnp.zeros((3 * C,), jnp.float32)   # zeros -> Q-slice scale is a no-op
        params["h"].append({
            "ln1_g": jnp.ones((C,), jnp.float32),
            "ln1_b": jnp.zeros((C,), jnp.float32),
            # weights stored as (in, out) so kernels compute x @ W directly
            "attn_w": aw.astype(wdt),
            "attn_b": ab,
            "aproj_w": (proj_std * jax.random.normal(next(keys), (C, C), jnp.float32)).astype(wdt),
            "aproj_b": jnp.zeros((C,), jnp.float32),
            "ln2_g": jnp.ones((C,), jnp.float32),
            "ln2_b": jnp.zeros((C,), jnp.float32),
            "fc_w": (std * jax.random.normal(next(keys), (C, 4 * C), jnp.float32)).astype(wdt),
            "fc_b": jnp.zeros((4 * C,), jnp.float32),
            "mproj_w": (proj_std * jax.random.normal(next(keys), (4 * C, C), jnp.float32)).astype(wdt),
            "mproj_b": jnp.zeros((C,), jnp.float32),
        })
    return params


def block_forward(p, x, B, T, n_head):
    # x: (B*T, C) bf16
    C = x.shape[1]

    # ---- attention branch ----
    h = layernorm_pallas(x, p["ln1_g"], p["ln1_b"])
    qkv = matmul_pallas(h, p["attn_w"], bias=p["attn_b"])            # (B*T, 3C)
    # Flash attention consumes the (B, T, 3C) view directly (free reshape) and
    # produces (B, T, C) in row layout: no XLA head transposes on either side.
    y = flash_attention_pallas(qkv.reshape(B, T, 3 * C), n_head)
    y = y.reshape(B * T, C)
    # c_proj with the residual add fused into the matmul epilogue.
    x = matmul_pallas(y, p["aproj_w"], bias=p["aproj_b"], residual=x)

    # ---- MLP branch ----
    h2 = layernorm_pallas(x, p["ln2_g"], p["ln2_b"])
    m = matmul_pallas(h2, p["fc_w"], bias=p["fc_b"], activation="gelu")
    x = matmul_pallas(m, p["mproj_w"], bias=p["mproj_b"], residual=x)
    return x


def gpt_forward(params, idx, cfg):
    """idx: (B, T) int32 token ids -> logits (B, T, vocab_size) f32."""
    B, T = idx.shape
    C = cfg["n_embd"]
    assert T <= cfg["block_size"]
    # TODO(synk): embedding gather + positional add kept as XLA glue (vocab
    # gather has no clean rectangular BlockSpec at these sizes).
    tok_emb = jnp.take(params["wte"], idx, axis=0)        # (B, T, C) bf16
    pos_emb = params["wpe"][:T]
    x = (tok_emb + pos_emb[None, :, :]).reshape(B * T, C)
    for layer in params["h"]:
        x = block_forward(layer, x, B, T, cfg["n_head"])
    x = layernorm_pallas(x, params["ln_f_g"], params["ln_f_b"])
    # Weight-tied lm_head: contract on C against wte (V, C) inside the kernel
    # (no wte.T HBM copy), no bias, f32 logits.
    logits = matmul_pallas(x, params["wte"], transpose_rhs=True,
                           out_dtype=jnp.float32)
    # TODO(synk): cross-entropy loss path (targets is None in this synthetic run)
    return logits.reshape(B, T, cfg["vocab_size"])


# ----------------------------- main -----------------------------

if __name__ == "__main__":
    cfg = dict(vocab_size=512, block_size=512, n_layer=2, n_head=4, n_embd=256)
    B, T = 2, 512   # multi-tile matmul grids + a multi-block packed causal triangle

    key = jax.random.PRNGKey(0)
    k_params, k_idx = jax.random.split(key)
    params = init_params(k_params, cfg)
    idx = jax.random.randint(k_idx, (B, T), 0, cfg["vocab_size"], dtype=jnp.int32)

    logits = gpt_forward(params, idx, cfg)
    jax.block_until_ready(logits)
    assert logits.shape == (B, T, cfg["vocab_size"])
    assert logits.dtype == jnp.float32
    assert bool(jnp.all(jnp.isfinite(logits)))
    print("KERNEL_OK")
</pallas_src>

<mosaic_0001>
module attributes {stable_mosaic.version = 11 : i64} {
  func.func @_layernorm_kernel(%arg0: i32, %arg1: memref<1024x256xbf16, #tpu.memory_space<vmem>>, %arg2: memref<1x256xf32, #tpu.memory_space<vmem>>, %arg3: memref<1x256xf32, #tpu.memory_space<vmem>>, %arg4: memref<1024x256xbf16, #tpu.memory_space<vmem>>) attributes {dimension_semantics = [#tpu.dimension_semantics<parallel>], iteration_bounds = array<i64: 1>, scalar_prefetch = 0 : i64, scratch_operands = 0 : i64, tpu.core_type = #tpu.core_type<tc>, window_params = [{transform_indices = @transform_0, window_bounds = array<i64: 1024, 256>}, {pipeline_mode = #tpu.pipeline_mode<synchronous>, transform_indices = @transform_1, window_bounds = array<i64: 1, 256>}, {pipeline_mode = #tpu.pipeline_mode<synchronous>, transform_indices = @transform_2, window_bounds = array<i64: 1, 256>}, {transform_indices = @transform_3, window_bounds = array<i64: 1024, 256>}]} {
    %c0 = arith.constant 0 : index
    %c0_0 = arith.constant 0 : index
    %0 = vector.load %arg1[%c0, %c0_0] : memref<1024x256xbf16, #tpu.memory_space<vmem>>, vector<1024x256xbf16>
    %1 = arith.extf %0 : vector<1024x256xbf16> to vector<1024x256xf32>
    %cst = arith.constant dense<0.000000e+00> : vector<1024xf32>
    %2 = vector.multi_reduction <add>, %1, %cst [1] : vector<1024x256xf32> to vector<1024xf32>
    %3 = vector.shape_cast %2 : vector<1024xf32> to vector<1024x1xf32>
    %cst_1 = arith.constant 2.560000e+02 : f32
    %4 = vector.broadcast %cst_1 : f32 to vector<1024x1xf32>
    %5 = arith.divf %3, %4 : vector<1024x1xf32>
    %6 = vector.broadcast %5 : vector<1024x1xf32> to vector<1024x256xf32>
    %7 = arith.subf %1, %6 : vector<1024x256xf32>
    %8 = arith.mulf %7, %7 : vector<1024x256xf32>
    %cst_2 = arith.constant dense<0.000000e+00> : vector<1024xf32>
    %9 = vector.multi_reduction <add>, %8, %cst_2 [1] : vector<1024x256xf32> to vector<1024xf32>
    %10 = vector.shape_cast %9 : vector<1024xf32> to vector<1024x1xf32>
    %cst_3 = arith.constant 2.560000e+02 : f32
    %11 = vector.broadcast %cst_3 : f32 to vector<1024x1xf32>
    %12 = arith.divf %10, %11 : vector<1024x1xf32>
    %cst_4 = arith.constant 9.99999974E-6 : f32
    %13 = vector.broadcast %cst_4 : f32 to vector<1024x1xf32>
    %14 = arith.addf %12, %13 : vector<1024x1xf32>
    %15 = math.rsqrt %14 : vector<1024x1xf32>
    %16 = vector.broadcast %15 : vector<1024x1xf32> to vector<1024x256xf32>
    %17 = arith.mulf %7, %16 : vector<1024x256xf32>
    %c0_5 = arith.constant 0 : index
    %c0_6 = arith.constant 0 : index
    %18 = vector.load %arg2[%c0_5, %c0_6] : memref<1x256xf32, #tpu.memory_space<vmem>>, vector<1x256xf32>
    %19 = vector.broadcast %18 : vector<1x256xf32> to vector<1024x256xf32>
    %20 = arith.mulf %17, %19 : vector<1024x256xf32>
    %c0_7 = arith.constant 0 : index
    %c0_8 = arith.constant 0 : index
    %21 = vector.load %arg3[%c0_7, %c0_8] : memref<1x256xf32, #tpu.memory_space<vmem>>, vector<1x256xf32>
    %22 = vector.broadcast %21 : vector<1x256xf32> to vector<1024x256xf32>
    %23 = arith.addf %20, %22 : vector<1024x256xf32>
    %24 = arith.truncf %23 : vector<1024x256xf32> to vector<1024x256xbf16>
    %c0_9 = arith.constant 0 : index
    %c0_10 = arith.constant 0 : index
    %25 = vector.load %arg4[%c0_9, %c0_10] : memref<1024x256xbf16, #tpu.memory_space<vmem>>, vector<1024x256xbf16>
    tpu.vector_store %arg4[%c0_9, %c0_10], %24 {strides = array<i32>} : memref<1024x256xbf16, #tpu.memory_space<vmem>>, vector<1024x256xbf16>,
    return
  }
  func.func @transform_0(%arg0: i32) -> (i32, i32) {
    %c0_i32 = arith.constant 0 : i32
    %c0_i32_0 = arith.constant 0 : i32
    return %arg0, %c0_i32 : i32, i32
  }
  func.func @transform_1(%arg0: i32) -> (i32, i32) {
    %c0_i32 = arith.constant 0 : i32
    %c0_i32_0 = arith.constant 0 : i32
    %c0_i32_1 = arith.constant 0 : i32
    return %c0_i32, %c0_i32_0 : i32, i32
  }
  func.func @transform_2(%arg0: i32) -> (i32, i32) {
    %c0_i32 = arith.constant 0 : i32
    %c0_i32_0 = arith.constant 0 : i32
    %c0_i32_1 = arith.constant 0 : i32
    return %c0_i32, %c0_i32_0 : i32, i32
  }
  func.func @transform_3(%arg0: i32) -> (i32, i32) {
    %c0_i32 = arith.constant 0 : i32
    %c0_i32_0 = arith.constant 0 : i32
    return %arg0, %c0_i32 : i32, i32
  }
}

</mosaic_0001>

<llo_original>
// kernel: tpu_custom_call.1
$region0: #{tpu_custom_call.1}
  #allocation0 [shape = 'u32[]', space=smem, size = 0x4, offset = 0x4, fixed_abs, tag = 'smem constant byte address 0x4 - core index']
  #allocation1 [shape = 'u32[144,128]{1,0:T(1,128)}', space=vmem, size = 0x12000, scoped, tag = 'internal scratch']
  %s0 = inlined_call_operand.hbm [shape: bf16[1024,256], index: 0, kind: input, shape index: {}]
  %s1 = inlined_call_operand.hbm [shape: f32[1,256], index: 1, kind: input, shape index: {}]
  %s2 = inlined_call_operand.vmem [shape: f32[1,256], index: 2, kind: input, shape index: {}]
  %s3 = inlined_call_operand.hbm [shape: bf16[1024,256], index: 3, kind: output, shape index: {}]
  %s4 = sld [smem:[#allocation0]]
  $region30: #{tpu_custom_call.1} parent=0
    _
  %s6 = ssub.s32 1, %s4
  %s7 = scalar_select 0, %s6, %s4
  $region1: #{tpu_custom_call.1} parent=0
    #allocation2 [shape = 'u8[524288]{0}', space=vmem, size = 0x80000, scoped, tag = 'input window, operand 0, single buffered']
    #allocation3 [shape = 's32[1]{0}', space=sflag, size = 0x4, scoped, tag = 'scoped memory for tpu_custom_call.1']
    #allocation4 [shape = 's32[1]{0}', space=sflag, size = 0x4, scoped, tag = 'scoped memory for tpu_custom_call.1']
    #allocation5 [shape = 'u8[1024]{0}', space=vmem, size = 0x400, scoped, tag = 'input window, operand 1, single buffered']
    #allocation6 [shape = 's32[1]{0}', space=sflag, size = 0x4, scoped, tag = 'scoped memory for tpu_custom_call.1']
    #allocation7 [shape = 'u8[524288]{0}', space=vmem, size = 0x80000, scoped, tag = 'output window, operand 0, single buffered']
    %8 = vsyncpa [#allocation3], 0
    %9 = vsyncpa [#allocation6], 0
    %10 = vsyncpa [#allocation4], 0
    // Predicated region
    $region2: #{tpu_custom_call.1} parent=1 // pred_check
      _
    $region3: #{tpu_custom_call.1} parent=1 // pred_check_branch
      %12 = sbr.rel (0) target = $region5
    $region4: #{tpu_custom_call.1} parent=1 // pred_region
      %s14 = ssub.s32 16384, 16384
      %15 = vsyncadd [#allocation3], %s14
      %s16 = sshll.u32 [#allocation2], 4
      %s17 = int_to_ptr.vmem [resolvable:$true] %s16
      %22 = dma.hbm_to_vmem [thread:$0]  %s0, 16384, %s17, [#allocation3], 128, 128, 8
    $region5: #{tpu_custom_call.1} parent=1 // pred_fallthru
      _
    // Predicated region
    $region6: #{tpu_custom_call.1} parent=1 // pred_check
      _
    $region7: #{tpu_custom_call.1} parent=1 // pred_check_branch
      %24 = sbr.rel (0) target = $region9
    $region8: #{tpu_custom_call.1} parent=1 // pred_region
      %s26 = ssub.s32 32, 32
      %27 = vsyncadd [#allocation6], %s26
      %s29 = sshll.u32 [#allocation5], 4
      %s30 = int_to_ptr.vmem [resolvable:$true] %s29
      %32 = dma.hbm_to_vmem [thread:$0]  %s1, 32, %s30, [#allocation6]
    $region9: #{tpu_custom_call.1} parent=1 // pred_fallthru
      _
    // Predicated region
    $region10: #{tpu_custom_call.1} parent=1 // pred_check
      _
    $region11: #{tpu_custom_call.1} parent=1 // pred_check_branch
      %34 = sbr.rel (0) target = $region13
    $region12: #{tpu_custom_call.1} parent=1 // pred_region
      _
    $region13: #{tpu_custom_call.1} parent=1 // pred_fallthru
      _
    // Predicated region
    $region14: #{tpu_custom_call.1} parent=1 // pred_check
      _
    $region15: #{tpu_custom_call.1} parent=1 // pred_check_branch
      %36 = sbr.rel (0) target = $region17
    $region16: #{tpu_custom_call.1} parent=1 // pred_region
      %37 = dma.done [#allocation3], 16384
    $region17: #{tpu_custom_call.1} parent=1 // pred_fallthru
      _
    // Predicated region
    $region18: #{tpu_custom_call.1} parent=1 // pred_check
      _
    $region19: #{tpu_custom_call.1} parent=1 // pred_check_branch
      %39 = sbr.rel (0) target = $region21
    $region20: #{tpu_custom_call.1} parent=1 // pred_region
      %40 = dma.done [#allocation6], 32
    $region21: #{tpu_custom_call.1} parent=1 // pred_fallthru
      _
    %v41 = vld [vmem:[#allocation2] sm:$0xff]
    %v42 = vld [vmem:[#allocation2 + $0x8] sm:$0xff]
    %v43 = vld [vmem:[#allocation2 + $0x10] sm:$0xff]
    %v44 = vld [vmem:[#allocation2 + $0x18] sm:$0xff]
    %v45 = vld [vmem:[#allocation2 + $0x20] sm:$0xff]
    %v46 = vld [vmem:[#allocation2 + $0x28] sm:$0xff]
    %v47 = vld [vmem:[#allocation2 + $0x30] sm:$0xff]
    %v48 = vld [vmem:[#allocation2 + $0x38] sm:$0xff]
    %v49 = vld [vmem:[#allocation2 + $0x40] sm:$0xff]
    %v50 = vld [vmem:[#allocation2 + $0x48] sm:$0xff]
    %v51 = vld [vmem:[#allocation2 + $0x50] sm:$0xff]
    %v52 = vld [vmem:[#allocation2 + $0x58] sm:$0xff]
    %v53 = vld [vmem:[#allocation2 + $0x60] sm:$0xff]
    %v54 = vld [vmem:[#allocation2 + $0x68] sm:$0xff]
    %v55 = vld [vmem:[#allocation2 + $0x70] sm:$0xff]
    %v56 = vld [vmem:[#allocation2 + $0x78] sm:$0xff]
    %v57 = vld [vmem:[#allocation2 + $0x80] sm:$0xff]
    %v58 = vld [vmem:[#allocation2 + $0x88] sm:$0xff]
    %v59 = vld [vmem:[#allocation2 + $0x90] sm:$0xff]
    %v60 = vld [vmem:[#allocation2 + $0x98] sm:$0xff]
    %v61 = vld [vmem:[#allocation2 + $0xa0] sm:$0xff]
    %v62 = vld [vmem:[#allocation2 + $0xa8] sm:$0xff]
    %v63 = vld [vmem:[#allocation2 + $0xb0] sm:$0xff]
    %v64 = vld [vmem:[#allocation2 + $0xb8] sm:$0xff]
    %v65 = vld [vmem:[#allocation2 + $0xc0] sm:$0xff]
    %v66 = vld [vmem:[#allocation2 + $0xc8] sm:$0xff]
    %v67 = vld [vmem:[#allocation2 + $0xd0] sm:$0xff]
    %v68 = vld [vmem:[#allocation2 + $0xd8] sm:$0xff]
    %v69 = vld [vmem:[#allocation2 + $0xe0] sm:$0xff]
    %v70 = vld [vmem:[#allocation2 + $0xe8] sm:$0xff]
    %v71 = vld [vmem:[#allocation2 + $0xf0] sm:$0xff]
    %v72 = vld [vmem:[#allocation2 + $0xf8] sm:$0xff]
    %v73 = vld [vmem:[#allocation2 + $0x100] sm:$0xff]
    %v74 = vld [vmem:[#allocation2 + $0x108] sm:$0xff]
    %v75 = vld [vmem:[#allocation2 + $0x110] sm:$0xff]
    %v76 = vld [vmem:[#allocation2 + $0x118] sm:$0xff]
    %v77 = vld [vmem:[#allocation2 + $0x120] sm:$0xff]
    %v78 = vld [vmem:[#allocation2 + $0x128] sm:$0xff]
    %v79 = vld [vmem:[#allocation2 + $0x130] sm:$0xff]
    %v80 = vld [vmem:[#allocation2 + $0x138] sm:$0xff]
    %v81 = vld [vmem:[#allocation2 + $0x140] sm:$0xff]
    %v82 = vld [vmem:[#allocation2 + $0x148] sm:$0xff]
    %v83 = vld [vmem:[#allocation2 + $0x150] sm:$0xff]
    %v84 = vld [vmem:[#allocation2 + $0x158] sm:$0xff]
    %v85 = vld [vmem:[#allocation2 + $0x160] sm:$0xff]
    %v86 = vld [vmem:[#allocation2 + $0x168] sm:$0xff]
    %v87 = vld [vmem:[#allocation2 + $0x170] sm:$0xff]
    %v88 = vld [vmem:[#allocation2 + $0x178] sm:$0xff]
    %v89 = vld [vmem:[#allocation2 + $0x180] sm:$0xff]
    %v90 = vld [vmem:[#allocation2 + $0x188] sm:$0xff]
    %v91 = vld [vmem:[#allocation2 + $0x190] sm:$0xff]
    %v92 = vld [vmem:[#allocation2 + $0x198] sm:$0xff]
    %v93 = vld [vmem:[#allocation2 + $0x1a0] sm:$0xff]
    %v94 = vld [vmem:[#allocation2 + $0x1a8] sm:$0xff]
    %v95 = vld [vmem:[#allocation2 + $0x1b0] sm:$0xff]
    %v96 = vld [vmem:[#allocation2 + $0x1b8] sm:$0xff]
    %v97 = vld [vmem:[#allocation2 + $0x1c0] sm:$0xff]
    %v98 = vld [vmem:[#allocation2 + $0x1c8] sm:$0xff]
    %v99 = vld [vmem:[#allocation2 + $0x1d0] sm:$0xff]
    %v100 = vld [vmem:[#allocation2 + $0x1d8] sm:$0xff]
    %v101 = vld [vmem:[#allocation2 + $0x1e0] sm:$0xff]
    %v102 = vld [vmem:[#allocation2 + $0x1e8] sm:$0xff]
    %v103 = vld [vmem:[#allocation2 + $0x1f0] sm:$0xff]
    %v104 = vld [vmem:[#allocation2 + $0x1f8] sm:$0xff]
    %v105 = vld [vmem:[#allocation2 + $0x200] sm:$0xff]
    %v106 = vld [vmem:[#allocation2 + $0x208] sm:$0xff]
    %v107 = vld [vmem:[#allocation2 + $0x210] sm:$0xff]
    %v108 = vld [vmem:[#allocation2 + $0x218] sm:$0xff]
    %v109 = vld [vmem:[#allocation2 + $0x220] sm:$0xff]
    %v110 = vld [vmem:[#allocation2 + $0x228] sm:$0xff]
    %v111 = vld [vmem:[#allocation2 + $0x230] sm:$0xff]
    %v112 = vld [vmem:[#allocation2 + $0x238] sm:$0xff]
    %v113 = vld [vmem:[#allocation2 + $0x240] sm:$0xff]
    %v114 = vld [vmem:[#allocation2 + $0x248] sm:$0xff]
    %v115 = vld [vmem:[#allocation2 + $0x250] sm:$0xff]
    %v116 = vld [vmem:[#allocation2 + $0x258] sm:$0xff]
    %v117 = vld [vmem:[#allocation2 + $0x260] sm:$0xff]
    %v118 = vld [vmem:[#allocation2 + $0x268] sm:$0xff]
    %v119 = vld [vmem:[#allocation2 + $0x270] sm:$0xff]
    %v120 = vld [vmem:[#allocation2 + $0x278] sm:$0xff]
    %v121 = vld [vmem:[#allocation2 + $0x280] sm:$0xff]
    %v122 = vld [vmem:[#allocation2 + $0x288] sm:$0xff]
    %v123 = vld [vmem:[#allocation2 + $0x290] sm:$0xff]
    %v124 = vld [vmem:[#allocation2 + $0x298] sm:$0xff]
    %v125 = vld [vmem:[#allocation2 + $0x2a0] sm:$0xff]
    %v126 = vld [vmem:[#allocation2 + $0x2a8] sm:$0xff]
    %v127 = vld [vmem:[#allocation2 + $0x2b0] sm:$0xff]
    %v128 = vld [vmem:[#allocation2 + $0x2b8] sm:$0xff]
    %v129 = vld [vmem:[#allocation2 + $0x2c0] sm:$0xff]
    %v130 = vld [vmem:[#allocation2 + $0x2c8] sm:$0xff]
    %v131 = vld [vmem:[#allocation2 + $0x2d0] sm:$0xff]
    %v132 = vld [vmem:[#allocation2 + $0x2d8] sm:$0xff]
    %v133 = vld [vmem:[#allocation2 + $0x2e0] sm:$0xff]
    %v134 = vld [vmem:[#allocation2 + $0x2e8] sm:$0xff]
    %v135 = vld [vmem:[#allocation2 + $0x2f0] sm:$0xff]
    %v136 = vld [vmem:[#allocation2 + $0x2f8] sm:$0xff]
    %v137 = vld [vmem:[#allocation2 + $0x300] sm:$0xff]
    %v138 = vld [vmem:[#allocation2 + $0x308] sm:$0xff]
    %v139 = vld [vmem:[#allocation2 + $0x310] sm:$0xff]
    %v140 = vld [vmem:[#allocation2 + $0x318] sm:$0xff]
    %v141 = vld [vmem:[#allocation2 + $0x320] sm:$0xff]
    %v142 = vld [vmem:[#allocation2 + $0x328] sm:$0xff]
    %v143 = vld [vmem:[#allocation2 + $0x330] sm:$0xff]
    %v144 = vld [vmem:[#allocation2 + $0x338] sm:$0xff]
    %v145 = vld [vmem:[#allocation2 + $0x340] sm:$0xff]
    %v146 = vld [vmem:[#allocation2 + $0x348] sm:$0xff]
    %v147 = vld [vmem:[#allocation2 + $0x350] sm:$0xff]
    %v148 = vld [vmem:[#allocation2 + $0x358] sm:$0xff]
    %v149 = vld [vmem:[#allocation2 + $0x360] sm:$0xff]
    %v150 = vld [vmem:[#allocation2 + $0x368] sm:$0xff]
    %v151 = vld [vmem:[#allocation2 + $0x370] sm:$0xff]
    %v152 = vld [vmem:[#allocation2 + $0x378] sm:$0xff]
    %v153 = vld [vmem:[#allocation2 + $0x380] sm:$0xff]
    %v154 = vld [vmem:[#allocation2 + $0x388] sm:$0xff]
    %v155 = vld [vmem:[#allocation2 + $0x390] sm:$0xff]
    %v156 = vld [vmem:[#allocation2 + $0x398] sm:$0xff]
    %v157 = vld [vmem:[#allocation2 + $0x3a0] sm:$0xff]
    %v158 = vld [vmem:[#allocation2 + $0x3a8] sm:$0xff]
    %v159 = vld [vmem:[#allocation2 + $0x3b0] sm:$0xff]
    %v160 = vld [vmem:[#allocation2 + $0x3b8] sm:$0xff]
    %v161 = vld [vmem:[#allocation2 + $0x3c0] sm:$0xff]
    %v162 = vld [vmem:[#allocation2 + $0x3c8] sm:$0xff]
    %v163 = vld [vmem:[#allocation2 + $0x3d0] sm:$0xff]
    %v164 = vld [vmem:[#allocation2 + $0x3d8] sm:$0xff]
    %v165 = vld [vmem:[#allocation2 + $0x3e0] sm:$0xff]
    %v166 = vld [vmem:[#allocation2 + $0x3e8] sm:$0xff]
    %v167 = vld [vmem:[#allocation2 + $0x3f0] sm:$0xff]
    %v168 = vld [vmem:[#allocation2 + $0x3f8] sm:$0xff]
    %v169 = vunpack.c.l.bf16 %v41
    %v170 = vunpack.c.h.bf16 %v41
    %v171 = vunpack.c.l.bf16 %v42
    %v172 = vunpack.c.h.bf16 %v42
    %v173 = vunpack.c.l.bf16 %v43
    %v174 = vunpack.c.h.bf16 %v43
    %v175 = vunpack.c.l.bf16 %v44
    %v176 = vunpack.c.h.bf16 %v44
    %v177 = vunpack.c.l.bf16 %v45
    %v178 = vunpack.c.h.bf16 %v45
    %v179 = vunpack.c.l.bf16 %v46
    %v180 = vunpack.c.h.bf16 %v46
    %v181 = vunpack.c.l.bf16 %v47
    %v182 = vunpack.c.h.bf16 %v47
    %v183 = vunpack.c.l.bf16 %v48
    %v184 = vunpack.c.h.bf16 %v48
    %v185 = vunpack.c.l.bf16 %v49
    %v186 = vunpack.c.h.bf16 %v49
    %v187 = vunpack.c.l.bf16 %v50
    %v188 = vunpack.c.h.bf16 %v50
    %v189 = vunpack.c.l.bf16 %v51
    %v190 = vunpack.c.h.bf16 %v51
    %v191 = vunpack.c.l.bf16 %v52
    %v192 = vunpack.c.h.bf16 %v52
    %v193 = vunpack.c.l.bf16 %v53
    %v194 = vunpack.c.h.bf16 %v53
    %v195 = vunpack.c.l.bf16 %v54
    %v196 = vunpack.c.h.bf16 %v54
    %v197 = vunpack.c.l.bf16 %v55
    %v198 = vunpack.c.h.bf16 %v55
    %v199 = vunpack.c.l.bf16 %v56
    %v200 = vunpack.c.h.bf16 %v56
    %v201 = vunpack.c.l.bf16 %v57
    %v202 = vunpack.c.h.bf16 %v57
    %v203 = vunpack.c.l.bf16 %v58
    %v204 = vunpack.c.h.bf16 %v58
    %v205 = vunpack.c.l.bf16 %v59
    %v206 = vunpack.c.h.bf16 %v59
    %v207 = vunpack.c.l.bf16 %v60
    %v208 = vunpack.c.h.bf16 %v60
    %v209 = vunpack.c.l.bf16 %v61
    %v210 = vunpack.c.h.bf16 %v61
    %v211 = vunpack.c.l.bf16 %v62
    %v212 = vunpack.c.h.bf16 %v62
    %v213 = vunpack.c.l.bf16 %v63
    %v214 = vunpack.c.h.bf16 %v63
    %v215 = vunpack.c.l.bf16 %v64
    %v216 = vunpack.c.h.bf16 %v64
    %v217 = vunpack.c.l.bf16 %v65
    %v218 = vunpack.c.h.bf16 %v65
    %v219 = vunpack.c.l.bf16 %v66
    %v220 = vunpack.c.h.bf16 %v66
    %v221 = vunpack.c.l.bf16 %v67
    %v222 = vunpack.c.h.bf16 %v67
    %v223 = vunpack.c.l.bf16 %v68
    %v224 = vunpack.c.h.bf16 %v68
    %v225 = vunpack.c.l.bf16 %v69
    %v226 = vunpack.c.h.bf16 %v69
    %v227 = vunpack.c.l.bf16 %v70
    %v228 = vunpack.c.h.bf16 %v70
    %v229 = vunpack.c.l.bf16 %v71
    %v230 = vunpack.c.h.bf16 %v71
    %v231 = vunpack.c.l.bf16 %v72
    %v232 = vunpack.c.h.bf16 %v72
    %v233 = vunpack.c.l.bf16 %v73
    %v234 = vunpack.c.h.bf16 %v73
    %v235 = vunpack.c.l.bf16 %v74
    %v236 = vunpack.c.h.bf16 %v74
    %v237 = vunpack.c.l.bf16 %v75
    %v238 = vunpack.c.h.bf16 %v75
    %v239 = vunpack.c.l.bf16 %v76
    %v240 = vunpack.c.h.bf16 %v76
    %v241 = vunpack.c.l.bf16 %v77
    %v242 = vunpack.c.h.bf16 %v77
    %v243 = vunpack.c.l.bf16 %v78
    %v244 = vunpack.c.h.bf16 %v78
    %v245 = vunpack.c.l.bf16 %v79
    %v246 = vunpack.c.h.bf16 %v79
    %v247 = vunpack.c.l.bf16 %v80
    %v248 = vunpack.c.h.bf16 %v80
    %v249 = vunpack.c.l.bf16 %v81
    %v250 = vunpack.c.h.bf16 %v81
    %v251 = vunpack.c.l.bf16 %v82
    %v252 = vunpack.c.h.bf16 %v82
    %v253 = vunpack.c.l.bf16 %v83
    %v254 = vunpack.c.h.bf16 %v83
    %v255 = vunpack.c.l.bf16 %v84
    %v256 = vunpack.c.h.bf16 %v84
    %v257 = vunpack.c.l.bf16 %v85
    %v258 = vunpack.c.h.bf16 %v85
    %v259 = vunpack.c.l.bf16 %v86
    %v260 = vunpack.c.h.bf16 %v86
    %v261 = vunpack.c.l.bf16 %v87
    %v262 = vunpack.c.h.bf16 %v87
    %v263 = vunpack.c.l.bf16 %v88
    %v264 = vunpack.c.h.bf16 %v88
    %v265 = vunpack.c.l.bf16 %v89
    %v266 = vunpack.c.h.bf16 %v89
    %v267 = vunpack.c.l.bf16 %v90
    %v268 = vunpack.c.h.bf16 %v90
    %v269 = vunpack.c.l.bf16 %v91
    %v270 = vunpack.c.h.bf16 %v91
    %v271 = vunpack.c.l.bf16 %v92
    %v272 = vunpack.c.h.bf16 %v92
    %v273 = vunpack.c.l.bf16 %v93
    %v274 = vunpack.c.h.bf16 %v93
    %v275 = vunpack.c.l.bf16 %v94
    %v276 = vunpack.c.h.bf16 %v94
    %v277 = vunpack.c.l.bf16 %v95
    %v278 = vunpack.c.h.bf16 %v95
    %v279 = vunpack.c.l.bf16 %v96
    %v280 = vunpack.c.h.bf16 %v96
    %v281 = vunpack.c.l.bf16 %v97
    %v282 = vunpack.c.h.bf16 %v97
    %v283 = vunpack.c.l.bf16 %v98
    %v284 = vunpack.c.h.bf16 %v98
    %v285 = vunpack.c.l.bf16 %v99
    %v286 = vunpack.c.h.bf16 %v99
    %v287 = vunpack.c.l.bf16 %v100
    %v288 = vunpack.c.h.bf16 %v100
    %v289 = vunpack.c.l.bf16 %v101
    %v290 = vunpack.c.h.bf16 %v101
    %v291 = vunpack.c.l.bf16 %v102
    %v292 = vunpack.c.h.bf16 %v102
    %v293 = vunpack.c.l.bf16 %v103
    %v294 = vunpack.c.h.bf16 %v103
    %v295 = vunpack.c.l.bf16 %v104
    %v296 = vunpack.c.h.bf16 %v104
    %v297 = vunpack.c.l.bf16 %v105
    %v298 = vunpack.c.h.bf16 %v105
    %v299 = vunpack.c.l.bf16 %v106
    %v300 = vunpack.c.h.bf16 %v106
    %v301 = vunpack.c.l.bf16 %v107
    %v302 = vunpack.c.h.bf16 %v107
    %v303 = vunpack.c.l.bf16 %v108
    %v304 = vunpack.c.h.bf16 %v108
    %v305 = vunpack.c.l.bf16 %v109
    %v306 = vunpack.c.h.bf16 %v109
    %v307 = vunpack.c.l.bf16 %v110
    %v308 = vunpack.c.h.bf16 %v110
    %v309 = vunpack.c.l.bf16 %v111
    %v310 = vunpack.c.h.bf16 %v111
    %v311 = vunpack.c.l.bf16 %v112
    %v312 = vunpack.c.h.bf16 %v112
    %v313 = vunpack.c.l.bf16 %v113
    %v314 = vunpack.c.h.bf16 %v113
    %v315 = vunpack.c.l.bf16 %v114
    %v316 = vunpack.c.h.bf16 %v114
    %v317 = vunpack.c.l.bf16 %v115
    %v318 = vunpack.c.h.bf16 %v115
    %v319 = vunpack.c.l.bf16 %v116
    %v320 = vunpack.c.h.bf16 %v116
    %v321 = vunpack.c.l.bf16 %v117
    %v322 = vunpack.c.h.bf16 %v117
    %v323 = vunpack.c.l.bf16 %v118
    %v324 = vunpack.c.h.bf16 %v118
    %v325 = vunpack.c.l.bf16 %v119
    %v326 = vunpack.c.h.bf16 %v119
    %v327 = vunpack.c.l.bf16 %v120
    %v328 = vunpack.c.h.bf16 %v120
    %v329 = vunpack.c.l.bf16 %v121
    %v330 = vunpack.c.h.bf16 %v121
    %v331 = vunpack.c.l.bf16 %v122
    %v332 = vunpack.c.h.bf16 %v122
    %v333 = vunpack.c.l.bf16 %v123
    %v334 = vunpack.c.h.bf16 %v123
    %v335 = vunpack.c.l.bf16 %v124
    %v336 = vunpack.c.h.bf16 %v124
    %v337 = vunpack.c.l.bf16 %v125
    %v338 = vunpack.c.h.bf16 %v125
    %v339 = vunpack.c.l.bf16 %v126
    %v340 = vunpack.c.h.bf16 %v126
    %v341 = vunpack.c.l.bf16 %v127
    %v342 = vunpack.c.h.bf16 %v127
    %v343 = vunpack.c.l.bf16 %v128
    %v344 = vunpack.c.h.bf16 %v128
    %v345 = vunpack.c.l.bf16 %v129
    %v346 = vunpack.c.h.bf16 %v129
    %v347 = vunpack.c.l.bf16 %v130
    %v348 = vunpack.c.h.bf16 %v130
    %v349 = vunpack.c.l.bf16 %v131
    %v350 = vunpack.c.h.bf16 %v131
    %v351 = vunpack.c.l.bf16 %v132
    %v352 = vunpack.c.h.bf16 %v132
    %v353 = vunpack.c.l.bf16 %v133
    %v354 = vunpack.c.h.bf16 %v133
    %v355 = vunpack.c.l.bf16 %v134
    %v356 = vunpack.c.h.bf16 %v134
    %v357 = vunpack.c.l.bf16 %v135
    %v358 = vunpack.c.h.bf16 %v135
    %v359 = vunpack.c.l.bf16 %v136
    %v360 = vunpack.c.h.bf16 %v136
    %v361 = vunpack.c.l.bf16 %v137
    %v362 = vunpack.c.h.bf16 %v137
    %v363 = vunpack.c.l.bf16 %v138
    %v364 = vunpack.c.h.bf16 %v138
    %v365 = vunpack.c.l.bf16 %v139
    %v366 = vunpack.c.h.bf16 %v139
    %v367 = vunpack.c.l.bf16 %v140
    %v368 = vunpack.c.h.bf16 %v140
    %v369 = vunpack.c.l.bf16 %v141
    %v370 = vunpack.c.h.bf16 %v141
    %v371 = vunpack.c.l.bf16 %v142
    %v372 = vunpack.c.h.bf16 %v142
    %v373 = vunpack.c.l.bf16 %v143
    %v374 = vunpack.c.h.bf16 %v143
    %v375 = vunpack.c.l.bf16 %v144
    %v376 = vunpack.c.h.bf16 %v144
    %v377 = vunpack.c.l.bf16 %v145
    %v378 = vunpack.c.h.bf16 %v145
    %v379 = vunpack.c.l.bf16 %v146
    %v380 = vunpack.c.h.bf16 %v146
    %v381 = vunpack.c.l.bf16 %v147
    %v382 = vunpack.c.h.bf16 %v147
    %v383 = vunpack.c.l.bf16 %v148
    %v384 = vunpack.c.h.bf16 %v148
    %v385 = vunpack.c.l.bf16 %v149
    %v386 = vunpack.c.h.bf16 %v149
    %v387 = vunpack.c.l.bf16 %v150
    %v388 = vunpack.c.h.bf16 %v150
    %v389 = vunpack.c.l.bf16 %v151
    %v390 = vunpack.c.h.bf16 %v151
    %v391 = vunpack.c.l.bf16 %v152
    %v392 = vunpack.c.h.bf16 %v152
    %v393 = vunpack.c.l.bf16 %v153
    %v394 = vunpack.c.h.bf16 %v153
    %v395 = vunpack.c.l.bf16 %v154
    %v396 = vunpack.c.h.bf16 %v154
    %v397 = vunpack.c.l.bf16 %v155
    %v398 = vunpack.c.h.bf16 %v155
    %v399 = vunpack.c.l.bf16 %v156
    %v400 = vunpack.c.h.bf16 %v156
    %v401 = vunpack.c.l.bf16 %v157
    %v402 = vunpack.c.h.bf16 %v157
    %v403 = vunpack.c.l.bf16 %v158
    %v404 = vunpack.c.h.bf16 %v158
    %v405 = vunpack.c.l.bf16 %v159
    %v406 = vunpack.c.h.bf16 %v159
    %v407 = vunpack.c.l.bf16 %v160
    %v408 = vunpack.c.h.bf16 %v160
    %v409 = vunpack.c.l.bf16 %v161
    %v410 = vunpack.c.h.bf16 %v161
    %v411 = vunpack.c.l.bf16 %v162
    %v412 = vunpack.c.h.bf16 %v162
    %v413 = vunpack.c.l.bf16 %v163
    %v414 = vunpack.c.h.bf16 %v163
    %v415 = vunpack.c.l.bf16 %v164
    %v416 = vunpack.c.h.bf16 %v164
    %v417 = vunpack.c.l.bf16 %v165
    %v418 = vunpack.c.h.bf16 %v165
    %v419 = vunpack.c.l.bf16 %v166
    %v420 = vunpack.c.h.bf16 %v166
    %v421 = vunpack.c.l.bf16 %v167
    %v422 = vunpack.c.h.bf16 %v167
    %v423 = vunpack.c.l.bf16 %v168
    %v424 = vunpack.c.h.bf16 %v168
    %v425 = vadd.f32 %v169, %v170
    %426 = vadd.xlane.f32.xlu0 %v425
    %v427 = vpop.xlane.xlu0 %426
    %v428 = vadd.f32 %v171, %v172
    %429 = vadd.xlane.f32.xlu0 %v428
    %v430 = vpop.xlane.xlu0 %429
    %v431 = vadd.f32 %v173, %v174
    %432 = vadd.xlane.f32.xlu0 %v431
    %v433 = vpop.xlane.xlu0 %432
    %v434 = vadd.f32 %v175, %v176
    %435 = vadd.xlane.f32.xlu0 %v434
    %v436 = vpop.xlane.xlu0 %435
    %v437 = vadd.f32 %v177, %v178
    %438 = vadd.xlane.f32.xlu0 %v437
    %v439 = vpop.xlane.xlu0 %438
    %v440 = vadd.f32 %v179, %v180
    %441 = vadd.xlane.f32.xlu0 %v440
    %v442 = vpop.xlane.xlu0 %441
    %v443 = vadd.f32 %v181, %v182
    %444 = vadd.xlane.f32.xlu0 %v443
    %v445 = vpop.xlane.xlu0 %444
    %v446 = vadd.f32 %v183, %v184
    %447 = vadd.xlane.f32.xlu0 %v446
    %v448 = vpop.xlane.xlu0 %447
    %v449 = vadd.f32 %v185, %v186
    %450 = vadd.xlane.f32.xlu0 %v449
    %v451 = vpop.xlane.xlu0 %450
    %v452 = vadd.f32 %v187, %v188
    %453 = vadd.xlane.f32.xlu0 %v452
    %v454 = vpop.xlane.xlu0 %453
    %v455 = vadd.f32 %v189, %v190
    %456 = vadd.xlane.f32.xlu0 %v455
    %v457 = vpop.xlane.xlu0 %456
    %v458 = vadd.f32 %v191, %v192
    %459 = vadd.xlane.f32.xlu0 %v458
    %v460 = vpop.xlane.xlu0 %459
    %v461 = vadd.f32 %v193, %v194
    %462 = vadd.xlane.f32.xlu0 %v461
    %v463 = vpop.xlane.xlu0 %462
    %v464 = vadd.f32 %v195, %v196
    %465 = vadd.xlane.f32.xlu0 %v464
    %v466 = vpop.xlane.xlu0 %465
    %v467 = vadd.f32 %v197, %v198
    %468 = vadd.xlane.f32.xlu0 %v467
    %v469 = vpop.xlane.xlu0 %468
    %v470 = vadd.f32 %v199, %v200
    %471 = vadd.xlane.f32.xlu0 %v470
    %v472 = vpop.xlane.xlu0 %471
    %v473 = vadd.f32 %v201, %v202
    %474 = vadd.xlane.f32.xlu0 %v473
    %v475 = vpop.xlane.xlu0 %474
    %v476 = vadd.f32 %v203, %v204
    %477 = vadd.xlane.f32.xlu0 %v476
    %v478 = vpop.xlane.xlu0 %477
    %v479 = vadd.f32 %v205, %v206
    %480 = vadd.xlane.f32.xlu0 %v479
    %v481 = vpop.xlane.xlu0 %480
    %v482 = vadd.f32 %v207, %v208
    %483 = vadd.xlane.f32.xlu0 %v482
    %v484 = vpop.xlane.xlu0 %483
    %v485 = vadd.f32 %v209, %v210
    %486 = vadd.xlane.f32.xlu0 %v485
    %v487 = vpop.xlane.xlu0 %486
    %v488 = vadd.f32 %v211, %v212
    %489 = vadd.xlane.f32.xlu0 %v488
    %v490 = vpop.xlane.xlu0 %489
    %v491 = vadd.f32 %v213, %v214
    %492 = vadd.xlane.f32.xlu0 %v491
    %v493 = vpop.xlane.xlu0 %492
    %v494 = vadd.f32 %v215, %v216
    %495 = vadd.xlane.f32.xlu0 %v494
    %v496 = vpop.xlane.xlu0 %495
    %v497 = vadd.f32 %v217, %v218
    %498 = vadd.xlane.f32.xlu0 %v497
    %v499 = vpop.xlane.xlu0 %498
    %v500 = vadd.f32 %v219, %v220
    %501 = vadd.xlane.f32.xlu0 %v500
    %v502 = vpop.xlane.xlu0 %501
    %v503 = vadd.f32 %v221, %v222
    %504 = vadd.xlane.f32.xlu0 %v503
    %v505 = vpop.xlane.xlu0 %504
    %v506 = vadd.f32 %v223, %v224
    %507 = vadd.xlane.f32.xlu0 %v506
    %v508 = vpop.xlane.xlu0 %507
    %v509 = vadd.f32 %v225, %v226
    %510 = vadd.xlane.f32.xlu0 %v509
    %v511 = vpop.xlane.xlu0 %510
    %v512 = vadd.f32 %v227, %v228
    %513 = vadd.xlane.f32.xlu0 %v512
    %v514 = vpop.xlane.xlu0 %513
    %v515 = vadd.f32 %v229, %v230
    %516 = vadd.xlane.f32.xlu0 %v515
    %v517 = vpop.xlane.xlu0 %516
    %v518 = vadd.f32 %v231, %v232
    %519 = vadd.xlane.f32.xlu0 %v518
    %v520 = vpop.xlane.xlu0 %519
    %v521 = vadd.f32 %v233, %v234
    %522 = vadd.xlane.f32.xlu0 %v521
    %v523 = vpop.xlane.xlu0 %522
    %v524 = vadd.f32 %v235, %v236
    %525 = vadd.xlane.f32.xlu0 %v524
    %v526 = vpop.xlane.xlu0 %525
    %v527 = vadd.f32 %v237, %v238
    %528 = vadd.xlane.f32.xlu0 %v527
    %v529 = vpop.xlane.xlu0 %528
    %v530 = vadd.f32 %v239, %v240
    %531 = vadd.xlane.f32.xlu0 %v530
    %v532 = vpop.xlane.xlu0 %531
    %v533 = vadd.f32 %v241, %v242
    %534 = vadd.xlane.f32.xlu0 %v533
    %v535 = vpop.xlane.xlu0 %534
    %v536 = vadd.f32 %v243, %v244
    %537 = vadd.xlane.f32.xlu0 %v536
    %v538 = vpop.xlane.xlu0 %537
    %v539 = vadd.f32 %v245, %v246
    %540 = vadd.xlane.f32.xlu0 %v539
    %v541 = vpop.xlane.xlu0 %540
    %v542 = vadd.f32 %v247, %v248
    %543 = vadd.xlane.f32.xlu0 %v542
    %v544 = vpop.xlane.xlu0 %543
    %v545 = vadd.f32 %v249, %v250
    %546 = vadd.xlane.f32.xlu0 %v545
    %v547 = vpop.xlane.xlu0 %546
    %v548 = vadd.f32 %v251, %v252
    %549 = vadd.xlane.f32.xlu0 %v548
    %v550 = vpop.xlane.xlu0 %549
    %v551 = vadd.f32 %v253, %v254
    %552 = vadd.xlane.f32.xlu0 %v551
    %v553 = vpop.xlane.xlu0 %552
    %v554 = vadd.f32 %v255, %v256
    %555 = vadd.xlane.f32.xlu0 %v554
    %v556 = vpop.xlane.xlu0 %555
    %v557 = vadd.f32 %v257, %v258
    %558 = vadd.xlane.f32.xlu0 %v557
    %v559 = vpop.xlane.xlu0 %558
    %v560 = vadd.f32 %v259, %v260
    %561 = vadd.xlane.f32.xlu0 %v560
    %v562 = vpop.xlane.xlu0 %561
    %v563 = vadd.f32 %v261, %v262
    %564 = vadd.xlane.f32.xlu0 %v563
    %v565 = vpop.xlane.xlu0 %564
    %v566 = vadd.f32 %v263, %v264
    %567 = vadd.xlane.f32.xlu0 %v566
    %v568 = vpop.xlane.xlu0 %567
    %v569 = vadd.f32 %v265, %v266
    %570 = vadd.xlane.f32.xlu0 %v569
    %v571 = vpop.xlane.xlu0 %570
    %v572 = vadd.f32 %v267, %v268
    %573 = vadd.xlane.f32.xlu0 %v572
    %v574 = vpop.xlane.xlu0 %573
    %v575 = vadd.f32 %v269, %v270
    %576 = vadd.xlane.f32.xlu0 %v575
    %v577 = vpop.xlane.xlu0 %576
    %v578 = vadd.f32 %v271, %v272
    %579 = vadd.xlane.f32.xlu0 %v578
    %v580 = vpop.xlane.xlu0 %579
    %v581 = vadd.f32 %v273, %v274
    %582 = vadd.xlane.f32.xlu0 %v581
    %v583 = vpop.xlane.xlu0 %582
    %v584 = vadd.f32 %v275, %v276
    %585 = vadd.xlane.f32.xlu0 %v584
    %v586 = vpop.xlane.xlu0 %585
    %v587 = vadd.f32 %v277, %v278
    %588 = vadd.xlane.f32.xlu0 %v587
    %v589 = vpop.xlane.xlu0 %588
    %v590 = vadd.f32 %v279, %v280
    %591 = vadd.xlane.f32.xlu0 %v590
    %v592 = vpop.xlane.xlu0 %591
    %v593 = vadd.f32 %v281, %v282
    %594 = vadd.xlane.f32.xlu0 %v593
    %v595 = vpop.xlane.xlu0 %594
    %v596 = vadd.f32 %v283, %v284
    %597 = vadd.xlane.f32.xlu0 %v596
    %v598 = vpop.xlane.xlu0 %597
    %v599 = vadd.f32 %v285, %v286
    %600 = vadd.xlane.f32.xlu0 %v599
    %v601 = vpop.xlane.xlu0 %600
    %v602 = vadd.f32 %v287, %v288
    %603 = vadd.xlane.f32.xlu0 %v602
    %v604 = vpop.xlane.xlu0 %603
    %v605 = vadd.f32 %v289, %v290
    %606 = vadd.xlane.f32.xlu0 %v605
    %v607 = vpop.xlane.xlu0 %606
    %v608 = vadd.f32 %v291, %v292
    %609 = vadd.xlane.f32.xlu0 %v608
    %v610 = vpop.xlane.xlu0 %609
    %v611 = vadd.f32 %v293, %v294
    %612 = vadd.xlane.f32.xlu0 %v611
    %v613 = vpop.xlane.xlu0 %612
    %v614 = vadd.f32 %v295, %v296
    %615 = vadd.xlane.f32.xlu0 %v614
    %v616 = vpop.xlane.xlu0 %615
    %v617 = vadd.f32 %v297, %v298
    %618 = vadd.xlane.f32.xlu0 %v617
    %v619 = vpop.xlane.xlu0 %618
    %v620 = vadd.f32 %v299, %v300
    %621 = vadd.xlane.f32.xlu0 %v620
    %v622 = vpop.xlane.xlu0 %621
    %v623 = vadd.f32 %v301, %v302
    %624 = vadd.xlane.f32.xlu0 %v623
    %v625 = vpop.xlane.xlu0 %624
    %v626 = vadd.f32 %v303, %v304
    %627 = vadd.xlane.f32.xlu0 %v626
    %v628 = vpop.xlane.xlu0 %627
    %v629 = vadd.f32 %v305, %v306
    %630 = vadd.xlane.f32.xlu0 %v629
    %v631 = vpop.xlane.xlu0 %630
    %v632 = vadd.f32 %v307, %v308
    %633 = vadd.xlane.f32.xlu0 %v632
    %v634 = vpop.xlane.xlu0 %633
    %v635 = vadd.f32 %v309, %v310
    %636 = vadd.xlane.f32.xlu0 %v635
    %v637 = vpop.xlane.xlu0 %636
    %v638 = vadd.f32 %v311, %v312
    %639 = vadd.xlane.f32.xlu0 %v638
    %v640 = vpop.xlane.xlu0 %639
    %v641 = vadd.f32 %v313, %v314
    %642 = vadd.xlane.f32.xlu0 %v641
    %v643 = vpop.xlane.xlu0 %642
    %v644 = vadd.f32 %v315, %v316
    %645 = vadd.xlane.f32.xlu0 %v644
    %v646 = vpop.xlane.xlu0 %645
    %v647 = vadd.f32 %v317, %v318
    %648 = vadd.xlane.f32.xlu0 %v647
    %v649 = vpop.xlane.xlu0 %648
    %v650 = vadd.f32 %v319, %v320
    %651 = vadd.xlane.f32.xlu0 %v650
    %v652 = vpop.xlane.xlu0 %651
    %v653 = vadd.f32 %v321, %v322
    %654 = vadd.xlane.f32.xlu0 %v653
    %v655 = vpop.xlane.xlu0 %654
    %v656 = vadd.f32 %v323, %v324
    %657 = vadd.xlane.f32.xlu0 %v656
    %v658 = vpop.xlane.xlu0 %657
    %v659 = vadd.f32 %v325, %v326
    %660 = vadd.xlane.f32.xlu0 %v659
    %v661 = vpop.xlane.xlu0 %660
    %v662 = vadd.f32 %v327, %v328
    %663 = vadd.xlane.f32.xlu0 %v662
    %v664 = vpop.xlane.xlu0 %663
    %v665 = vadd.f32 %v329, %v330
    %666 = vadd.xlane.f32.xlu0 %v665
    %v667 = vpop.xlane.xlu0 %666
    %v668 = vadd.f32 %v331, %v332
    %669 = vadd.xlane.f32.xlu0 %v668
    %v670 = vpop.xlane.xlu0 %669
    %v671 = vadd.f32 %v333, %v334
    %672 = vadd.xlane.f32.xlu0 %v671
    %v673 = vpop.xlane.xlu0 %672
    %v674 = vadd.f32 %v335, %v336
    %675 = vadd.xlane.f32.xlu0 %v674
    %v676 = vpop.xlane.xlu0 %675
    %v677 = vadd.f32 %v337, %v338
    %678 = vadd.xlane.f32.xlu0 %v677
    %v679 = vpop.xlane.xlu0 %678
    %v680 = vadd.f32 %v339, %v340
    %681 = vadd.xlane.f32.xlu0 %v680
    %v682 = vpop.xlane.xlu0 %681
    %v683 = vadd.f32 %v341, %v342
    %684 = vadd.xlane.f32.xlu0 %v683
    %v685 = vpop.xlane.xlu0 %684
    %v686 = vadd.f32 %v343, %v344
    %687 = vadd.xlane.f32.xlu0 %v686
    %v688 = vpop.xlane.xlu0 %687
    %v689 = vadd.f32 %v345, %v346
    %690 = vadd.xlane.f32.xlu0 %v689
    %v691 = vpop.xlane.xlu0 %690
    %v692 = vadd.f32 %v347, %v348
    %693 = vadd.xlane.f32.xlu0 %v692
    %v694 = vpop.xlane.xlu0 %693
    %v695 = vadd.f32 %v349, %v350
    %696 = vadd.xlane.f32.xlu0 %v695
    %v697 = vpop.xlane.xlu0 %696
    %v698 = vadd.f32 %v351, %v352
    %699 = vadd.xlane.f32.xlu0 %v698
    %v700 = vpop.xlane.xlu0 %699
    %v701 = vadd.f32 %v353, %v354
    %702 = vadd.xlane.f32.xlu0 %v701
    %v703 = vpop.xlane.xlu0 %702
    %v704 = vadd.f32 %v355, %v356
    %705 = vadd.xlane.f32.xlu0 %v704
    %v706 = vpop.xlane.xlu0 %705
    %v707 = vadd.f32 %v357, %v358
    %708 = vadd.xlane.f32.xlu0 %v707
    %v709 = vpop.xlane.xlu0 %708
    %v710 = vadd.f32 %v359, %v360
    %711 = vadd.xlane.f32.xlu0 %v710
    %v712 = vpop.xlane.xlu0 %711
    %v713 = vadd.f32 %v361, %v362
    %714 = vadd.xlane.f32.xlu0 %v713
    %v715 = vpop.xlane.xlu0 %714
    %v716 = vadd.f32 %v363, %v364
    %717 = vadd.xlane.f32.xlu0 %v716
    %v718 = vpop.xlane.xlu0 %717
    %v719 = vadd.f32 %v365, %v366
    %720 = vadd.xlane.f32.xlu0 %v719
    %v721 = vpop.xlane.xlu0 %720
    %v722 = vadd.f32 %v367, %v368
    %723 = vadd.xlane.f32.xlu0 %v722
    %v724 = vpop.xlane.xlu0 %723
    %v725 = vadd.f32 %v369, %v370
    %726 = vadd.xlane.f32.xlu0 %v725
    %v727 = vpop.xlane.xlu0 %726
    %v728 = vadd.f32 %v371, %v372
    %729 = vadd.xlane.f32.xlu0 %v728
    %v730 = vpop.xlane.xlu0 %729
    %v731 = vadd.f32 %v373, %v374
    %732 = vadd.xlane.f32.xlu0 %v731
    %v733 = vpop.xlane.xlu0 %732
    %v734 = vadd.f32 %v375, %v376
    %735 = vadd.xlane.f32.xlu0 %v734
    %v736 = vpop.xlane.xlu0 %735
    %v737 = vadd.f32 %v377, %v378
    %738 = vadd.xlane.f32.xlu0 %v737
    %v739 = vpop.xlane.xlu0 %738
    %v740 = vadd.f32 %v379, %v380
    %741 = vadd.xlane.f32.xlu0 %v740
    %v742 = vpop.xlane.xlu0 %741
    %v743 = vadd.f32 %v381, %v382
    %744 = vadd.xlane.f32.xlu0 %v743
    %v745 = vpop.xlane.xlu0 %744
    %v746 = vadd.f32 %v383, %v384
    %747 = vadd.xlane.f32.xlu0 %v746
    %v748 = vpop.xlane.xlu0 %747
    %v749 = vadd.f32 %v385, %v386
    %750 = vadd.xlane.f32.xlu0 %v749
    %v751 = vpop.xlane.xlu0 %750
    %v752 = vadd.f32 %v387, %v388
    %753 = vadd.xlane.f32.xlu0 %v752
    %v754 = vpop.xlane.xlu0 %753
    %v755 = vadd.f32 %v389, %v390
    %756 = vadd.xlane.f32.xlu0 %v755
    %v757 = vpop.xlane.xlu0 %756
    %v758 = vadd.f32 %v391, %v392
    %759 = vadd.xlane.f32.xlu0 %v758
    %v760 = vpop.xlane.xlu0 %759
    %v761 = vadd.f32 %v393, %v394
    %762 = vadd.xlane.f32.xlu0 %v761
    %v763 = vpop.xlane.xlu0 %762
    %v764 = vadd.f32 %v395, %v396
    %765 = vadd.xlane.f32.xlu0 %v764
    %v766 = vpop.xlane.xlu0 %765
    %v767 = vadd.f32 %v397, %v398
    %768 = vadd.xlane.f32.xlu0 %v767
    %v769 = vpop.xlane.xlu0 %768
    %v770 = vadd.f32 %v399, %v400
    %771 = vadd.xlane.f32.xlu0 %v770
    %v772 = vpop.xlane.xlu0 %771
    %v773 = vadd.f32 %v401, %v402
    %774 = vadd.xlane.f32.xlu0 %v773
    %v775 = vpop.xlane.xlu0 %774
    %v776 = vadd.f32 %v403, %v404
    %777 = vadd.xlane.f32.xlu0 %v776
    %v778 = vpop.xlane.xlu0 %777
    %v779 = vadd.f32 %v405, %v406
    %780 = vadd.xlane.f32.xlu0 %v779
    %v781 = vpop.xlane.xlu0 %780
    %v782 = vadd.f32 %v407, %v408
    %783 = vadd.xlane.f32.xlu0 %v782
    %v784 = vpop.xlane.xlu0 %783
    %v785 = vadd.f32 %v409, %v410
    %786 = vadd.xlane.f32.xlu0 %v785
    %v787 = vpop.xlane.xlu0 %786
    %v788 = vadd.f32 %v411, %v412
    %789 = vadd.xlane.f32.xlu0 %v788
    %v790 = vpop.xlane.xlu0 %789
    %v791 = vadd.f32 %v413, %v414
    %792 = vadd.xlane.f32.xlu0 %v791
    %v793 = vpop.xlane.xlu0 %792
    %v794 = vadd.f32 %v415, %v416
    %795 = vadd.xlane.f32.xlu0 %v794
    %v796 = vpop.xlane.xlu0 %795
    %v797 = vadd.f32 %v417, %v418
    %798 = vadd.xlane.f32.xlu0 %v797
    %v799 = vpop.xlane.xlu0 %798
    %v800 = vadd.f32 %v419, %v420
    %801 = vadd.xlane.f32.xlu0 %v800
    %v802 = vpop.xlane.xlu0 %801
    %v803 = vadd.f32 %v421, %v422
    %804 = vadd.xlane.f32.xlu0 %v803
    %v805 = vpop.xlane.xlu0 %804
    %v806 = vadd.f32 %v423, %v424
    %807 = vadd.xlane.f32.xlu0 %v806
    %v808 = vpop.xlane.xlu0 %807
    %v809 = vrcp.pop 256.0
    %v810 = vmul.f32 %v427, %v809
    %v811 = vmul.f32 %v430, %v809
    %v812 = vmul.f32 %v433, %v809
    %v813 = vmul.f32 %v436, %v809
    %v814 = vmul.f32 %v439, %v809
    %v815 = vmul.f32 %v442, %v809
    %v816 = vmul.f32 %v445, %v809
    %v817 = vmul.f32 %v448, %v809
    %v818 = vmul.f32 %v451, %v809
    %v819 = vmul.f32 %v454, %v809
    %v820 = vmul.f32 %v457, %v809
    %v821 = vmul.f32 %v460, %v809
    %v822 = vmul.f32 %v463, %v809
    %v823 = vmul.f32 %v466, %v809
    %v824 = vmul.f32 %v469, %v809
    %v825 = vmul.f32 %v472, %v809
    %v826 = vmul.f32 %v475, %v809
    %v827 = vmul.f32 %v478, %v809
    %v828 = vmul.f32 %v481, %v809
    %v829 = vmul.f32 %v484, %v809
    %v830 = vmul.f32 %v487, %v809
    %v831 = vmul.f32 %v490, %v809
    %v832 = vmul.f32 %v493, %v809
    %v833 = vmul.f32 %v496, %v809
    %v834 = vmul.f32 %v499, %v809
    %v835 = vmul.f32 %v502, %v809
    %v836 = vmul.f32 %v505, %v809
    %v837 = vmul.f32 %v508, %v809
    %v838 = vmul.f32 %v511, %v809
    %v839 = vmul.f32 %v514, %v809
    %v840 = vmul.f32 %v517, %v809
    %v841 = vmul.f32 %v520, %v809
    %v842 = vmul.f32 %v523, %v809
    %v843 = vmul.f32 %v526, %v809
    %v844 = vmul.f32 %v529, %v809
    %v845 = vmul.f32 %v532, %v809
    %v846 = vmul.f32 %v535, %v809
    %v847 = vmul.f32 %v538, %v809
    %v848 = vmul.f32 %v541, %v809
    %v849 = vmul.f32 %v544, %v809
    %v850 = vmul.f32 %v547, %v809
    %v851 = vmul.f32 %v550, %v809
    %v852 = vmul.f32 %v553, %v809
    %v853 = vmul.f32 %v556, %v809
    %v854 = vmul.f32 %v559, %v809
    %v855 = vmul.f32 %v562, %v809
    %v856 = vmul.f32 %v565, %v809
    %v857 = vmul.f32 %v568, %v809
    %v858 = vmul.f32 %v571, %v809
    %v859 = vmul.f32 %v574, %v809
    %v860 = vmul.f32 %v577, %v809
    %v861 = vmul.f32 %v580, %v809
    %v862 = vmul.f32 %v583, %v809
    %v863 = vmul.f32 %v586, %v809
    %v864 = vmul.f32 %v589, %v809
    %v865 = vmul.f32 %v592, %v809
    %v866 = vmul.f32 %v595, %v809
    %v867 = vmul.f32 %v598, %v809
    %v868 = vmul.f32 %v601, %v809
    %v869 = vmul.f32 %v604, %v809
    %v870 = vmul.f32 %v607, %v809
    %v871 = vmul.f32 %v610, %v809
    %v872 = vmul.f32 %v613, %v809
    %v873 = vmul.f32 %v616, %v809
    %v874 = vmul.f32 %v619, %v809
    %v875 = vmul.f32 %v622, %v809
    %v876 = vmul.f32 %v625, %v809
    %v877 = vmul.f32 %v628, %v809
    %v878 = vmul.f32 %v631, %v809
    %v879 = vmul.f32 %v634, %v809
    %v880 = vmul.f32 %v637, %v809
    %v881 = vmul.f32 %v640, %v809
    %v882 = vmul.f32 %v643, %v809
    %v883 = vmul.f32 %v646, %v809
    %v884 = vmul.f32 %v649, %v809
    %v885 = vmul.f32 %v652, %v809
    %v886 = vmul.f32 %v655, %v809
    %v887 = vmul.f32 %v658, %v809
    %v888 = vmul.f32 %v661, %v809
    %v889 = vmul.f32 %v664, %v809
    %v890 = vmul.f32 %v667, %v809
    %v891 = vmul.f32 %v670, %v809
    %v892 = vmul.f32 %v673, %v809
    %v893 = vmul.f32 %v676, %v809
    %v894 = vmul.f32 %v679, %v809
    %v895 = vmul.f32 %v682, %v809
    %v896 = vmul.f32 %v685, %v809
    %v897 = vmul.f32 %v688, %v809
    %v898 = vmul.f32 %v691, %v809
    %v899 = vmul.f32 %v694, %v809
    %v900 = vmul.f32 %v697, %v809
    %v901 = vmul.f32 %v700, %v809
    %v902 = vmul.f32 %v703, %v809
    %v903 = vmul.f32 %v706, %v809
    %v904 = vmul.f32 %v709, %v809
    %v905 = vmul.f32 %v712, %v809
    %v906 = vmul.f32 %v715, %v809
    %v907 = vmul.f32 %v718, %v809
    %v908 = vmul.f32 %v721, %v809
    %v909 = vmul.f32 %v724, %v809
    %v910 = vmul.f32 %v727, %v809
    %v911 = vmul.f32 %v730, %v809
    %v912 = vmul.f32 %v733, %v809
    %v913 = vmul.f32 %v736, %v809
    %v914 = vmul.f32 %v739, %v809
    %v915 = vmul.f32 %v742, %v809
    %v916 = vmul.f32 %v745, %v809
    %v917 = vmul.f32 %v748, %v809
    %v918 = vmul.f32 %v751, %v809
    %v919 = vmul.f32 %v754, %v809
    %v920 = vmul.f32 %v757, %v809
    %v921 = vmul.f32 %v760, %v809
    %v922 = vmul.f32 %v763, %v809
    %v923 = vmul.f32 %v766, %v809
    %v924 = vmul.f32 %v769, %v809
    %v925 = vmul.f32 %v772, %v809
    %v926 = vmul.f32 %v775, %v809
    %v927 = vmul.f32 %v778, %v809
    %v928 = vmul.f32 %v781, %v809
    %v929 = vmul.f32 %v784, %v809
    %v930 = vmul.f32 %v787, %v809
    %v931 = vmul.f32 %v790, %v809
    %v932 = vmul.f32 %v793, %v809
    %v933 = vmul.f32 %v796, %v809
    %v934 = vmul.f32 %v799, %v809
    %v935 = vmul.f32 %v802, %v809
    %v936 = vmul.f32 %v805, %v809
    %v937 = vmul.f32 %v808, %v809
    %v938 = vsub.f32 %v169, %v810
    %v939 = vsub.f32 %v170, %v810
    %v940 = vsub.f32 %v171, %v811
    %v941 = vsub.f32 %v172, %v811
    %v942 = vsub.f32 %v173, %v812
    %v943 = vsub.f32 %v174, %v812
    %v944 = vsub.f32 %v175, %v813
    %v945 = vsub.f32 %v176, %v813
    %v946 = vsub.f32 %v177, %v814
    %v947 = vsub.f32 %v178, %v814
    %v948 = vsub.f32 %v179, %v815
    %v949 = vsub.f32 %v180, %v815
    %v950 = vsub.f32 %v181, %v816
    %v951 = vsub.f32 %v182, %v816
    %v952 = vsub.f32 %v183, %v817
    %v953 = vsub.f32 %v184, %v817
    %v954 = vsub.f32 %v185, %v818
    %v955 = vsub.f32 %v186, %v818
    %v956 = vsub.f32 %v187, %v819
    %v957 = vsub.f32 %v188, %v819
    %v958 = vsub.f32 %v189, %v820
    %v959 = vsub.f32 %v190, %v820
    %v960 = vsub.f32 %v191, %v821
    %v961 = vsub.f32 %v192, %v821
    %v962 = vsub.f32 %v193, %v822
    %v963 = vsub.f32 %v194, %v822
    %v964 = vsub.f32 %v195, %v823
    %v965 = vsub.f32 %v196, %v823
    %v966 = vsub.f32 %v197, %v824
    %v967 = vsub.f32 %v198, %v824
    %v968 = vsub.f32 %v199, %v825
    %v969 = vsub.f32 %v200, %v825
    %v970 = vsub.f32 %v201, %v826
    %v971 = vsub.f32 %v202, %v826
    %v972 = vsub.f32 %v203, %v827
    %v973 = vsub.f32 %v204, %v827
    %v974 = vsub.f32 %v205, %v828
    %v975 = vsub.f32 %v206, %v828
    %v976 = vsub.f32 %v207, %v829
    %v977 = vsub.f32 %v208, %v829
    %v978 = vsub.f32 %v209, %v830
    %v979 = vsub.f32 %v210, %v830
    %v980 = vsub.f32 %v211, %v831
    %v981 = vsub.f32 %v212, %v831
    %v982 = vsub.f32 %v213, %v832
    %v983 = vsub.f32 %v214, %v832
    %v984 = vsub.f32 %v215, %v833
    %v985 = vsub.f32 %v216, %v833
    %v986 = vsub.f32 %v217, %v834
    %v987 = vsub.f32 %v218, %v834
    %v988 = vsub.f32 %v219, %v835
    %v989 = vsub.f32 %v220, %v835
    %v990 = vsub.f32 %v221, %v836
    %v991 = vsub.f32 %v222, %v836
    %v992 = vsub.f32 %v223, %v837
    %v993 = vsub.f32 %v224, %v837
    %v994 = vsub.f32 %v225, %v838
    %v995 = vsub.f32 %v226, %v838
    %v996 = vsub.f32 %v227, %v839
    %v997 = vsub.f32 %v228, %v839
    %v998 = vsub.f32 %v229, %v840
    %v999 = vsub.f32 %v230, %v840
    %v1000 = vsub.f32 %v231, %v841
    %v1001 = vsub.f32 %v232, %v841
    %v1002 = vsub.f32 %v233, %v842
    %v1003 = vsub.f32 %v234, %v842
    %v1004 = vsub.f32 %v235, %v843
    %v1005 = vsub.f32 %v236, %v843
    %v1006 = vsub.f32 %v237, %v844
    %v1007 = vsub.f32 %v238, %v844
    %v1008 = vsub.f32 %v239, %v845
    %v1009 = vsub.f32 %v240, %v845
    %v1010 = vsub.f32 %v241, %v846
    %v1011 = vsub.f32 %v242, %v846
    %v1012 = vsub.f32 %v243, %v847
    %v1013 = vsub.f32 %v244, %v847
    %v1014 = vsub.f32 %v245, %v848
    %v1015 = vsub.f32 %v246, %v848
    %v1016 = vsub.f32 %v247, %v849
    %v1017 = vsub.f32 %v248, %v849
    %v1018 = vsub.f32 %v249, %v850
    %v1019 = vsub.f32 %v250, %v850
    %v1020 = vsub.f32 %v251, %v851
    %v1021 = vsub.f32 %v252, %v851
    %v1022 = vsub.f32 %v253, %v852
    %v1023 = vsub.f32 %v254, %v852
    %v1024 = vsub.f32 %v255, %v853
    %v1025 = vsub.f32 %v256, %v853
    %v1026 = vsub.f32 %v257, %v854
    %v1027 = vsub.f32 %v258, %v854
    %v1028 = vsub.f32 %v259, %v855
    %v1029 = vsub.f32 %v260, %v855
    %v1030 = vsub.f32 %v261, %v856
    %v1031 = vsub.f32 %v262, %v856
    %v1032 = vsub.f32 %v263, %v857
    %v1033 = vsub.f32 %v264, %v857
    %v1034 = vsub.f32 %v265, %v858
    %v1035 = vsub.f32 %v266, %v858
    %v1036 = vsub.f32 %v267, %v859
    %v1037 = vsub.f32 %v268, %v859
    %v1038 = vsub.f32 %v269, %v860
    %v1039 = vsub.f32 %v270, %v860
    %v1040 = vsub.f32 %v271, %v861
    %v1041 = vsub.f32 %v272, %v861
    %v1042 = vsub.f32 %v273, %v862
    %v1043 = vsub.f32 %v274, %v862
    %v1044 = vsub.f32 %v275, %v863
    %v1045 = vsub.f32 %v276, %v863
    %v1046 = vsub.f32 %v277, %v864
    %v1047 = vsub.f32 %v278, %v864
    %v1048 = vsub.f32 %v279, %v865
    %v1049 = vsub.f32 %v280, %v865
    %v1050 = vsub.f32 %v281, %v866
    %v1051 = vsub.f32 %v282, %v866
    %v1052 = vsub.f32 %v283, %v867
    %v1053 = vsub.f32 %v284, %v867
    %v1054 = vsub.f32 %v285, %v868
    %v1055 = vsub.f32 %v286, %v868
    %v1056 = vsub.f32 %v287, %v869
    %v1057 = vsub.f32 %v288, %v869
    %v1058 = vsub.f32 %v289, %v870
    %v1059 = vsub.f32 %v290, %v870
    %v1060 = vsub.f32 %v291, %v871
    %v1061 = vsub.f32 %v292, %v871
    %v1062 = vsub.f32 %v293, %v872
    %v1063 = vsub.f32 %v294, %v872
    %v1064 = vsub.f32 %v295, %v873
    %v1065 = vsub.f32 %v296, %v873
    %v1066 = vsub.f32 %v297, %v874
    %v1067 = vsub.f32 %v298, %v874
    %v1068 = vsub.f32 %v299, %v875
    %v1069 = vsub.f32 %v300, %v875
    %v1070 = vsub.f32 %v301, %v876
    %v1071 = vsub.f32 %v302, %v876
    %v1072 = vsub.f32 %v303, %v877
    %v1073 = vsub.f32 %v304, %v877
    %v1074 = vsub.f32 %v305, %v878
    %v1075 = vsub.f32 %v306, %v878
    %v1076 = vsub.f32 %v307, %v879
    %v1077 = vsub.f32 %v308, %v879
    %v1078 = vsub.f32 %v309, %v880
    %v1079 = vsub.f32 %v310, %v880
    %v1080 = vsub.f32 %v311, %v881
    %v1081 = vsub.f32 %v312, %v881
    %v1082 = vsub.f32 %v313, %v882
    %v1083 = vsub.f32 %v314, %v882
    %v1084 = vsub.f32 %v315, %v883
    %v1085 = vsub.f32 %v316, %v883
    %v1086 = vsub.f32 %v317, %v884
    %v1087 = vsub.f32 %v318, %v884
    %v1088 = vsub.f32 %v319, %v885
    %v1089 = vsub.f32 %v320, %v885
    %v1090 = vsub.f32 %v321, %v886
    %v1091 = vsub.f32 %v322, %v886
    %v1092 = vsub.f32 %v323, %v887
    %v1093 = vsub.f32 %v324, %v887
    %v1094 = vsub.f32 %v325, %v888
    %v1095 = vsub.f32 %v326, %v888
    %v1096 = vsub.f32 %v327, %v889
    %v1097 = vsub.f32 %v328, %v889
    %v1098 = vsub.f32 %v329, %v890
    %v1099 = vsub.f32 %v330, %v890
    %v1100 = vsub.f32 %v331, %v891
    %v1101 = vsub.f32 %v332, %v891
    %v1102 = vsub.f32 %v333, %v892
    %v1103 = vsub.f32 %v334, %v892
    %v1104 = vsub.f32 %v335, %v893
    %v1105 = vsub.f32 %v336, %v893
    %v1106 = vsub.f32 %v337, %v894
    %v1107 = vsub.f32 %v338, %v894
    %v1108 = vsub.f32 %v339, %v895
    %v1109 = vsub.f32 %v340, %v895
    %v1110 = vsub.f32 %v341, %v896
    %v1111 = vsub.f32 %v342, %v896
    %v1112 = vsub.f32 %v343, %v897
    %v1113 = vsub.f32 %v344, %v897
    %v1114 = vsub.f32 %v345, %v898
    %v1115 = vsub.f32 %v346, %v898
    %v1116 = vsub.f32 %v347, %v899
    %v1117 = vsub.f32 %v348, %v899
    %v1118 = vsub.f32 %v349, %v900
    %v1119 = vsub.f32 %v350, %v900
    %v1120 = vsub.f32 %v351, %v901
    %v1121 = vsub.f32 %v352, %v901
    %v1122 = vsub.f32 %v353, %v902
    %v1123 = vsub.f32 %v354, %v902
    %v1124 = vsub.f32 %v355, %v903
    %v1125 = vsub.f32 %v356, %v903
    %v1126 = vsub.f32 %v357, %v904
    %v1127 = vsub.f32 %v358, %v904
    %v1128 = vsub.f32 %v359, %v905
    %v1129 = vsub.f32 %v360, %v905
    %v1130 = vsub.f32 %v361, %v906
    %v1131 = vsub.f32 %v362, %v906
    %v1132 = vsub.f32 %v363, %v907
    %v1133 = vsub.f32 %v364, %v907
    %v1134 = vsub.f32 %v365, %v908
    %v1135 = vsub.f32 %v366, %v908
    %v1136 = vsub.f32 %v367, %v909
    %v1137 = vsub.f32 %v368, %v909
    %v1138 = vsub.f32 %v369, %v910
    %v1139 = vsub.f32 %v370, %v910
    %v1140 = vsub.f32 %v371, %v911
    %v1141 = vsub.f32 %v372, %v911
    %v1142 = vsub.f32 %v373, %v912
    %v1143 = vsub.f32 %v374, %v912
    %v1144 = vsub.f32 %v375, %v913
    %v1145 = vsub.f32 %v376, %v913
    %v1146 = vsub.f32 %v377, %v914
    %v1147 = vsub.f32 %v378, %v914
    %v1148 = vsub.f32 %v379, %v915
    %v1149 = vsub.f32 %v380, %v915
    %v1150 = vsub.f32 %v381, %v916
    %v1151 = vsub.f32 %v382, %v916
    %v1152 = vsub.f32 %v383, %v917
    %v1153 = vsub.f32 %v384, %v917
    %v1154 = vsub.f32 %v385, %v918
    %v1155 = vsub.f32 %v386, %v918
    %v1156 = vsub.f32 %v387, %v919
    %v1157 = vsub.f32 %v388, %v919
    %v1158 = vsub.f32 %v389, %v920
    %v1159 = vsub.f32 %v390, %v920
    %v1160 = vsub.f32 %v391, %v921
    %v1161 = vsub.f32 %v392, %v921
    %v1162 = vsub.f32 %v393, %v922
    %v1163 = vsub.f32 %v394, %v922
    %v1164 = vsub.f32 %v395, %v923
    %v1165 = vsub.f32 %v396, %v923
    %v1166 = vsub.f32 %v397, %v924
    %v1167 = vsub.f32 %v398, %v924
    %v1168 = vsub.f32 %v399, %v925
    %v1169 = vsub.f32 %v400, %v925
    %v1170 = vsub.f32 %v401, %v926
    %v1171 = vsub.f32 %v402, %v926
    %v1172 = vsub.f32 %v403, %v927
    %v1173 = vsub.f32 %v404, %v927
    %v1174 = vsub.f32 %v405, %v928
    %v1175 = vsub.f32 %v406, %v928
    %v1176 = vsub.f32 %v407, %v929
    %v1177 = vsub.f32 %v408, %v929
    %v1178 = vsub.f32 %v409, %v930
    %v1179 = vsub.f32 %v410, %v930
    %v1180 = vsub.f32 %v411, %v931
    %v1181 = vsub.f32 %v412, %v931
    %v1182 = vsub.f32 %v413, %v932
    %v1183 = vsub.f32 %v414, %v932
    %v1184 = vsub.f32 %v415, %v933
    %v1185 = vsub.f32 %v416, %v933
    %v1186 = vsub.f32 %v417, %v934
    %v1187 = vsub.f32 %v418, %v934
    %v1188 = vsub.f32 %v419, %v935
    %v1189 = vsub.f32 %v420, %v935
    %v1190 = vsub.f32 %v421, %v936
    %v1191 = vsub.f32 %v422, %v936
    %v1192 = vsub.f32 %v423, %v937
    %v1193 = vsub.f32 %v424, %v937
    %v1194 = vmul.f32 %v938, %v938
    %v1195 = vmul.f32 %v939, %v939
    %v1196 = vmul.f32 %v940, %v940
    %v1197 = vmul.f32 %v941, %v941
    %v1198 = vmul.f32 %v942, %v942
    %v1199 = vmul.f32 %v943, %v943
    %v1200 = vmul.f32 %v944, %v944
    %v1201 = vmul.f32 %v945, %v945
    %v1202 = vmul.f32 %v946, %v946
    %v1203 = vmul.f32 %v947, %v947
    %v1204 = vmul.f32 %v948, %v948
    %v1205 = vmul.f32 %v949, %v949
    %v1206 = vmul.f32 %v950, %v950
    %v1207 = vmul.f32 %v951, %v951
    %v1208 = vmul.f32 %v952, %v952
    %v1209 = vmul.f32 %v953, %v953
    %v1210 = vmul.f32 %v954, %v954
    %v1211 = vmul.f32 %v955, %v955
    %v1212 = vmul.f32 %v956, %v956
    %v1213 = vmul.f32 %v957, %v957
    %v1214 = vmul.f32 %v958, %v958
    %v1215 = vmul.f32 %v959, %v959
    %v1216 = vmul.f32 %v960, %v960
    %v1217 = vmul.f32 %v961, %v961
    %v1218 = vmul.f32 %v962, %v962
    %v1219 = vmul.f32 %v963, %v963
    %v1220 = vmul.f32 %v964, %v964
    %v1221 = vmul.f32 %v965, %v965
    %v1222 = vmul.f32 %v966, %v966
    %v1223 = vmul.f32 %v967, %v967
    %v1224 = vmul.f32 %v968, %v968
    %v1225 = vmul.f32 %v969, %v969
    %v1226 = vmul.f32 %v970, %v970
    %v1227 = vmul.f32 %v971, %v971
    %v1228 = vmul.f32 %v972, %v972
    %v1229 = vmul.f32 %v973, %v973
    %v1230 = vmul.f32 %v974, %v974
    %v1231 = vmul.f32 %v975, %v975
    %v1232 = vmul.f32 %v976, %v976
    %v1233 = vmul.f32 %v977, %v977
    %v1234 = vmul.f32 %v978, %v978
    %v1235 = vmul.f32 %v979, %v979
    %v1236 = vmul.f32 %v980, %v980
    %v1237 = vmul.f32 %v981, %v981
    %v1238 = vmul.f32 %v982, %v982
    %v1239 = vmul.f32 %v983, %v983
    %v1240 = vmul.f32 %v984, %v984
    %v1241 = vmul.f32 %v985, %v985
    %v1242 = vmul.f32 %v986, %v986
    %v1243 = vmul.f32 %v987, %v987
    %v1244 = vmul.f32 %v988, %v988
    %v1245 = vmul.f32 %v989, %v989
    %v1246 = vmul.f32 %v990, %v990
    %v1247 = vmul.f32 %v991, %v991
    %v1248 = vmul.f32 %v992, %v992
    %v1249 = vmul.f32 %v993, %v993
    %v1250 = vmul.f32 %v994, %v994
    %v1251 = vmul.f32 %v995, %v995
    %v1252 = vmul.f32 %v996, %v996
    %v1253 = vmul.f32 %v997, %v997
    %v1254 = vmul.f32 %v998, %v998
    %v1255 = vmul.f32 %v999, %v999
    %v1256 = vmul.f32 %v1000, %v1000
    %v1257 = vmul.f32 %v1001, %v1001
    %v1258 = vmul.f32 %v1002, %v1002
    %v1259 = vmul.f32 %v1003, %v1003
    %v1260 = vmul.f32 %v1004, %v1004
    %v1261 = vmul.f32 %v1005, %v1005
    %v1262 = vmul.f32 %v1006, %v1006
    %v1263 = vmul.f32 %v1007, %v1007
    %v1264 = vmul.f32 %v1008, %v1008
    %v1265 = vmul.f32 %v1009, %v1009
    %v1266 = vmul.f32 %v1010, %v1010
    %v1267 = vmul.f32 %v1011, %v1011
    %v1268 = vmul.f32 %v1012, %v1012
    %v1269 = vmul.f32 %v1013, %v1013
    %v1270 = vmul.f32 %v1014, %v1014
    %v1271 = vmul.f32 %v1015, %v1015
    %v1272 = vmul.f32 %v1016, %v1016
    %v1273 = vmul.f32 %v1017, %v1017
    %v1274 = vmul.f32 %v1018, %v1018
    %v1275 = vmul.f32 %v1019, %v1019
    %v1276 = vmul.f32 %v1020, %v1020
    %v1277 = vmul.f32 %v1021, %v1021
    %v1278 = vmul.f32 %v1022, %v1022
    %v1279 = vmul.f32 %v1023, %v1023
    %v1280 = vmul.f32 %v1024, %v1024
    %v1281 = vmul.f32 %v1025, %v1025
    %v1282 = vmul.f32 %v1026, %v1026
    %v1283 = vmul.f32 %v1027, %v1027
    %v1284 = vmul.f32 %v1028, %v1028
    %v1285 = vmul.f32 %v1029, %v1029
    %v1286 = vmul.f32 %v1030, %v1030
    %v1287 = vmul.f32 %v1031, %v1031
    %v1288 = vmul.f32 %v1032, %v1032
    %v1289 = vmul.f32 %v1033, %v1033
    %v1290 = vmul.f32 %v1034, %v1034
    %v1291 = vmul.f32 %v1035, %v1035
    %v1292 = vmul.f32 %v1036, %v1036
    %v1293 = vmul.f32 %v1037, %v1037
    %v1294 = vmul.f32 %v1038, %v1038
    %v1295 = vmul.f32 %v1039, %v1039
    %v1296 = vmul.f32 %v1040, %v1040
    %v1297 = vmul.f32 %v1041, %v1041
    %v1298 = vmul.f32 %v1042, %v1042
    %v1299 = vmul.f32 %v1043, %v1043
    %v1300 = vmul.f32 %v1044, %v1044
    %v1301 = vmul.f32 %v1045, %v1045
    %v1302 = vmul.f32 %v1046, %v1046
    %v1303 = vmul.f32 %v1047, %v1047
    %v1304 = vmul.f32 %v1048, %v1048
    %v1305 = vmul.f32 %v1049, %v1049
    %v1306 = vmul.f32 %v1050, %v1050
    %v1307 = vmul.f32 %v1051, %v1051
    %v1308 = vmul.f32 %v1052, %v1052
    %v1309 = vmul.f32 %v1053, %v1053
    %v1310 = vmul.f32 %v1054, %v1054
    %v1311 = vmul.f32 %v1055, %v1055
    %v1312 = vmul.f32 %v1056, %v1056
    %v1313 = vmul.f32 %v1057, %v1057
    %v1314 = vmul.f32 %v1058, %v1058
    %v1315 = vmul.f32 %v1059, %v1059
    %v1316 = vmul.f32 %v1060, %v1060
    %v1317 = vmul.f32 %v1061, %v1061
    %v1318 = vmul.f32 %v1062, %v1062
    %v1319 = vmul.f32 %v1063, %v1063
    %v1320 = vmul.f32 %v1064, %v1064
    %v1321 = vmul.f32 %v1065, %v1065
    %v1322 = vmul.f32 %v1066, %v1066
    %v1323 = vmul.f32 %v1067, %v1067
    %v1324 = vmul.f32 %v1068, %v1068
    %v1325 = vmul.f32 %v1069, %v1069
    %v1326 = vmul.f32 %v1070, %v1070
    %v1327 = vmul.f32 %v1071, %v1071
    %v1328 = vmul.f32 %v1072, %v1072
    %v1329 = vmul.f32 %v1073, %v1073
    %v1330 = vmul.f32 %v1074, %v1074
    %v1331 = vmul.f32 %v1075, %v1075
    %v1332 = vmul.f32 %v1076, %v1076
    %v1333 = vmul.f32 %v1077, %v1077
    %v1334 = vmul.f32 %v1078, %v1078
    %v1335 = vmul.f32 %v1079, %v1079
    %v1336 = vmul.f32 %v1080, %v1080
    %v1337 = vmul.f32 %v1081, %v1081
    %v1338 = vmul.f32 %v1082, %v1082
    %v1339 = vmul.f32 %v1083, %v1083
    %v1340 = vmul.f32 %v1084, %v1084
    %v1341 = vmul.f32 %v1085, %v1085
    %v1342 = vmul.f32 %v1086, %v1086
    %v1343 = vmul.f32 %v1087, %v1087
    %v1344 = vmul.f32 %v1088, %v1088
    %v1345 = vmul.f32 %v1089, %v1089
    %v1346 = vmul.f32 %v1090, %v1090
    %v1347 = vmul.f32 %v1091, %v1091
    %v1348 = vmul.f32 %v1092, %v1092
    %v1349 = vmul.f32 %v1093, %v1093
    %v1350 = vmul.f32 %v1094, %v1094
    %v1351 = vmul.f32 %v1095, %v1095
    %v1352 = vmul.f32 %v1096, %v1096
    %v1353 = vmul.f32 %v1097, %v1097
    %v1354 = vmul.f32 %v1098, %v1098
    %v1355 = vmul.f32 %v1099, %v1099
    %v1356 = vmul.f32 %v1100, %v1100
    %v1357 = vmul.f32 %v1101, %v1101
    %v1358 = vmul.f32 %v1102, %v1102
    %v1359 = vmul.f32 %v1103, %v1103
    %v1360 = vmul.f32 %v1104, %v1104
    %v1361 = vmul.f32 %v1105, %v1105
    %v1362 = vmul.f32 %v1106, %v1106
    %v1363 = vmul.f32 %v1107, %v1107
    %v1364 = vmul.f32 %v1108, %v1108
    %v1365 = vmul.f32 %v1109, %v1109
    %v1366 = vmul.f32 %v1110, %v1110
    %v1367 = vmul.f32 %v1111, %v1111
    %v1368 = vmul.f32 %v1112, %v1112
    %v1369 = vmul.f32 %v1113, %v1113
    %v1370 = vmul.f32 %v1114, %v1114
    %v1371 = vmul.f32 %v1115, %v1115
    %v1372 = vmul.f32 %v1116, %v1116
    %v1373 = vmul.f32 %v1117, %v1117
    %v1374 = vmul.f32 %v1118, %v1118
    %v1375 = vmul.f32 %v1119, %v1119
    %v1376 = vmul.f32 %v1120, %v1120
    %v1377 = vmul.f32 %v1121, %v1121
    %v1378 = vmul.f32 %v1122, %v1122
    %v1379 = vmul.f32 %v1123, %v1123
    %v1380 = vmul.f32 %v1124, %v1124
    %v1381 = vmul.f32 %v1125, %v1125
    %v1382 = vmul.f32 %v1126, %v1126
    %v1383 = vmul.f32 %v1127, %v1127
    %v1384 = vmul.f32 %v1128, %v1128
    %v1385 = vmul.f32 %v1129, %v1129
    %v1386 = vmul.f32 %v1130, %v1130
    %v1387 = vmul.f32 %v1131, %v1131
    %v1388 = vmul.f32 %v1132, %v1132
    %v1389 = vmul.f32 %v1133, %v1133
    %v1390 = vmul.f32 %v1134, %v1134
    %v1391 = vmul.f32 %v1135, %v1135
    %v1392 = vmul.f32 %v1136, %v1136
    %v1393 = vmul.f32 %v1137, %v1137
    %v1394 = vmul.f32 %v1138, %v1138
    %v1395 = vmul.f32 %v1139, %v1139
    %v1396 = vmul.f32 %v1140, %v1140
    %v1397 = vmul.f32 %v1141, %v1141
    %v1398 = vmul.f32 %v1142, %v1142
    %v1399 = vmul.f32 %v1143, %v1143
    %v1400 = vmul.f32 %v1144, %v1144
    %v1401 = vmul.f32 %v1145, %v1145
    %v1402 = vmul.f32 %v1146, %v1146
    %v1403 = vmul.f32 %v1147, %v1147
    %v1404 = vmul.f32 %v1148, %v1148
    %v1405 = vmul.f32 %v1149, %v1149
    %v1406 = vmul.f32 %v1150, %v1150
    %v1407 = vmul.f32 %v1151, %v1151
    %v1408 = vmul.f32 %v1152, %v1152
    %v1409 = vmul.f32 %v1153, %v1153
    %v1410 = vmul.f32 %v1154, %v1154
    %v1411 = vmul.f32 %v1155, %v1155
    %v1412 = vmul.f32 %v1156, %v1156
    %v1413 = vmul.f32 %v1157, %v1157
    %v1414 = vmul.f32 %v1158, %v1158
    %v1415 = vmul.f32 %v1159, %v1159
    %v1416 = vmul.f32 %v1160, %v1160
    %v1417 = vmul.f32 %v1161, %v1161
    %v1418 = vmul.f32 %v1162, %v1162
    %v1419 = vmul.f32 %v1163, %v1163
    %v1420 = vmul.f32 %v1164, %v1164
    %v1421 = vmul.f32 %v1165, %v1165
    %v1422 = vmul.f32 %v1166, %v1166
    %v1423 = vmul.f32 %v1167, %v1167
    %v1424 = vmul.f32 %v1168, %v1168
    %v1425 = vmul.f32 %v1169, %v1169
    %v1426 = vmul.f32 %v1170, %v1170
    %v1427 = vmul.f32 %v1171, %v1171
    %v1428 = vmul.f32 %v1172, %v1172
    %v1429 = vmul.f32 %v1173, %v1173
    %v1430 = vmul.f32 %v1174, %v1174
    %v1431 = vmul.f32 %v1175, %v1175
    %v1432 = vmul.f32 %v1176, %v1176
    %v1433 = vmul.f32 %v1177, %v1177
    %v1434 = vmul.f32 %v1178, %v1178
    %v1435 = vmul.f32 %v1179, %v1179
    %v1436 = vmul.f32 %v1180, %v1180
    %v1437 = vmul.f32 %v1181, %v1181
    %v1438 = vmul.f32 %v1182, %v1182
    %v1439 = vmul.f32 %v1183, %v1183
    %v1440 = vmul.f32 %v1184, %v1184
    %v1441 = vmul.f32 %v1185, %v1185
    %v1442 = vmul.f32 %v1186, %v1186
    %v1443 = vmul.f32 %v1187, %v1187
    %v1444 = vmul.f32 %v1188, %v1188
    %v1445 = vmul.f32 %v1189, %v1189
    %v1446 = vmul.f32 %v1190, %v1190
    %v1447 = vmul.f32 %v1191, %v1191
    %v1448 = vmul.f32 %v1192, %v1192
    %v1449 = vmul.f32 %v1193, %v1193
    %v1450 = vadd.f32 %v1194, %v1195
    %1451 = vadd.xlane.f32.xlu0 %v1450
    %v1452 = vpop.xlane.xlu0 %1451
    %v1453 = vadd.f32 %v1196, %v1197
    %1454 = vadd.xlane.f32.xlu0 %v1453
    %v1455 = vpop.xlane.xlu0 %1454
    %v1456 = vadd.f32 %v1198, %v1199
    %1457 = vadd.xlane.f32.xlu0 %v1456
    %v1458 = vpop.xlane.xlu0 %1457
    %v1459 = vadd.f32 %v1200, %v1201
    %1460 = vadd.xlane.f32.xlu0 %v1459
    %v1461 = vpop.xlane.xlu0 %1460
    %v1462 = vadd.f32 %v1202, %v1203
    %1463 = vadd.xlane.f32.xlu0 %v1462
    %v1464 = vpop.xlane.xlu0 %1463
    %v1465 = vadd.f32 %v1204, %v1205
    %1466 = vadd.xlane.f32.xlu0 %v1465
    %v1467 = vpop.xlane.xlu0 %1466
    %v1468 = vadd.f32 %v1206, %v1207
    %1469 = vadd.xlane.f32.xlu0 %v1468
    %v1470 = vpop.xlane.xlu0 %1469
    %v1471 = vadd.f32 %v1208, %v1209
    %1472 = vadd.xlane.f32.xlu0 %v1471
    %v1473 = vpop.xlane.xlu0 %1472
    %v1474 = vadd.f32 %v1210, %v1211
    %1475 = vadd.xlane.f32.xlu0 %v1474
    %v1476 = vpop.xlane.xlu0 %1475
    %v1477 = vadd.f32 %v1212, %v1213
    %1478 = vadd.xlane.f32.xlu0 %v1477
    %v1479 = vpop.xlane.xlu0 %1478
    %v1480 = vadd.f32 %v1214, %v1215
    %1481 = vadd.xlane.f32.xlu0 %v1480
    %v1482 = vpop.xlane.xlu0 %1481
    %v1483 = vadd.f32 %v1216, %v1217
    %1484 = vadd.xlane.f32.xlu0 %v1483
    %v1485 = vpop.xlane.xlu0 %1484
    %v1486 = vadd.f32 %v1218, %v1219
    %1487 = vadd.xlane.f32.xlu0 %v1486
    %v1488 = vpop.xlane.xlu0 %1487
    %v1489 = vadd.f32 %v1220, %v1221
    %1490 = vadd.xlane.f32.xlu0 %v1489
    %v1491 = vpop.xlane.xlu0 %1490
    %v1492 = vadd.f32 %v1222, %v1223
    %1493 = vadd.xlane.f32.xlu0 %v1492
    %v1494 = vpop.xlane.xlu0 %1493
    %v1495 = vadd.f32 %v1224, %v1225
    %1496 = vadd.xlane.f32.xlu0 %v1495
    %v1497 = vpop.xlane.xlu0 %1496
    %v1498 = vadd.f32 %v1226, %v1227
    %1499 = vadd.xlane.f32.xlu0 %v1498
    %v1500 = vpop.xlane.xlu0 %1499
    %v1501 = vadd.f32 %v1228, %v1229
    %1502 = vadd.xlane.f32.xlu0 %v1501
    %v1503 = vpop.xlane.xlu0 %1502
    %v1504 = vadd.f32 %v1230, %v1231
    %1505 = vadd.xlane.f32.xlu0 %v1504
    %v1506 = vpop.xlane.xlu0 %1505
    %v1507 = vadd.f32 %v1232, %v1233
    %1508 = vadd.xlane.f32.xlu0 %v1507
    %v1509 = vpop.xlane.xlu0 %1508
    %v1510 = vadd.f32 %v1234, %v1235
    %1511 = vadd.xlane.f32.xlu0 %v1510
    %v1512 = vpop.xlane.xlu0 %1511
    %v1513 = vadd.f32 %v1236, %v1237
    %1514 = vadd.xlane.f32.xlu0 %v1513
    %v1515 = vpop.xlane.xlu0 %1514
    %v1516 = vadd.f32 %v1238, %v1239
    %1517 = vadd.xlane.f32.xlu0 %v1516
    %v1518 = vpop.xlane.xlu0 %1517
    %v1519 = vadd.f32 %v1240, %v1241
    %1520 = vadd.xlane.f32.xlu0 %v1519
    %v1521 = vpop.xlane.xlu0 %1520
    %v1522 = vadd.f32 %v1242, %v1243
    %1523 = vadd.xlane.f32.xlu0 %v1522
    %v1524 = vpop.xlane.xlu0 %1523
    %v1525 = vadd.f32 %v1244, %v1245
    %1526 = vadd.xlane.f32.xlu0 %v1525
    %v1527 = vpop.xlane.xlu0 %1526
    %v1528 = vadd.f32 %v1246, %v1247
    %1529 = vadd.xlane.f32.xlu0 %v1528
    %v1530 = vpop.xlane.xlu0 %1529
    %v1531 = vadd.f32 %v1248, %v1249
    %1532 = vadd.xlane.f32.xlu0 %v1531
    %v1533 = vpop.xlane.xlu0 %1532
    %v1534 = vadd.f32 %v1250, %v1251
    %1535 = vadd.xlane.f32.xlu0 %v1534
    %v1536 = vpop.xlane.xlu0 %1535
    %v1537 = vadd.f32 %v1252, %v1253
    %1538 = vadd.xlane.f32.xlu0 %v1537
    %v1539 = vpop.xlane.xlu0 %1538
    %v1540 = vadd.f32 %v1254, %v1255
    %1541 = vadd.xlane.f32.xlu0 %v1540
    %v1542 = vpop.xlane.xlu0 %1541
    %v1543 = vadd.f32 %v1256, %v1257
    %1544 = vadd.xlane.f32.xlu0 %v1543
    %v1545 = vpop.xlane.xlu0 %1544
    %v1546 = vadd.f32 %v1258, %v1259
    %1547 = vadd.xlane.f32.xlu0 %v1546
    %v1548 = vpop.xlane.xlu0 %1547
    %v1549 = vadd.f32 %v1260, %v1261
    %1550 = vadd.xlane.f32.xlu0 %v1549
    %v1551 = vpop.xlane.xlu0 %1550
    %v1552 = vadd.f32 %v1262, %v1263
    %1553 = vadd.xlane.f32.xlu0 %v1552
    %v1554 = vpop.xlane.xlu0 %1553
    %v1555 = vadd.f32 %v1264, %v1265
    %1556 = vadd.xlane.f32.xlu0 %v1555
    %v1557 = vpop.xlane.xlu0 %1556
    %v1558 = vadd.f32 %v1266, %v1267
    %1559 = vadd.xlane.f32.xlu0 %v1558
    %v1560 = vpop.xlane.xlu0 %1559
    %v1561 = vadd.f32 %v1268, %v1269
    %1562 = vadd.xlane.f32.xlu0 %v1561
    %v1563 = vpop.xlane.xlu0 %1562
    %v1564 = vadd.f32 %v1270, %v1271
    %1565 = vadd.xlane.f32.xlu0 %v1564
    %v1566 = vpop.xlane.xlu0 %1565
    %v1567 = vadd.f32 %v1272, %v1273
    %1568 = vadd.xlane.f32.xlu0 %v1567
    %v1569 = vpop.xlane.xlu0 %1568
    %v1570 = vadd.f32 %v1274, %v1275
    %1571 = vadd.xlane.f32.xlu0 %v1570
    %v1572 = vpop.xlane.xlu0 %1571
    %v1573 = vadd.f32 %v1276, %v1277
    %1574 = vadd.xlane.f32.xlu0 %v1573
    %v1575 = vpop.xlane.xlu0 %1574
    %v1576 = vadd.f32 %v1278, %v1279
    %1577 = vadd.xlane.f32.xlu0 %v1576
    %v1578 = vpop.xlane.xlu0 %1577
    %v1579 = vadd.f32 %v1280, %v1281
    %1580 = vadd.xlane.f32.xlu0 %v1579
    %v1581 = vpop.xlane.xlu0 %1580
    %v1582 = vadd.f32 %v1282, %v1283
    %1583 = vadd.xlane.f32.xlu0 %v1582
    %v1584 = vpop.xlane.xlu0 %1583
    %v1585 = vadd.f32 %v1284, %v1285
    %1586 = vadd.xlane.f32.xlu0 %v1585
    %v1587 = vpop.xlane.xlu0 %1586
    %v1588 = vadd.f32 %v1286, %v1287
    %1589 = vadd.xlane.f32.xlu0 %v1588
    %v1590 = vpop.xlane.xlu0 %1589
    %v1591 = vadd.f32 %v1288, %v1289
    %1592 = vadd.xlane.f32.xlu0 %v1591
    %v1593 = vpop.xlane.xlu0 %1592
    %v1594 = vadd.f32 %v1290, %v1291
    %1595 = vadd.xlane.f32.xlu0 %v1594
    %v1596 = vpop.xlane.xlu0 %1595
    %v1597 = vadd.f32 %v1292, %v1293
    %1598 = vadd.xlane.f32.xlu0 %v1597
    %v1599 = vpop.xlane.xlu0 %1598
    %v1600 = vadd.f32 %v1294, %v1295
    %1601 = vadd.xlane.f32.xlu0 %v1600
    %v1602 = vpop.xlane.xlu0 %1601
    %v1603 = vadd.f32 %v1296, %v1297
    %1604 = vadd.xlane.f32.xlu0 %v1603
    %v1605 = vpop.xlane.xlu0 %1604
    %v1606 = vadd.f32 %v1298, %v1299
    %1607 = vadd.xlane.f32.xlu0 %v1606
    %v1608 = vpop.xlane.xlu0 %1607
    %v1609 = vadd.f32 %v1300, %v1301
    %1610 = vadd.xlane.f32.xlu0 %v1609
    %v1611 = vpop.xlane.xlu0 %1610
    %v1612 = vadd.f32 %v1302, %v1303
    %1613 = vadd.xlane.f32.xlu0 %v1612
    %v1614 = vpop.xlane.xlu0 %1613
    %v1615 = vadd.f32 %v1304, %v1305
    %1616 = vadd.xlane.f32.xlu0 %v1615
    %v1617 = vpop.xlane.xlu0 %1616
    %v1618 = vadd.f32 %v1306, %v1307
    %1619 = vadd.xlane.f32.xlu0 %v1618
    %v1620 = vpop.xlane.xlu0 %1619
    %v1621 = vadd.f32 %v1308, %v1309
    %1622 = vadd.xlane.f32.xlu0 %v1621
    %v1623 = vpop.xlane.xlu0 %1622
    %v1624 = vadd.f32 %v1310, %v1311
    %1625 = vadd.xlane.f32.xlu0 %v1624
    %v1626 = vpop.xlane.xlu0 %1625
    %v1627 = vadd.f32 %v1312, %v1313
    %1628 = vadd.xlane.f32.xlu0 %v1627
    %v1629 = vpop.xlane.xlu0 %1628
    %v1630 = vadd.f32 %v1314, %v1315
    %1631 = vadd.xlane.f32.xlu0 %v1630
    %v1632 = vpop.xlane.xlu0 %1631
    %v1633 = vadd.f32 %v1316, %v1317
    %1634 = vadd.xlane.f32.xlu0 %v1633
    %v1635 = vpop.xlane.xlu0 %1634
    %v1636 = vadd.f32 %v1318, %v1319
    %1637 = vadd.xlane.f32.xlu0 %v1636
    %v1638 = vpop.xlane.xlu0 %1637
    %v1639 = vadd.f32 %v1320, %v1321
    %1640 = vadd.xlane.f32.xlu0 %v1639
    %v1641 = vpop.xlane.xlu0 %1640
    %v1642 = vadd.f32 %v1322, %v1323
    %1643 = vadd.xlane.f32.xlu0 %v1642
    %v1644 = vpop.xlane.xlu0 %1643
    %v1645 = vadd.f32 %v1324, %v1325
    %1646 = vadd.xlane.f32.xlu0 %v1645
    %v1647 = vpop.xlane.xlu0 %1646
    %v1648 = vadd.f32 %v1326, %v1327
    %1649 = vadd.xlane.f32.xlu0 %v1648
    %v1650 = vpop.xlane.xlu0 %1649
    %v1651 = vadd.f32 %v1328, %v1329
    %1652 = vadd.xlane.f32.xlu0 %v1651
    %v1653 = vpop.xlane.xlu0 %1652
    %v1654 = vadd.f32 %v1330, %v1331
    %1655 = vadd.xlane.f32.xlu0 %v1654
    %v1656 = vpop.xlane.xlu0 %1655
    %v1657 = vadd.f32 %v1332, %v1333
    %1658 = vadd.xlane.f32.xlu0 %v1657
    %v1659 = vpop.xlane.xlu0 %1658
    %v1660 = vadd.f32 %v1334, %v1335
    %1661 = vadd.xlane.f32.xlu0 %v1660
    %v1662 = vpop.xlane.xlu0 %1661
    %v1663 = vadd.f32 %v1336, %v1337
    %1664 = vadd.xlane.f32.xlu0 %v1663
    %v1665 = vpop.xlane.xlu0 %1664
    %v1666 = vadd.f32 %v1338, %v1339
    %1667 = vadd.xlane.f32.xlu0 %v1666
    %v1668 = vpop.xlane.xlu0 %1667
    %v1669 = vadd.f32 %v1340, %v1341
    %1670 = vadd.xlane.f32.xlu0 %v1669
    %v1671 = vpop.xlane.xlu0 %1670
    %v1672 = vadd.f32 %v1342, %v1343
    %1673 = vadd.xlane.f32.xlu0 %v1672
    %v1674 = vpop.xlane.xlu0 %1673
    %v1675 = vadd.f32 %v1344, %v1345
    %1676 = vadd.xlane.f32.xlu0 %v1675
    %v1677 = vpop.xlane.xlu0 %1676
    %v1678 = vadd.f32 %v1346, %v1347
    %1679 = vadd.xlane.f32.xlu0 %v1678
    %v1680 = vpop.xlane.xlu0 %1679
    %v1681 = vadd.f32 %v1348, %v1349
    %1682 = vadd.xlane.f32.xlu0 %v1681
    %v1683 = vpop.xlane.xlu0 %1682
    %v1684 = vadd.f32 %v1350, %v1351
    %1685 = vadd.xlane.f32.xlu0 %v1684
    %v1686 = vpop.xlane.xlu0 %1685
    %v1687 = vadd.f32 %v1352, %v1353
    %1688 = vadd.xlane.f32.xlu0 %v1687
    %v1689 = vpop.xlane.xlu0 %1688
    %v1690 = vadd.f32 %v1354, %v1355
    %1691 = vadd.xlane.f32.xlu0 %v1690
    %v1692 = vpop.xlane.xlu0 %1691
    %v1693 = vadd.f32 %v1356, %v1357
    %1694 = vadd.xlane.f32.xlu0 %v1693
    %v1695 = vpop.xlane.xlu0 %1694
    %v1696 = vadd.f32 %v1358, %v1359
    %1697 = vadd.xlane.f32.xlu0 %v1696
    %v1698 = vpop.xlane.xlu0 %1697
    %v1699 = vadd.f32 %v1360, %v1361
    %1700 = vadd.xlane.f32.xlu0 %v1699
    %v1701 = vpop.xlane.xlu0 %1700
    %v1702 = vadd.f32 %v1362, %v1363
    %1703 = vadd.xlane.f32.xlu0 %v1702
    %v1704 = vpop.xlane.xlu0 %1703
    %v1705 = vadd.f32 %v1364, %v1365
    %1706 = vadd.xlane.f32.xlu0 %v1705
    %v1707 = vpop.xlane.xlu0 %1706
    %v1708 = vadd.f32 %v1366, %v1367
    %1709 = vadd.xlane.f32.xlu0 %v1708
    %v1710 = vpop.xlane.xlu0 %1709
    %v1711 = vadd.f32 %v1368, %v1369
    %1712 = vadd.xlane.f32.xlu0 %v1711
    %v1713 = vpop.xlane.xlu0 %1712
    %v1714 = vadd.f32 %v1370, %v1371
    %1715 = vadd.xlane.f32.xlu0 %v1714
    %v1716 = vpop.xlane.xlu0 %1715
    %v1717 = vadd.f32 %v1372, %v1373
    %1718 = vadd.xlane.f32.xlu0 %v1717
    %v1719 = vpop.xlane.xlu0 %1718
    %v1720 = vadd.f32 %v1374, %v1375
    %1721 = vadd.xlane.f32.xlu0 %v1720
    %v1722 = vpop.xlane.xlu0 %1721
    %v1723 = vadd.f32 %v1376, %v1377
    %1724 = vadd.xlane.f32.xlu0 %v1723
    %v1725 = vpop.xlane.xlu0 %1724
    %v1726 = vadd.f32 %v1378, %v1379
    %1727 = vadd.xlane.f32.xlu0 %v1726
    %v1728 = vpop.xlane.xlu0 %1727
    %v1729 = vadd.f32 %v1380, %v1381
    %1730 = vadd.xlane.f32.xlu0 %v1729
    %v1731 = vpop.xlane.xlu0 %1730
    %v1732 = vadd.f32 %v1382, %v1383
    %1733 = vadd.xlane.f32.xlu0 %v1732
    %v1734 = vpop.xlane.xlu0 %1733
    %v1735 = vadd.f32 %v1384, %v1385
    %1736 = vadd.xlane.f32.xlu0 %v1735
    %v1737 = vpop.xlane.xlu0 %1736
    %v1738 = vadd.f32 %v1386, %v1387
    %1739 = vadd.xlane.f32.xlu0 %v1738
    %v1740 = vpop.xlane.xlu0 %1739
    %v1741 = vadd.f32 %v1388, %v1389
    %1742 = vadd.xlane.f32.xlu0 %v1741
    %v1743 = vpop.xlane.xlu0 %1742
    %v1744 = vadd.f32 %v1390, %v1391
    %1745 = vadd.xlane.f32.xlu0 %v1744
    %v1746 = vpop.xlane.xlu0 %1745
    %v1747 = vadd.f32 %v1392, %v1393
    %1748 = vadd.xlane.f32.xlu0 %v1747
    %v1749 = vpop.xlane.xlu0 %1748
    %v1750 = vadd.f32 %v1394, %v1395
    %1751 = vadd.xlane.f32.xlu0 %v1750
    %v1752 = vpop.xlane.xlu0 %1751
    %v1753 = vadd.f32 %v1396, %v1397
    %1754 = vadd.xlane.f32.xlu0 %v1753
    %v1755 = vpop.xlane.xlu0 %1754
    %v1756 = vadd.f32 %v1398, %v1399
    %1757 = vadd.xlane.f32.xlu0 %v1756
    %v1758 = vpop.xlane.xlu0 %1757
    %v1759 = vadd.f32 %v1400, %v1401
    %1760 = vadd.xlane.f32.xlu0 %v1759
    %v1761 = vpop.xlane.xlu0 %1760
    %v1762 = vadd.f32 %v1402, %v1403
    %1763 = vadd.xlane.f32.xlu0 %v1762
    %v1764 = vpop.xlane.xlu0 %1763
    %v1765 = vadd.f32 %v1404, %v1405
    %1766 = vadd.xlane.f32.xlu0 %v1765
    %v1767 = vpop.xlane.xlu0 %1766
    %v1768 = vadd.f32 %v1406, %v1407
    %1769 = vadd.xlane.f32.xlu0 %v1768
    %v1770 = vpop.xlane.xlu0 %1769
    %v1771 = vadd.f32 %v1408, %v1409
    %1772 = vadd.xlane.f32.xlu0 %v1771
    %v1773 = vpop.xlane.xlu0 %1772
    %v1774 = vadd.f32 %v1410, %v1411
    %1775 = vadd.xlane.f32.xlu0 %v1774
    %v1776 = vpop.xlane.xlu0 %1775
    %v1777 = vadd.f32 %v1412, %v1413
    %1778 = vadd.xlane.f32.xlu0 %v1777
    %v1779 = vpop.xlane.xlu0 %1778
    %v1780 = vadd.f32 %v1414, %v1415
    %1781 = vadd.xlane.f32.xlu0 %v1780
    %v1782 = vpop.xlane.xlu0 %1781
    %v1783 = vadd.f32 %v1416, %v1417
    %1784 = vadd.xlane.f32.xlu0 %v1783
    %v1785 = vpop.xlane.xlu0 %1784
    %v1786 = vadd.f32 %v1418, %v1419
    %1787 = vadd.xlane.f32.xlu0 %v1786
    %v1788 = vpop.xlane.xlu0 %1787
    %v1789 = vadd.f32 %v1420, %v1421
    %1790 = vadd.xlane.f32.xlu0 %v1789
    %v1791 = vpop.xlane.xlu0 %1790
    %v1792 = vadd.f32 %v1422, %v1423
    %1793 = vadd.xlane.f32.xlu0 %v1792
    %v1794 = vpop.xlane.xlu0 %1793
    %v1795 = vadd.f32 %v1424, %v1425
    %1796 = vadd.xlane.f32.xlu0 %v1795
    %v1797 = vpop.xlane.xlu0 %1796
    %v1798 = vadd.f32 %v1426, %v1427
    %1799 = vadd.xlane.f32.xlu0 %v1798
    %v1800 = vpop.xlane.xlu0 %1799
    %v1801 = vadd.f32 %v1428, %v1429
    %1802 = vadd.xlane.f32.xlu0 %v1801
    %v1803 = vpop.xlane.xlu0 %1802
    %v1804 = vadd.f32 %v1430, %v1431
    %1805 = vadd.xlane.f32.xlu0 %v1804
    %v1806 = vpop.xlane.xlu0 %1805
    %v1807 = vadd.f32 %v1432, %v1433
    %1808 = vadd.xlane.f32.xlu0 %v1807
    %v1809 = vpop.xlane.xlu0 %1808
    %v1810 = vadd.f32 %v1434, %v1435
    %1811 = vadd.xlane.f32.xlu0 %v1810
    %v1812 = vpop.xlane.xlu0 %1811
    %v1813 = vadd.f32 %v1436, %v1437
    %1814 = vadd.xlane.f32.xlu0 %v1813
    %v1815 = vpop.xlane.xlu0 %1814
    %v1816 = vadd.f32 %v1438, %v1439
    %1817 = vadd.xlane.f32.xlu0 %v1816
    %v1818 = vpop.xlane.xlu0 %1817
    %v1819 = vadd.f32 %v1440, %v1441
    %1820 = vadd.xlane.f32.xlu0 %v1819
    %v1821 = vpop.xlane.xlu0 %1820
    %v1822 = vadd.f32 %v1442, %v1443
    %1823 = vadd.xlane.f32.xlu0 %v1822
    %v1824 = vpop.xlane.xlu0 %1823
    %v1825 = vadd.f32 %v1444, %v1445
    %1826 = vadd.xlane.f32.xlu0 %v1825
    %v1827 = vpop.xlane.xlu0 %1826
    %v1828 = vadd.f32 %v1446, %v1447
    %1829 = vadd.xlane.f32.xlu0 %v1828
    %v1830 = vpop.xlane.xlu0 %1829
    %v1831 = vadd.f32 %v1448, %v1449
    %1832 = vadd.xlane.f32.xlu0 %v1831
    %v1833 = vpop.xlane.xlu0 %1832
    %v1834 = vmul.f32 %v1452, %v809
    %v1835 = vmul.f32 %v1455, %v809
    %v1836 = vmul.f32 %v1458, %v809
    %v1837 = vmul.f32 %v1461, %v809
    %v1838 = vmul.f32 %v1464, %v809
    %v1839 = vmul.f32 %v1467, %v809
    %v1840 = vmul.f32 %v1470, %v809
    %v1841 = vmul.f32 %v1473, %v809
    %v1842 = vmul.f32 %v1476, %v809
    %v1843 = vmul.f32 %v1479, %v809
    %v1844 = vmul.f32 %v1482, %v809
    %v1845 = vmul.f32 %v1485, %v809
    %v1846 = vmul.f32 %v1488, %v809
    %v1847 = vmul.f32 %v1491, %v809
    %v1848 = vmul.f32 %v1494, %v809
    %v1849 = vmul.f32 %v1497, %v809
    %v1850 = vmul.f32 %v1500, %v809
    %v1851 = vmul.f32 %v1503, %v809
    %v1852 = vmul.f32 %v1506, %v809
    %v1853 = vmul.f32 %v1509, %v809
    %v1854 = vmul.f32 %v1512, %v809
    %v1855 = vmul.f32 %v1515, %v809
    %v1856 = vmul.f32 %v1518, %v809
    %v1857 = vmul.f32 %v1521, %v809
    %v1858 = vmul.f32 %v1524, %v809
    %v1859 = vmul.f32 %v1527, %v809
    %v1860 = vmul.f32 %v1530, %v809
    %v1861 = vmul.f32 %v1533, %v809
    %v1862 = vmul.f32 %v1536, %v809
    %v1863 = vmul.f32 %v1539, %v809
    %v1864 = vmul.f32 %v1542, %v809
    %v1865 = vmul.f32 %v1545, %v809
    %v1866 = vmul.f32 %v1548, %v809
    %v1867 = vmul.f32 %v1551, %v809
    %v1868 = vmul.f32 %v1554, %v809
    %v1869 = vmul.f32 %v1557, %v809
    %v1870 = vmul.f32 %v1560, %v809
    %v1871 = vmul.f32 %v1563, %v809
    %v1872 = vmul.f32 %v1566, %v809
    %v1873 = vmul.f32 %v1569, %v809
    %v1874 = vmul.f32 %v1572, %v809
    %v1875 = vmul.f32 %v1575, %v809
    %v1876 = vmul.f32 %v1578, %v809
    %v1877 = vmul.f32 %v1581, %v809
    %v1878 = vmul.f32 %v1584, %v809
    %v1879 = vmul.f32 %v1587, %v809
    %v1880 = vmul.f32 %v1590, %v809
    %v1881 = vmul.f32 %v1593, %v809
    %v1882 = vmul.f32 %v1596, %v809
    %v1883 = vmul.f32 %v1599, %v809
    %v1884 = vmul.f32 %v1602, %v809
    %v1885 = vmul.f32 %v1605, %v809
    %v1886 = vmul.f32 %v1608, %v809
    %v1887 = vmul.f32 %v1611, %v809
    %v1888 = vmul.f32 %v1614, %v809
    %v1889 = vmul.f32 %v1617, %v809
    %v1890 = vmul.f32 %v1620, %v809
    %v1891 = vmul.f32 %v1623, %v809
    %v1892 = vmul.f32 %v1626, %v809
    %v1893 = vmul.f32 %v1629, %v809
    %v1894 = vmul.f32 %v1632, %v809
    %v1895 = vmul.f32 %v1635, %v809
    %v1896 = vmul.f32 %v1638, %v809
    %v1897 = vmul.f32 %v1641, %v809
    %v1898 = vmul.f32 %v1644, %v809
    %v1899 = vmul.f32 %v1647, %v809
    %v1900 = vmul.f32 %v1650, %v809
    %v1901 = vmul.f32 %v1653, %v809
    %v1902 = vmul.f32 %v1656, %v809
    %v1903 = vmul.f32 %v1659, %v809
    %v1904 = vmul.f32 %v1662, %v809
    %v1905 = vmul.f32 %v1665, %v809
    %v1906 = vmul.f32 %v1668, %v809
    %v1907 = vmul.f32 %v1671, %v809
    %v1908 = vmul.f32 %v1674, %v809
    %v1909 = vmul.f32 %v1677, %v809
    %v1910 = vmul.f32 %v1680, %v809
    %v1911 = vmul.f32 %v1683, %v809
    %v1912 = vmul.f32 %v1686, %v809
    %v1913 = vmul.f32 %v1689, %v809
    %v1914 = vmul.f32 %v1692, %v809
    %v1915 = vmul.f32 %v1695, %v809
    %v1916 = vmul.f32 %v1698, %v809
    %v1917 = vmul.f32 %v1701, %v809
    %v1918 = vmul.f32 %v1704, %v809
    %v1919 = vmul.f32 %v1707, %v809
    %v1920 = vmul.f32 %v1710, %v809
    %v1921 = vmul.f32 %v1713, %v809
    %v1922 = vmul.f32 %v1716, %v809
    %v1923 = vmul.f32 %v1719, %v809
    %v1924 = vmul.f32 %v1722, %v809
    %v1925 = vmul.f32 %v1725, %v809
    %v1926 = vmul.f32 %v1728, %v809
    %v1927 = vmul.f32 %v1731, %v809
    %v1928 = vmul.f32 %v1734, %v809
    %v1929 = vmul.f32 %v1737, %v809
    %v1930 = vmul.f32 %v1740, %v809
    %v1931 = vmul.f32 %v1743, %v809
    %v1932 = vmul.f32 %v1746, %v809
    %v1933 = vmul.f32 %v1749, %v809
    %v1934 = vmul.f32 %v1752, %v809
    %v1935 = vmul.f32 %v1755, %v809
    %v1936 = vmul.f32 %v1758, %v809
    %v1937 = vmul.f32 %v1761, %v809
    %v1938 = vmul.f32 %v1764, %v809
    %v1939 = vmul.f32 %v1767, %v809
    %v1940 = vmul.f32 %v1770, %v809
    %v1941 = vmul.f32 %v1773, %v809
    %v1942 = vmul.f32 %v1776, %v809
    %v1943 = vmul.f32 %v1779, %v809
    %v1944 = vmul.f32 %v1782, %v809
    %v1945 = vmul.f32 %v1785, %v809
    %v1946 = vmul.f32 %v1788, %v809
    %v1947 = vmul.f32 %v1791, %v809
    %v1948 = vmul.f32 %v1794, %v809
    %v1949 = vmul.f32 %v1797, %v809
    %v1950 = vmul.f32 %v1800, %v809
    %v1951 = vmul.f32 %v1803, %v809
    %v1952 = vmul.f32 %v1806, %v809
    %v1953 = vmul.f32 %v1809, %v809
    %v1954 = vmul.f32 %v1812, %v809
    %v1955 = vmul.f32 %v1815, %v809
    %v1956 = vmul.f32 %v1818, %v809
    %v1957 = vmul.f32 %v1821, %v809
    %v1958 = vmul.f32 %v1824, %v809
    %v1959 = vmul.f32 %v1827, %v809
    %v1960 = vmul.f32 %v1830, %v809
    %v1961 = vmul.f32 %v1833, %v809
    %v1962 = vadd.f32 %v1834, 1e-05
    %v1963 = vadd.f32 %v1835, 1e-05
    %v1964 = vadd.f32 %v1836, 1e-05
    %v1965 = vadd.f32 %v1837, 1e-05
    %v1966 = vadd.f32 %v1838, 1e-05
    %v1967 = vadd.f32 %v1839, 1e-05
    %v1968 = vadd.f32 %v1840, 1e-05
    %v1969 = vadd.f32 %v1841, 1e-05
    %v1970 = vadd.f32 %v1842, 1e-05
    %v1971 = vadd.f32 %v1843, 1e-05
    %v1972 = vadd.f32 %v1844, 1e-05
    %v1973 = vadd.f32 %v1845, 1e-05
    %v1974 = vadd.f32 %v1846, 1e-05
    %v1975 = vadd.f32 %v1847, 1e-05
    %v1976 = vadd.f32 %v1848, 1e-05
    %v1977 = vadd.f32 %v1849, 1e-05
    %v1978 = vadd.f32 %v1850, 1e-05
    %v1979 = vadd.f32 %v1851, 1e-05
    %v1980 = vadd.f32 %v1852, 1e-05
    %v1981 = vadd.f32 %v1853, 1e-05
    %v1982 = vadd.f32 %v1854, 1e-05
    %v1983 = vadd.f32 %v1855, 1e-05
    %v1984 = vadd.f32 %v1856, 1e-05
    %v1985 = vadd.f32 %v1857, 1e-05
    %v1986 = vadd.f32 %v1858, 1e-05
    %v1987 = vadd.f32 %v1859, 1e-05
    %v1988 = vadd.f32 %v1860, 1e-05
    %v1989 = vadd.f32 %v1861, 1e-05
    %v1990 = vadd.f32 %v1862, 1e-05
    %v1991 = vadd.f32 %v1863, 1e-05
    %v1992 = vadd.f32 %v1864, 1e-05
    %v1993 = vadd.f32 %v1865, 1e-05
    %v1994 = vadd.f32 %v1866, 1e-05
    %v1995 = vadd.f32 %v1867, 1e-05
    %v1996 = vadd.f32 %v1868, 1e-05
    %v1997 = vadd.f32 %v1869, 1e-05
    %v1998 = vadd.f32 %v1870, 1e-05
    %v1999 = vadd.f32 %v1871, 1e-05
    %v2000 = vadd.f32 %v1872, 1e-05
    %v2001 = vadd.f32 %v1873, 1e-05
    %v2002 = vadd.f32 %v1874, 1e-05
    %v2003 = vadd.f32 %v1875, 1e-05
    %v2004 = vadd.f32 %v1876, 1e-05
    %v2005 = vadd.f32 %v1877, 1e-05
    %v2006 = vadd.f32 %v1878, 1e-05
    %v2007 = vadd.f32 %v1879, 1e-05
    %v2008 = vadd.f32 %v1880, 1e-05
    %v2009 = vadd.f32 %v1881, 1e-05
    %v2010 = vadd.f32 %v1882, 1e-05
    %v2011 = vadd.f32 %v1883, 1e-05
    %v2012 = vadd.f32 %v1884, 1e-05
    %v2013 = vadd.f32 %v1885, 1e-05
    %v2014 = vadd.f32 %v1886, 1e-05
    %v2015 = vadd.f32 %v1887, 1e-05
    %v2016 = vadd.f32 %v1888, 1e-05
    %v2017 = vadd.f32 %v1889, 1e-05
    %v2018 = vadd.f32 %v1890, 1e-05
    %v2019 = vadd.f32 %v1891, 1e-05
    %v2020 = vadd.f32 %v1892, 1e-05
    %v2021 = vadd.f32 %v1893, 1e-05
    %v2022 = vadd.f32 %v1894, 1e-05
    %v2023 = vadd.f32 %v1895, 1e-05
    %v2024 = vadd.f32 %v1896, 1e-05
    %v2025 = vadd.f32 %v1897, 1e-05
    %v2026 = vadd.f32 %v1898, 1e-05
    %v2027 = vadd.f32 %v1899, 1e-05
    %v2028 = vadd.f32 %v1900, 1e-05
    %v2029 = vadd.f32 %v1901, 1e-05
    %v2030 = vadd.f32 %v1902, 1e-05
    %v2031 = vadd.f32 %v1903, 1e-05
    %v2032 = vadd.f32 %v1904, 1e-05
    %v2033 = vadd.f32 %v1905, 1e-05
    %v2034 = vadd.f32 %v1906, 1e-05
    %v2035 = vadd.f32 %v1907, 1e-05
    %v2036 = vadd.f32 %v1908, 1e-05
    %v2037 = vadd.f32 %v1909, 1e-05
    %v2038 = vadd.f32 %v1910, 1e-05
    %v2039 = vadd.f32 %v1911, 1e-05
    %v2040 = vadd.f32 %v1912, 1e-05
    %v2041 = vadd.f32 %v1913, 1e-05
    %v2042 = vadd.f32 %v1914, 1e-05
    %v2043 = vadd.f32 %v1915, 1e-05
    %v2044 = vadd.f32 %v1916, 1e-05
    %v2045 = vadd.f32 %v1917, 1e-05
    %v2046 = vadd.f32 %v1918, 1e-05
    %v2047 = vadd.f32 %v1919, 1e-05
    %v2048 = vadd.f32 %v1920, 1e-05
    %v2049 = vadd.f32 %v1921, 1e-05
    %v2050 = vadd.f32 %v1922, 1e-05
    %v2051 = vadd.f32 %v1923, 1e-05
    %v2052 = vadd.f32 %v1924, 1e-05
    %v2053 = vadd.f32 %v1925, 1e-05
    %v2054 = vadd.f32 %v1926, 1e-05
    %v2055 = vadd.f32 %v1927, 1e-05
    %v2056 = vadd.f32 %v1928, 1e-05
    %v2057 = vadd.f32 %v1929, 1e-05
    %v2058 = vadd.f32 %v1930, 1e-05
    %v2059 = vadd.f32 %v1931, 1e-05
    %v2060 = vadd.f32 %v1932, 1e-05
    %v2061 = vadd.f32 %v1933, 1e-05
    %v2062 = vadd.f32 %v1934, 1e-05
    %v2063 = vadd.f32 %v1935, 1e-05
    %v2064 = vadd.f32 %v1936, 1e-05
    %v2065 = vadd.f32 %v1937, 1e-05
    %v2066 = vadd.f32 %v1938, 1e-05
    %v2067 = vadd.f32 %v1939, 1e-05
    %v2068 = vadd.f32 %v1940, 1e-05
    %v2069 = vadd.f32 %v1941, 1e-05
    %v2070 = vadd.f32 %v1942, 1e-05
    %v2071 = vadd.f32 %v1943, 1e-05
    %v2072 = vadd.f32 %v1944, 1e-05
    %v2073 = vadd.f32 %v1945, 1e-05
    %v2074 = vadd.f32 %v1946, 1e-05
    %v2075 = vadd.f32 %v1947, 1e-05
    %v2076 = vadd.f32 %v1948, 1e-05
    %v2077 = vadd.f32 %v1949, 1e-05
    %v2078 = vadd.f32 %v1950, 1e-05
    %v2079 = vadd.f32 %v1951, 1e-05
    %v2080 = vadd.f32 %v1952, 1e-05
    %v2081 = vadd.f32 %v1953, 1e-05
    %v2082 = vadd.f32 %v1954, 1e-05
    %v2083 = vadd.f32 %v1955, 1e-05
    %v2084 = vadd.f32 %v1956, 1e-05
    %v2085 = vadd.f32 %v1957, 1e-05
    %v2086 = vadd.f32 %v1958, 1e-05
    %v2087 = vadd.f32 %v1959, 1e-05
    %v2088 = vadd.f32 %v1960, 1e-05
    %v2089 = vadd.f32 %v1961, 1e-05
    %v2090 = vrsqrt.pop %v1962
    %v2091 = vrsqrt.pop %v1963
    %v2092 = vrsqrt.pop %v1964
    %v2093 = vrsqrt.pop %v1965
    %v2094 = vrsqrt.pop %v1966
    %v2095 = vrsqrt.pop %v1967
    %v2096 = vrsqrt.pop %v1968
    %v2097 = vrsqrt.pop %v1969
    %v2098 = vrsqrt.pop %v1970
    %v2099 = vrsqrt.pop %v1971
    %v2100 = vrsqrt.pop %v1972
    %v2101 = vrsqrt.pop %v1973
    %v2102 = vrsqrt.pop %v1974
    %v2103 = vrsqrt.pop %v1975
    %v2104 = vrsqrt.pop %v1976
    %v2105 = vrsqrt.pop %v1977
    %v2106 = vrsqrt.pop %v1978
    %v2107 = vrsqrt.pop %v1979
    %v2108 = vrsqrt.pop %v1980
    %v2109 = vrsqrt.pop %v1981
    %v2110 = vrsqrt.pop %v1982
    %v2111 = vrsqrt.pop %v1983
    %v2112 = vrsqrt.pop %v1984
    %v2113 = vrsqrt.pop %v1985
    %v2114 = vrsqrt.pop %v1986
    %v2115 = vrsqrt.pop %v1987
    %v2116 = vrsqrt.pop %v1988
    %v2117 = vrsqrt.pop %v1989
    %v2118 = vrsqrt.pop %v1990
    %v2119 = vrsqrt.pop %v1991
    %v2120 = vrsqrt.pop %v1992
    %v2121 = vrsqrt.pop %v1993
    %v2122 = vrsqrt.pop %v1994
    %v2123 = vrsqrt.pop %v1995
    %v2124 = vrsqrt.pop %v1996
    %v2125 = vrsqrt.pop %v1997
    %v2126 = vrsqrt.pop %v1998
    %v2127 = vrsqrt.pop %v1999
    %v2128 = vrsqrt.pop %v2000
    %v2129 = vrsqrt.pop %v2001
    %v2130 = vrsqrt.pop %v2002
    %v2131 = vrsqrt.pop %v2003
    %v2132 = vrsqrt.pop %v2004
    %v2133 = vrsqrt.pop %v2005
    %v2134 = vrsqrt.pop %v2006
    %v2135 = vrsqrt.pop %v2007
    %v2136 = vrsqrt.pop %v2008
    %v2137 = vrsqrt.pop %v2009
    %v2138 = vrsqrt.pop %v2010
    %v2139 = vrsqrt.pop %v2011
    %v2140 = vrsqrt.pop %v2012
    %v2141 = vrsqrt.pop %v2013
    %v2142 = vrsqrt.pop %v2014
    %v2143 = vrsqrt.pop %v2015
    %v2144 = vrsqrt.pop %v2016
    %v2145 = vrsqrt.pop %v2017
    %v2146 = vrsqrt.pop %v2018
    %v2147 = vrsqrt.pop %v2019
    %v2148 = vrsqrt.pop %v2020
    %v2149 = vrsqrt.pop %v2021
    %v2150 = vrsqrt.pop %v2022
    %v2151 = vrsqrt.pop %v2023
    %v2152 = vrsqrt.pop %v2024
    %v2153 = vrsqrt.pop %v2025
    %v2154 = vrsqrt.pop %v2026
    %v2155 = vrsqrt.pop %v2027
    %v2156 = vrsqrt.pop %v2028
    %v2157 = vrsqrt.pop %v2029
    %v2158 = vrsqrt.pop %v2030
    %v2159 = vrsqrt.pop %v2031
    %v2160 = vrsqrt.pop %v2032
    %v2161 = vrsqrt.pop %v2033
    %v2162 = vrsqrt.pop %v2034
    %v2163 = vrsqrt.pop %v2035
    %v2164 = vrsqrt.pop %v2036
    %v2165 = vrsqrt.pop %v2037
    %v2166 = vrsqrt.pop %v2038
    %v2167 = vrsqrt.pop %v2039
    %v2168 = vrsqrt.pop %v2040
    %v2169 = vrsqrt.pop %v2041
    %v2170 = vrsqrt.pop %v2042
    %v2171 = vrsqrt.pop %v2043
    %v2172 = vrsqrt.pop %v2044
    %v2173 = vrsqrt.pop %v2045
    %v2174 = vrsqrt.pop %v2046
    %v2175 = vrsqrt.pop %v2047
    %v2176 = vrsqrt.pop %v2048
    %v2177 = vrsqrt.pop %v2049
    %v2178 = vrsqrt.pop %v2050
    %v2179 = vrsqrt.pop %v2051
    %v2180 = vrsqrt.pop %v2052
    %v2181 = vrsqrt.pop %v2053
    %v2182 = vrsqrt.pop %v2054
    %v2183 = vrsqrt.pop %v2055
    %v2184 = vrsqrt.pop %v2056
    %v2185 = vrsqrt.pop %v2057
    %v2186 = vrsqrt.pop %v2058
    %v2187 = vrsqrt.pop %v2059
    %v2188 = vrsqrt.pop %v2060
    %v2189 = vrsqrt.pop %v2061
    %v2190 = vrsqrt.pop %v2062
    %v2191 = vrsqrt.pop %v2063
    %v2192 = vrsqrt.pop %v2064
    %v2193 = vrsqrt.pop %v2065
    %v2194 = vrsqrt.pop %v2066
    %v2195 = vrsqrt.pop %v2067
    %v2196 = vrsqrt.pop %v2068
    %v2197 = vrsqrt.pop %v2069
    %v2198 = vrsqrt.pop %v2070
    %v2199 = vrsqrt.pop %v2071
    %v2200 = vrsqrt.pop %v2072
    %v2201 = vrsqrt.pop %v2073
    %v2202 = vrsqrt.pop %v2074
    %v2203 = vrsqrt.pop %v2075
    %v2204 = vrsqrt.pop %v2076
    %v2205 = vrsqrt.pop %v2077
    %v2206 = vrsqrt.pop %v2078
    %v2207 = vrsqrt.pop %v2079
    %v2208 = vrsqrt.pop %v2080
    %v2209 = vrsqrt.pop %v2081
    %v2210 = vrsqrt.pop %v2082
    %v2211 = vrsqrt.pop %v2083
    %v2212 = vrsqrt.pop %v2084
    %v2213 = vrsqrt.pop %v2085
    %v2214 = vrsqrt.pop %v2086
    %v2215 = vrsqrt.pop %v2087
    %v2216 = vrsqrt.pop %v2088
    %v2217 = vrsqrt.pop %v2089
    %v2218 = vmul.f32 %v938, %v2090
    %v2219 = vmul.f32 %v939, %v2090
    %v2220 = vmul.f32 %v940, %v2091
    %v2221 = vmul.f32 %v941, %v2091
    %v2222 = vmul.f32 %v942, %v2092
    %v2223 = vmul.f32 %v943, %v2092
    %v2224 = vmul.f32 %v944, %v2093
    %v2225 = vmul.f32 %v945, %v2093
    %v2226 = vmul.f32 %v946, %v2094
    %v2227 = vmul.f32 %v947, %v2094
    %v2228 = vmul.f32 %v948, %v2095
    %v2229 = vmul.f32 %v949, %v2095
    %v2230 = vmul.f32 %v950, %v2096
    %v2231 = vmul.f32 %v951, %v2096
    %v2232 = vmul.f32 %v952, %v2097
    %v2233 = vmul.f32 %v953, %v2097
    %v2234 = vmul.f32 %v954, %v2098
    %v2235 = vmul.f32 %v955, %v2098
    %v2236 = vmul.f32 %v956, %v2099
    %v2237 = vmul.f32 %v957, %v2099
    %v2238 = vmul.f32 %v958, %v2100
    %v2239 = vmul.f32 %v959, %v2100
    %v2240 = vmul.f32 %v960, %v2101
    %v2241 = vmul.f32 %v961, %v2101
    %v2242 = vmul.f32 %v962, %v2102
    %v2243 = vmul.f32 %v963, %v2102
    %v2244 = vmul.f32 %v964, %v2103
    %v2245 = vmul.f32 %v965, %v2103
    %v2246 = vmul.f32 %v966, %v2104
    %v2247 = vmul.f32 %v967, %v2104
    %v2248 = vmul.f32 %v968, %v2105
    %v2249 = vmul.f32 %v969, %v2105
    %v2250 = vmul.f32 %v970, %v2106
    %v2251 = vmul.f32 %v971, %v2106
    %v2252 = vmul.f32 %v972, %v2107
    %v2253 = vmul.f32 %v973, %v2107
    %v2254 = vmul.f32 %v974, %v2108
    %v2255 = vmul.f32 %v975, %v2108
    %v2256 = vmul.f32 %v976, %v2109
    %v2257 = vmul.f32 %v977, %v2109
    %v2258 = vmul.f32 %v978, %v2110
    %v2259 = vmul.f32 %v979, %v2110
    %v2260 = vmul.f32 %v980, %v2111
    %v2261 = vmul.f32 %v981, %v2111
    %v2262 = vmul.f32 %v982, %v2112
    %v2263 = vmul.f32 %v983, %v2112
    %v2264 = vmul.f32 %v984, %v2113
    %v2265 = vmul.f32 %v985, %v2113
    %v2266 = vmul.f32 %v986, %v2114
    %v2267 = vmul.f32 %v987, %v2114
    %v2268 = vmul.f32 %v988, %v2115
    %v2269 = vmul.f32 %v989, %v2115
    %v2270 = vmul.f32 %v990, %v2116
    %v2271 = vmul.f32 %v991, %v2116
    %v2272 = vmul.f32 %v992, %v2117
    %v2273 = vmul.f32 %v993, %v2117
    %v2274 = vmul.f32 %v994, %v2118
    %v2275 = vmul.f32 %v995, %v2118
    %v2276 = vmul.f32 %v996, %v2119
    %v2277 = vmul.f32 %v997, %v2119
    %v2278 = vmul.f32 %v998, %v2120
    %v2279 = vmul.f32 %v999, %v2120
    %v2280 = vmul.f32 %v1000, %v2121
    %v2281 = vmul.f32 %v1001, %v2121
    %v2282 = vmul.f32 %v1002, %v2122
    %v2283 = vmul.f32 %v1003, %v2122
    %v2284 = vmul.f32 %v1004, %v2123
    %v2285 = vmul.f32 %v1005, %v2123
    %v2286 = vmul.f32 %v1006, %v2124
    %v2287 = vmul.f32 %v1007, %v2124
    %v2288 = vmul.f32 %v1008, %v2125
    %v2289 = vmul.f32 %v1009, %v2125
    %v2290 = vmul.f32 %v1010, %v2126
    %v2291 = vmul.f32 %v1011, %v2126
    %v2292 = vmul.f32 %v1012, %v2127
    %v2293 = vmul.f32 %v1013, %v2127
    %v2294 = vmul.f32 %v1014, %v2128
    %v2295 = vmul.f32 %v1015, %v2128
    %v2296 = vmul.f32 %v1016, %v2129
    %v2297 = vmul.f32 %v1017, %v2129
    %v2298 = vmul.f32 %v1018, %v2130
    %v2299 = vmul.f32 %v1019, %v2130
    %v2300 = vmul.f32 %v1020, %v2131
    %v2301 = vmul.f32 %v1021, %v2131
    %v2302 = vmul.f32 %v1022, %v2132
    %v2303 = vmul.f32 %v1023, %v2132
    %v2304 = vmul.f32 %v1024, %v2133
    %v2305 = vmul.f32 %v1025, %v2133
    %v2306 = vmul.f32 %v1026, %v2134
    %v2307 = vmul.f32 %v1027, %v2134
    %v2308 = vmul.f32 %v1028, %v2135
    %v2309 = vmul.f32 %v1029, %v2135
    %v2310 = vmul.f32 %v1030, %v2136
    %v2311 = vmul.f32 %v1031, %v2136
    %v2312 = vmul.f32 %v1032, %v2137
    %v2313 = vmul.f32 %v1033, %v2137
    %v2314 = vmul.f32 %v1034, %v2138
    %v2315 = vmul.f32 %v1035, %v2138
    %v2316 = vmul.f32 %v1036, %v2139
    %v2317 = vmul.f32 %v1037, %v2139
    %v2318 = vmul.f32 %v1038, %v2140
    %v2319 = vmul.f32 %v1039, %v2140
    %v2320 = vmul.f32 %v1040, %v2141
    %v2321 = vmul.f32 %v1041, %v2141
    %v2322 = vmul.f32 %v1042, %v2142
    %v2323 = vmul.f32 %v1043, %v2142
    %v2324 = vmul.f32 %v1044, %v2143
    %v2325 = vmul.f32 %v1045, %v2143
    %v2326 = vmul.f32 %v1046, %v2144
    %v2327 = vmul.f32 %v1047, %v2144
    %v2328 = vmul.f32 %v1048, %v2145
    %v2329 = vmul.f32 %v1049, %v2145
    %v2330 = vmul.f32 %v1050, %v2146
    %v2331 = vmul.f32 %v1051, %v2146
    %v2332 = vmul.f32 %v1052, %v2147
    %v2333 = vmul.f32 %v1053, %v2147
    %v2334 = vmul.f32 %v1054, %v2148
    %v2335 = vmul.f32 %v1055, %v2148
    %v2336 = vmul.f32 %v1056, %v2149
    %v2337 = vmul.f32 %v1057, %v2149
    %v2338 = vmul.f32 %v1058, %v2150
    %v2339 = vmul.f32 %v1059, %v2150
    %v2340 = vmul.f32 %v1060, %v2151
    %v2341 = vmul.f32 %v1061, %v2151
    %v2342 = vmul.f32 %v1062, %v2152
    %v2343 = vmul.f32 %v1063, %v2152
    %v2344 = vmul.f32 %v1064, %v2153
    %v2345 = vmul.f32 %v1065, %v2153
    %v2346 = vmul.f32 %v1066, %v2154
    %v2347 = vmul.f32 %v1067, %v2154
    %v2348 = vmul.f32 %v1068, %v2155
    %v2349 = vmul.f32 %v1069, %v2155
    %v2350 = vmul.f32 %v1070, %v2156
    %v2351 = vmul.f32 %v1071, %v2156
    %v2352 = vmul.f32 %v1072, %v2157
    %v2353 = vmul.f32 %v1073, %v2157
    %v2354 = vmul.f32 %v1074, %v2158
    %v2355 = vmul.f32 %v1075, %v2158
    %v2356 = vmul.f32 %v1076, %v2159
    %v2357 = vmul.f32 %v1077, %v2159
    %v2358 = vmul.f32 %v1078, %v2160
    %v2359 = vmul.f32 %v1079, %v2160
    %v2360 = vmul.f32 %v1080, %v2161
    %v2361 = vmul.f32 %v1081, %v2161
    %v2362 = vmul.f32 %v1082, %v2162
    %v2363 = vmul.f32 %v1083, %v2162
    %v2364 = vmul.f32 %v1084, %v2163
    %v2365 = vmul.f32 %v1085, %v2163
    %v2366 = vmul.f32 %v1086, %v2164
    %v2367 = vmul.f32 %v1087, %v2164
    %v2368 = vmul.f32 %v1088, %v2165
    %v2369 = vmul.f32 %v1089, %v2165
    %v2370 = vmul.f32 %v1090, %v2166
    %v2371 = vmul.f32 %v1091, %v2166
    %v2372 = vmul.f32 %v1092, %v2167
    %v2373 = vmul.f32 %v1093, %v2167
    %v2374 = vmul.f32 %v1094, %v2168
    %v2375 = vmul.f32 %v1095, %v2168
    %v2376 = vmul.f32 %v1096, %v2169
    %v2377 = vmul.f32 %v1097, %v2169
    %v2378 = vmul.f32 %v1098, %v2170
    %v2379 = vmul.f32 %v1099, %v2170
    %v2380 = vmul.f32 %v1100, %v2171
    %v2381 = vmul.f32 %v1101, %v2171
    %v2382 = vmul.f32 %v1102, %v2172
    %v2383 = vmul.f32 %v1103, %v2172
    %v2384 = vmul.f32 %v1104, %v2173
    %v2385 = vmul.f32 %v1105, %v2173
    %v2386 = vmul.f32 %v1106, %v2174
    %v2387 = vmul.f32 %v1107, %v2174
    %v2388 = vmul.f32 %v1108, %v2175
    %v2389 = vmul.f32 %v1109, %v2175
    %v2390 = vmul.f32 %v1110, %v2176
    %v2391 = vmul.f32 %v1111, %v2176
    %v2392 = vmul.f32 %v1112, %v2177
    %v2393 = vmul.f32 %v1113, %v2177
    %v2394 = vmul.f32 %v1114, %v2178
    %v2395 = vmul.f32 %v1115, %v2178
    %v2396 = vmul.f32 %v1116, %v2179
    %v2397 = vmul.f32 %v1117, %v2179
    %v2398 = vmul.f32 %v1118, %v2180
    %v2399 = vmul.f32 %v1119, %v2180
    %v2400 = vmul.f32 %v1120, %v2181
    %v2401 = vmul.f32 %v1121, %v2181
    %v2402 = vmul.f32 %v1122, %v2182
    %v2403 = vmul.f32 %v1123, %v2182
    %v2404 = vmul.f32 %v1124, %v2183
    %v2405 = vmul.f32 %v1125, %v2183
    %v2406 = vmul.f32 %v1126, %v2184
    %v2407 = vmul.f32 %v1127, %v2184
    %v2408 = vmul.f32 %v1128, %v2185
    %v2409 = vmul.f32 %v1129, %v2185
    %v2410 = vmul.f32 %v1130, %v2186
    %v2411 = vmul.f32 %v1131, %v2186
    %v2412 = vmul.f32 %v1132, %v2187
    %v2413 = vmul.f32 %v1133, %v2187
    %v2414 = vmul.f32 %v1134, %v2188
    %v2415 = vmul.f32 %v1135, %v2188
    %v2416 = vmul.f32 %v1136, %v2189
    %v2417 = vmul.f32 %v1137, %v2189
    %v2418 = vmul.f32 %v1138, %v2190
    %v2419 = vmul.f32 %v1139, %v2190
    %v2420 = vmul.f32 %v1140, %v2191
    %v2421 = vmul.f32 %v1141, %v2191
    %v2422 = vmul.f32 %v1142, %v2192
    %v2423 = vmul.f32 %v1143, %v2192
    %v2424 = vmul.f32 %v1144, %v2193
    %v2425 = vmul.f32 %v1145, %v2193
    %v2426 = vmul.f32 %v1146, %v2194
    %v2427 = vmul.f32 %v1147, %v2194
    %v2428 = vmul.f32 %v1148, %v2195
    %v2429 = vmul.f32 %v1149, %v2195
    %v2430 = vmul.f32 %v1150, %v2196
    %v2431 = vmul.f32 %v1151, %v2196
    %v2432 = vmul.f32 %v1152, %v2197
    %v2433 = vmul.f32 %v1153, %v2197
    %v2434 = vmul.f32 %v1154, %v2198
    %v2435 = vmul.f32 %v1155, %v2198
    %v2436 = vmul.f32 %v1156, %v2199
    %v2437 = vmul.f32 %v1157, %v2199
    %v2438 = vmul.f32 %v1158, %v2200
    %v2439 = vmul.f32 %v1159, %v2200
    %v2440 = vmul.f32 %v1160, %v2201
    %v2441 = vmul.f32 %v1161, %v2201
    %v2442 = vmul.f32 %v1162, %v2202
    %v2443 = vmul.f32 %v1163, %v2202
    %v2444 = vmul.f32 %v1164, %v2203
    %v2445 = vmul.f32 %v1165, %v2203
    %v2446 = vmul.f32 %v1166, %v2204
    %v2447 = vmul.f32 %v1167, %v2204
    %v2448 = vmul.f32 %v1168, %v2205
    %v2449 = vmul.f32 %v1169, %v2205
    %v2450 = vmul.f32 %v1170, %v2206
    %v2451 = vmul.f32 %v1171, %v2206
    %v2452 = vmul.f32 %v1172, %v2207
    %v2453 = vmul.f32 %v1173, %v2207
    %v2454 = vmul.f32 %v1174, %v2208
    %v2455 = vmul.f32 %v1175, %v2208
    %v2456 = vmul.f32 %v1176, %v2209
    %v2457 = vmul.f32 %v1177, %v2209
    %v2458 = vmul.f32 %v1178, %v2210
    %v2459 = vmul.f32 %v1179, %v2210
    %v2460 = vmul.f32 %v1180, %v2211
    %v2461 = vmul.f32 %v1181, %v2211
    %v2462 = vmul.f32 %v1182, %v2212
    %v2463 = vmul.f32 %v1183, %v2212
    %v2464 = vmul.f32 %v1184, %v2213
    %v2465 = vmul.f32 %v1185, %v2213
    %v2466 = vmul.f32 %v1186, %v2214
    %v2467 = vmul.f32 %v1187, %v2214
    %v2468 = vmul.f32 %v1188, %v2215
    %v2469 = vmul.f32 %v1189, %v2215
    %v2470 = vmul.f32 %v1190, %v2216
    %v2471 = vmul.f32 %v1191, %v2216
    %v2472 = vmul.f32 %v1192, %v2217
    %v2473 = vmul.f32 %v1193, %v2217
    %v2474 = vld [vmem:[#allocation5] sm:$0x3]
    %v2476 = vlaneseq
    %v2477 = vshrl.u32 %v2476, 7
    %v2478 = vsub.s32 0, %v2477
    %v2479 = vrot.slane %v2474, %v2478
    %v2480 = vlaneseq
    %v2481 = vshrl.u32 %v2480, 7
    %v2482 = vsub.s32 1, %v2481
    %v2483 = vrot.slane %v2474, %v2482
    %v2486 = vmul.f32 %v2218, %v2479
    %v2487 = vmul.f32 %v2219, %v2483
    %v2488 = vmul.f32 %v2220, %v2479
    %v2489 = vmul.f32 %v2221, %v2483
    %v2490 = vmul.f32 %v2222, %v2479
    %v2491 = vmul.f32 %v2223, %v2483
    %v2492 = vmul.f32 %v2224, %v2479
    %v2493 = vmul.f32 %v2225, %v2483
    %v2494 = vmul.f32 %v2226, %v2479
    %v2495 = vmul.f32 %v2227, %v2483
    %v2496 = vmul.f32 %v2228, %v2479
    %v2497 = vmul.f32 %v2229, %v2483
    %v2498 = vmul.f32 %v2230, %v2479
    %v2499 = vmul.f32 %v2231, %v2483
    %v2500 = vmul.f32 %v2232, %v2479
    %v2501 = vmul.f32 %v2233, %v2483
    %v2502 = vmul.f32 %v2234, %v2479
    %v2503 = vmul.f32 %v2235, %v2483
    %v2504 = vmul.f32 %v2236, %v2479
    %v2505 = vmul.f32 %v2237, %v2483
    %v2506 = vmul.f32 %v2238, %v2479
    %v2507 = vmul.f32 %v2239, %v2483
    %v2508 = vmul.f32 %v2240, %v2479
    %v2509 = vmul.f32 %v2241, %v2483
    %v2510 = vmul.f32 %v2242, %v2479
    %v2511 = vmul.f32 %v2243, %v2483
    %v2512 = vmul.f32 %v2244, %v2479
    %v2513 = vmul.f32 %v2245, %v2483
    %v2514 = vmul.f32 %v2246, %v2479
    %v2515 = vmul.f32 %v2247, %v2483
    %v2516 = vmul.f32 %v2248, %v2479
    %v2517 = vmul.f32 %v2249, %v2483
    %v2518 = vmul.f32 %v2250, %v2479
    %v2519 = vmul.f32 %v2251, %v2483
    %v2520 = vmul.f32 %v2252, %v2479
    %v2521 = vmul.f32 %v2253, %v2483
    %v2522 = vmul.f32 %v2254, %v2479
    %v2523 = vmul.f32 %v2255, %v2483
    %v2524 = vmul.f32 %v2256, %v2479
    %v2525 = vmul.f32 %v2257, %v2483
    %v2526 = vmul.f32 %v2258, %v2479
    %v2527 = vmul.f32 %v2259, %v2483
    %v2528 = vmul.f32 %v2260, %v2479
    %v2529 = vmul.f32 %v2261, %v2483
    %v2530 = vmul.f32 %v2262, %v2479
    %v2531 = vmul.f32 %v2263, %v2483
    %v2532 = vmul.f32 %v2264, %v2479
    %v2533 = vmul.f32 %v2265, %v2483
    %v2534 = vmul.f32 %v2266, %v2479
    %v2535 = vmul.f32 %v2267, %v2483
    %v2536 = vmul.f32 %v2268, %v2479
    %v2537 = vmul.f32 %v2269, %v2483
    %v2538 = vmul.f32 %v2270, %v2479
    %v2539 = vmul.f32 %v2271, %v2483
    %v2540 = vmul.f32 %v2272, %v2479
    %v2541 = vmul.f32 %v2273, %v2483
    %v2542 = vmul.f32 %v2274, %v2479
    %v2543 = vmul.f32 %v2275, %v2483
    %v2544 = vmul.f32 %v2276, %v2479
    %v2545 = vmul.f32 %v2277, %v2483
    %v2546 = vmul.f32 %v2278, %v2479
    %v2547 = vmul.f32 %v2279, %v2483
    %v2548 = vmul.f32 %v2280, %v2479
    %v2549 = vmul.f32 %v2281, %v2483
    %v2550 = vmul.f32 %v2282, %v2479
    %v2551 = vmul.f32 %v2283, %v2483
    %v2552 = vmul.f32 %v2284, %v2479
    %v2553 = vmul.f32 %v2285, %v2483
    %v2554 = vmul.f32 %v2286, %v2479
    %v2555 = vmul.f32 %v2287, %v2483
    %v2556 = vmul.f32 %v2288, %v2479
    %v2557 = vmul.f32 %v2289, %v2483
    %v2558 = vmul.f32 %v2290, %v2479
    %v2559 = vmul.f32 %v2291, %v2483
    %v2560 = vmul.f32 %v2292, %v2479
    %v2561 = vmul.f32 %v2293, %v2483
    %v2562 = vmul.f32 %v2294, %v2479
    %v2563 = vmul.f32 %v2295, %v2483
    %v2564 = vmul.f32 %v2296, %v2479
    %v2565 = vmul.f32 %v2297, %v2483
    %v2566 = vmul.f32 %v2298, %v2479
    %v2567 = vmul.f32 %v2299, %v2483
    %v2568 = vmul.f32 %v2300, %v2479
    %v2569 = vmul.f32 %v2301, %v2483
    %v2570 = vmul.f32 %v2302, %v2479
    %v2571 = vmul.f32 %v2303, %v2483
    %v2572 = vmul.f32 %v2304, %v2479
    %v2573 = vmul.f32 %v2305, %v2483
    %v2574 = vmul.f32 %v2306, %v2479
    %v2575 = vmul.f32 %v2307, %v2483
    %v2576 = vmul.f32 %v2308, %v2479
    %v2577 = vmul.f32 %v2309, %v2483
    %v2578 = vmul.f32 %v2310, %v2479
    %v2579 = vmul.f32 %v2311, %v2483
    %v2580 = vmul.f32 %v2312, %v2479
    %v2581 = vmul.f32 %v2313, %v2483
    %v2582 = vmul.f32 %v2314, %v2479
    %v2583 = vmul.f32 %v2315, %v2483
    %v2584 = vmul.f32 %v2316, %v2479
    %v2585 = vmul.f32 %v2317, %v2483
    %v2586 = vmul.f32 %v2318, %v2479
    %v2587 = vmul.f32 %v2319, %v2483
    %v2588 = vmul.f32 %v2320, %v2479
    %v2589 = vmul.f32 %v2321, %v2483
    %v2590 = vmul.f32 %v2322, %v2479
    %v2591 = vmul.f32 %v2323, %v2483
    %v2592 = vmul.f32 %v2324, %v2479
    %v2593 = vmul.f32 %v2325, %v2483
    %v2594 = vmul.f32 %v2326, %v2479
    %v2595 = vmul.f32 %v2327, %v2483
    %v2596 = vmul.f32 %v2328, %v2479
    %v2597 = vmul.f32 %v2329, %v2483
    %v2598 = vmul.f32 %v2330, %v2479
    %v2599 = vmul.f32 %v2331, %v2483
    %v2600 = vmul.f32 %v2332, %v2479
    %v2601 = vmul.f32 %v2333, %v2483
    %v2602 = vmul.f32 %v2334, %v2479
    %v2603 = vmul.f32 %v2335, %v2483
    %v2604 = vmul.f32 %v2336, %v2479
    %v2605 = vmul.f32 %v2337, %v2483
    %v2606 = vmul.f32 %v2338, %v2479
    %v2607 = vmul.f32 %v2339, %v2483
    %v2608 = vmul.f32 %v2340, %v2479
    %v2609 = vmul.f32 %v2341, %v2483
    %v2610 = vmul.f32 %v2342, %v2479
    %v2611 = vmul.f32 %v2343, %v2483
    %v2612 = vmul.f32 %v2344, %v2479
    %v2613 = vmul.f32 %v2345, %v2483
    %v2614 = vmul.f32 %v2346, %v2479
    %v2615 = vmul.f32 %v2347, %v2483
    %v2616 = vmul.f32 %v2348, %v2479
    %v2617 = vmul.f32 %v2349, %v2483
    %v2618 = vmul.f32 %v2350, %v2479
    %v2619 = vmul.f32 %v2351, %v2483
    %v2620 = vmul.f32 %v2352, %v2479
    %v2621 = vmul.f32 %v2353, %v2483
    %v2622 = vmul.f32 %v2354, %v2479
    %v2623 = vmul.f32 %v2355, %v2483
    %v2624 = vmul.f32 %v2356, %v2479
    %v2625 = vmul.f32 %v2357, %v2483
    %v2626 = vmul.f32 %v2358, %v2479
    %v2627 = vmul.f32 %v2359, %v2483
    %v2628 = vmul.f32 %v2360, %v2479
    %v2629 = vmul.f32 %v2361, %v2483
    %v2630 = vmul.f32 %v2362, %v2479
    %v2631 = vmul.f32 %v2363, %v2483
    %v2632 = vmul.f32 %v2364, %v2479
    %v2633 = vmul.f32 %v2365, %v2483
    %v2634 = vmul.f32 %v2366, %v2479
    %v2635 = vmul.f32 %v2367, %v2483
    %v2636 = vmul.f32 %v2368, %v2479
    %v2637 = vmul.f32 %v2369, %v2483
    %v2638 = vmul.f32 %v2370, %v2479
    %v2639 = vmul.f32 %v2371, %v2483
    %v2640 = vmul.f32 %v2372, %v2479
    %v2641 = vmul.f32 %v2373, %v2483
    %v2642 = vmul.f32 %v2374, %v2479
    %v2643 = vmul.f32 %v2375, %v2483
    %v2644 = vmul.f32 %v2376, %v2479
    %v2645 = vmul.f32 %v2377, %v2483
    %v2646 = vmul.f32 %v2378, %v2479
    %v2647 = vmul.f32 %v2379, %v2483
    %v2648 = vmul.f32 %v2380, %v2479
    %v2649 = vmul.f32 %v2381, %v2483
    %v2650 = vmul.f32 %v2382, %v2479
    %v2651 = vmul.f32 %v2383, %v2483
    %v2652 = vmul.f32 %v2384, %v2479
    %v2653 = vmul.f32 %v2385, %v2483
    %v2654 = vmul.f32 %v2386, %v2479
    %v2655 = vmul.f32 %v2387, %v2483
    %v2656 = vmul.f32 %v2388, %v2479
    %v2657 = vmul.f32 %v2389, %v2483
    %v2658 = vmul.f32 %v2390, %v2479
    %v2659 = vmul.f32 %v2391, %v2483
    %v2660 = vmul.f32 %v2392, %v2479
    %v2661 = vmul.f32 %v2393, %v2483
    %v2662 = vmul.f32 %v2394, %v2479
    %v2663 = vmul.f32 %v2395, %v2483
    %v2664 = vmul.f32 %v2396, %v2479
    %v2665 = vmul.f32 %v2397, %v2483
    %v2666 = vmul.f32 %v2398, %v2479
    %v2667 = vmul.f32 %v2399, %v2483
    %v2668 = vmul.f32 %v2400, %v2479
    %v2669 = vmul.f32 %v2401, %v2483
    %v2670 = vmul.f32 %v2402, %v2479
    %v2671 = vmul.f32 %v2403, %v2483
    %v2672 = vmul.f32 %v2404, %v2479
    %v2673 = vmul.f32 %v2405, %v2483
    %v2674 = vmul.f32 %v2406, %v2479
    %v2675 = vmul.f32 %v2407, %v2483
    %v2676 = vmul.f32 %v2408, %v2479
    %v2677 = vmul.f32 %v2409, %v2483
    %v2678 = vmul.f32 %v2410, %v2479
    %v2679 = vmul.f32 %v2411, %v2483
    %v2680 = vmul.f32 %v2412, %v2479
    %v2681 = vmul.f32 %v2413, %v2483
    %v2682 = vmul.f32 %v2414, %v2479
    %v2683 = vmul.f32 %v2415, %v2483
    %v2684 = vmul.f32 %v2416, %v2479
    %v2685 = vmul.f32 %v2417, %v2483
    %v2686 = vmul.f32 %v2418, %v2479
    %v2687 = vmul.f32 %v2419, %v2483
    %v2688 = vmul.f32 %v2420, %v2479
    %v2689 = vmul.f32 %v2421, %v2483
    %v2690 = vmul.f32 %v2422, %v2479
    %v2691 = vmul.f32 %v2423, %v2483
    %v2692 = vmul.f32 %v2424, %v2479
    %v2693 = vmul.f32 %v2425, %v2483
    %v2694 = vmul.f32 %v2426, %v2479
    %v2695 = vmul.f32 %v2427, %v2483
    %v2696 = vmul.f32 %v2428, %v2479
    %v2697 = vmul.f32 %v2429, %v2483
    %v2698 = vmul.f32 %v2430, %v2479
    %v2699 = vmul.f32 %v2431, %v2483
    %v2700 = vmul.f32 %v2432, %v2479
    %v2701 = vmul.f32 %v2433, %v2483
    %v2702 = vmul.f32 %v2434, %v2479
    %v2703 = vmul.f32 %v2435, %v2483
    %v2704 = vmul.f32 %v2436, %v2479
    %v2705 = vmul.f32 %v2437, %v2483
    %v2706 = vmul.f32 %v2438, %v2479
    %v2707 = vmul.f32 %v2439, %v2483
    %v2708 = vmul.f32 %v2440, %v2479
    %v2709 = vmul.f32 %v2441, %v2483
    %v2710 = vmul.f32 %v2442, %v2479
    %v2711 = vmul.f32 %v2443, %v2483
    %v2712 = vmul.f32 %v2444, %v2479
    %v2713 = vmul.f32 %v2445, %v2483
    %v2714 = vmul.f32 %v2446, %v2479
    %v2715 = vmul.f32 %v2447, %v2483
    %v2716 = vmul.f32 %v2448, %v2479
    %v2717 = vmul.f32 %v2449, %v2483
    %v2718 = vmul.f32 %v2450, %v2479
    %v2719 = vmul.f32 %v2451, %v2483
    %v2720 = vmul.f32 %v2452, %v2479
    %v2721 = vmul.f32 %v2453, %v2483
    %v2722 = vmul.f32 %v2454, %v2479
    %v2723 = vmul.f32 %v2455, %v2483
    %v2724 = vmul.f32 %v2456, %v2479
    %v2725 = vmul.f32 %v2457, %v2483
    %v2726 = vmul.f32 %v2458, %v2479
    %v2727 = vmul.f32 %v2459, %v2483
    %v2728 = vmul.f32 %v2460, %v2479
    %v2729 = vmul.f32 %v2461, %v2483
    %v2730 = vmul.f32 %v2462, %v2479
    %v2731 = vmul.f32 %v2463, %v2483
    %v2732 = vmul.f32 %v2464, %v2479
    %v2733 = vmul.f32 %v2465, %v2483
    %v2734 = vmul.f32 %v2466, %v2479
    %v2735 = vmul.f32 %v2467, %v2483
    %v2736 = vmul.f32 %v2468, %v2479
    %v2737 = vmul.f32 %v2469, %v2483
    %v2738 = vmul.f32 %v2470, %v2479
    %v2739 = vmul.f32 %v2471, %v2483
    %v2740 = vmul.f32 %v2472, %v2479
    %v2741 = vmul.f32 %v2473, %v2483
    %v2742 = vld [vmem:[%s2] sm:$0x3]
    %v2744 = vlaneseq
    %v2745 = vshrl.u32 %v2744, 7
    %v2746 = vsub.s32 0, %v2745
    %v2747 = vrot.slane %v2742, %v2746
    %v2748 = vlaneseq
    %v2749 = vshrl.u32 %v2748, 7
    %v2750 = vsub.s32 1, %v2749
    %v2751 = vrot.slane %v2742, %v2750
    %v2754 = vadd.f32 %v2486, %v2747
    %v2755 = vadd.f32 %v2487, %v2751
    %v2756 = vadd.f32 %v2488, %v2747
    %v2757 = vadd.f32 %v2489, %v2751
    %v2758 = vadd.f32 %v2490, %v2747
    %v2759 = vadd.f32 %v2491, %v2751
    %v2760 = vadd.f32 %v2492, %v2747
    %v2761 = vadd.f32 %v2493, %v2751
    %v2762 = vadd.f32 %v2494, %v2747
    %v2763 = vadd.f32 %v2495, %v2751
    %v2764 = vadd.f32 %v2496, %v2747
    %v2765 = vadd.f32 %v2497, %v2751
    %v2766 = vadd.f32 %v2498, %v2747
    %v2767 = vadd.f32 %v2499, %v2751
    %v2768 = vadd.f32 %v2500, %v2747
    %v2769 = vadd.f32 %v2501, %v2751
    %v2770 = vadd.f32 %v2502, %v2747
    %v2771 = vadd.f32 %v2503, %v2751
    %v2772 = vadd.f32 %v2504, %v2747
    %v2773 = vadd.f32 %v2505, %v2751
    %v2774 = vadd.f32 %v2506, %v2747
    %v2775 = vadd.f32 %v2507, %v2751
    %v2776 = vadd.f32 %v2508, %v2747
    %v2777 = vadd.f32 %v2509, %v2751
    %v2778 = vadd.f32 %v2510, %v2747
    %v2779 = vadd.f32 %v2511, %v2751
    %v2780 = vadd.f32 %v2512, %v2747
    %v2781 = vadd.f32 %v2513, %v2751
    %v2782 = vadd.f32 %v2514, %v2747
    %v2783 = vadd.f32 %v2515, %v2751
    %v2784 = vadd.f32 %v2516, %v2747
    %v2785 = vadd.f32 %v2517, %v2751
    %v2786 = vadd.f32 %v2518, %v2747
    %v2787 = vadd.f32 %v2519, %v2751
    %v2788 = vadd.f32 %v2520, %v2747
    %v2789 = vadd.f32 %v2521, %v2751
    %v2790 = vadd.f32 %v2522, %v2747
    %v2791 = vadd.f32 %v2523, %v2751
    %v2792 = vadd.f32 %v2524, %v2747
    %v2793 = vadd.f32 %v2525, %v2751
    %v2794 = vadd.f32 %v2526, %v2747
    %v2795 = vadd.f32 %v2527, %v2751
    %v2796 = vadd.f32 %v2528, %v2747
    %v2797 = vadd.f32 %v2529, %v2751
    %v2798 = vadd.f32 %v2530, %v2747
    %v2799 = vadd.f32 %v2531, %v2751
    %v2800 = vadd.f32 %v2532, %v2747
    %v2801 = vadd.f32 %v2533, %v2751
    %v2802 = vadd.f32 %v2534, %v2747
    %v2803 = vadd.f32 %v2535, %v2751
    %v2804 = vadd.f32 %v2536, %v2747
    %v2805 = vadd.f32 %v2537, %v2751
    %v2806 = vadd.f32 %v2538, %v2747
    %v2807 = vadd.f32 %v2539, %v2751
    %v2808 = vadd.f32 %v2540, %v2747
    %v2809 = vadd.f32 %v2541, %v2751
    %v2810 = vadd.f32 %v2542, %v2747
    %v2811 = vadd.f32 %v2543, %v2751
    %v2812 = vadd.f32 %v2544, %v2747
    %v2813 = vadd.f32 %v2545, %v2751
    %v2814 = vadd.f32 %v2546, %v2747
    %v2815 = vadd.f32 %v2547, %v2751
    %v2816 = vadd.f32 %v2548, %v2747
    %v2817 = vadd.f32 %v2549, %v2751
    %v2818 = vadd.f32 %v2550, %v2747
    %v2819 = vadd.f32 %v2551, %v2751
    %v2820 = vadd.f32 %v2552, %v2747
    %v2821 = vadd.f32 %v2553, %v2751
    %v2822 = vadd.f32 %v2554, %v2747
    %v2823 = vadd.f32 %v2555, %v2751
    %v2824 = vadd.f32 %v2556, %v2747
    %v2825 = vadd.f32 %v2557, %v2751
    %v2826 = vadd.f32 %v2558, %v2747
    %v2827 = vadd.f32 %v2559, %v2751
    %v2828 = vadd.f32 %v2560, %v2747
    %v2829 = vadd.f32 %v2561, %v2751
    %v2830 = vadd.f32 %v2562, %v2747
    %v2831 = vadd.f32 %v2563, %v2751
    %v2832 = vadd.f32 %v2564, %v2747
    %v2833 = vadd.f32 %v2565, %v2751
    %v2834 = vadd.f32 %v2566, %v2747
    %v2835 = vadd.f32 %v2567, %v2751
    %v2836 = vadd.f32 %v2568, %v2747
    %v2837 = vadd.f32 %v2569, %v2751
    %v2838 = vadd.f32 %v2570, %v2747
    %v2839 = vadd.f32 %v2571, %v2751
    %v2840 = vadd.f32 %v2572, %v2747
    %v2841 = vadd.f32 %v2573, %v2751
    %v2842 = vadd.f32 %v2574, %v2747
    %v2843 = vadd.f32 %v2575, %v2751
    %v2844 = vadd.f32 %v2576, %v2747
    %v2845 = vadd.f32 %v2577, %v2751
    %v2846 = vadd.f32 %v2578, %v2747
    %v2847 = vadd.f32 %v2579, %v2751
    %v2848 = vadd.f32 %v2580, %v2747
    %v2849 = vadd.f32 %v2581, %v2751
    %v2850 = vadd.f32 %v2582, %v2747
    %v2851 = vadd.f32 %v2583, %v2751
    %v2852 = vadd.f32 %v2584, %v2747
    %v2853 = vadd.f32 %v2585, %v2751
    %v2854 = vadd.f32 %v2586, %v2747
    %v2855 = vadd.f32 %v2587, %v2751
    %v2856 = vadd.f32 %v2588, %v2747
    %v2857 = vadd.f32 %v2589, %v2751
    %v2858 = vadd.f32 %v2590, %v2747
    %v2859 = vadd.f32 %v2591, %v2751
    %v2860 = vadd.f32 %v2592, %v2747
    %v2861 = vadd.f32 %v2593, %v2751
    %v2862 = vadd.f32 %v2594, %v2747
    %v2863 = vadd.f32 %v2595, %v2751
    %v2864 = vadd.f32 %v2596, %v2747
    %v2865 = vadd.f32 %v2597, %v2751
    %v2866 = vadd.f32 %v2598, %v2747
    %v2867 = vadd.f32 %v2599, %v2751
    %v2868 = vadd.f32 %v2600, %v2747
    %v2869 = vadd.f32 %v2601, %v2751
    %v2870 = vadd.f32 %v2602, %v2747
    %v2871 = vadd.f32 %v2603, %v2751
    %v2872 = vadd.f32 %v2604, %v2747
    %v2873 = vadd.f32 %v2605, %v2751
    %v2874 = vadd.f32 %v2606, %v2747
    %v2875 = vadd.f32 %v2607, %v2751
    %v2876 = vadd.f32 %v2608, %v2747
    %v2877 = vadd.f32 %v2609, %v2751
    %v2878 = vadd.f32 %v2610, %v2747
    %v2879 = vadd.f32 %v2611, %v2751
    %v2880 = vadd.f32 %v2612, %v2747
    %v2881 = vadd.f32 %v2613, %v2751
    %v2882 = vadd.f32 %v2614, %v2747
    %v2883 = vadd.f32 %v2615, %v2751
    %v2884 = vadd.f32 %v2616, %v2747
    %v2885 = vadd.f32 %v2617, %v2751
    %v2886 = vadd.f32 %v2618, %v2747
    %v2887 = vadd.f32 %v2619, %v2751
    %v2888 = vadd.f32 %v2620, %v2747
    %v2889 = vadd.f32 %v2621, %v2751
    %v2890 = vadd.f32 %v2622, %v2747
    %v2891 = vadd.f32 %v2623, %v2751
    %v2892 = vadd.f32 %v2624, %v2747
    %v2893 = vadd.f32 %v2625, %v2751
    %v2894 = vadd.f32 %v2626, %v2747
    %v2895 = vadd.f32 %v2627, %v2751
    %v2896 = vadd.f32 %v2628, %v2747
    %v2897 = vadd.f32 %v2629, %v2751
    %v2898 = vadd.f32 %v2630, %v2747
    %v2899 = vadd.f32 %v2631, %v2751
    %v2900 = vadd.f32 %v2632, %v2747
    %v2901 = vadd.f32 %v2633, %v2751
    %v2902 = vadd.f32 %v2634, %v2747
    %v2903 = vadd.f32 %v2635, %v2751
    %v2904 = vadd.f32 %v2636, %v2747
    %v2905 = vadd.f32 %v2637, %v2751
    %v2906 = vadd.f32 %v2638, %v2747
    %v2907 = vadd.f32 %v2639, %v2751
    %v2908 = vadd.f32 %v2640, %v2747
    %v2909 = vadd.f32 %v2641, %v2751
    %v2910 = vadd.f32 %v2642, %v2747
    %v2911 = vadd.f32 %v2643, %v2751
    %v2912 = vadd.f32 %v2644, %v2747
    %v2913 = vadd.f32 %v2645, %v2751
    %v2914 = vadd.f32 %v2646, %v2747
    %v2915 = vadd.f32 %v2647, %v2751
    %v2916 = vadd.f32 %v2648, %v2747
    %v2917 = vadd.f32 %v2649, %v2751
    %v2918 = vadd.f32 %v2650, %v2747
    %v2919 = vadd.f32 %v2651, %v2751
    %v2920 = vadd.f32 %v2652, %v2747
    %v2921 = vadd.f32 %v2653, %v2751
    %v2922 = vadd.f32 %v2654, %v2747
    %v2923 = vadd.f32 %v2655, %v2751
    %v2924 = vadd.f32 %v2656, %v2747
    %v2925 = vadd.f32 %v2657, %v2751
    %v2926 = vadd.f32 %v2658, %v2747
    %v2927 = vadd.f32 %v2659, %v2751
    %v2928 = vadd.f32 %v2660, %v2747
    %v2929 = vadd.f32 %v2661, %v2751
    %v2930 = vadd.f32 %v2662, %v2747
    %v2931 = vadd.f32 %v2663, %v2751
    %v2932 = vadd.f32 %v2664, %v2747
    %v2933 = vadd.f32 %v2665, %v2751
    %v2934 = vadd.f32 %v2666, %v2747
    %v2935 = vadd.f32 %v2667, %v2751
    %v2936 = vadd.f32 %v2668, %v2747
    %v2937 = vadd.f32 %v2669, %v2751
    %v2938 = vadd.f32 %v2670, %v2747
    %v2939 = vadd.f32 %v2671, %v2751
    %v2940 = vadd.f32 %v2672, %v2747
    %v2941 = vadd.f32 %v2673, %v2751
    %v2942 = vadd.f32 %v2674, %v2747
    %v2943 = vadd.f32 %v2675, %v2751
    %v2944 = vadd.f32 %v2676, %v2747
    %v2945 = vadd.f32 %v2677, %v2751
    %v2946 = vadd.f32 %v2678, %v2747
    %v2947 = vadd.f32 %v2679, %v2751
    %v2948 = vadd.f32 %v2680, %v2747
    %v2949 = vadd.f32 %v2681, %v2751
    %v2950 = vadd.f32 %v2682, %v2747
    %v2951 = vadd.f32 %v2683, %v2751
    %v2952 = vadd.f32 %v2684, %v2747
    %v2953 = vadd.f32 %v2685, %v2751
    %v2954 = vadd.f32 %v2686, %v2747
    %v2955 = vadd.f32 %v2687, %v2751
    %v2956 = vadd.f32 %v2688, %v2747
    %v2957 = vadd.f32 %v2689, %v2751
    %v2958 = vadd.f32 %v2690, %v2747
    %v2959 = vadd.f32 %v2691, %v2751
    %v2960 = vadd.f32 %v2692, %v2747
    %v2961 = vadd.f32 %v2693, %v2751
    %v2962 = vadd.f32 %v2694, %v2747
    %v2963 = vadd.f32 %v2695, %v2751
    %v2964 = vadd.f32 %v2696, %v2747
    %v2965 = vadd.f32 %v2697, %v2751
    %v2966 = vadd.f32 %v2698, %v2747
    %v2967 = vadd.f32 %v2699, %v2751
    %v2968 = vadd.f32 %v2700, %v2747
    %v2969 = vadd.f32 %v2701, %v2751
    %v2970 = vadd.f32 %v2702, %v2747
    %v2971 = vadd.f32 %v2703, %v2751
    %v2972 = vadd.f32 %v2704, %v2747
    %v2973 = vadd.f32 %v2705, %v2751
    %v2974 = vadd.f32 %v2706, %v2747
    %v2975 = vadd.f32 %v2707, %v2751
    %v2976 = vadd.f32 %v2708, %v2747
    %v2977 = vadd.f32 %v2709, %v2751
    %v2978 = vadd.f32 %v2710, %v2747
    %v2979 = vadd.f32 %v2711, %v2751
    %v2980 = vadd.f32 %v2712, %v2747
    %v2981 = vadd.f32 %v2713, %v2751
    %v2982 = vadd.f32 %v2714, %v2747
    %v2983 = vadd.f32 %v2715, %v2751
    %v2984 = vadd.f32 %v2716, %v2747
    %v2985 = vadd.f32 %v2717, %v2751
    %v2986 = vadd.f32 %v2718, %v2747
    %v2987 = vadd.f32 %v2719, %v2751
    %v2988 = vadd.f32 %v2720, %v2747
    %v2989 = vadd.f32 %v2721, %v2751
    %v2990 = vadd.f32 %v2722, %v2747
    %v2991 = vadd.f32 %v2723, %v2751
    %v2992 = vadd.f32 %v2724, %v2747
    %v2993 = vadd.f32 %v2725, %v2751
    %v2994 = vadd.f32 %v2726, %v2747
    %v2995 = vadd.f32 %v2727, %v2751
    %v2996 = vadd.f32 %v2728, %v2747
    %v2997 = vadd.f32 %v2729, %v2751
    %v2998 = vadd.f32 %v2730, %v2747
    %v2999 = vadd.f32 %v2731, %v2751
    %v3000 = vadd.f32 %v2732, %v2747
    %v3001 = vadd.f32 %v2733, %v2751
    %v3002 = vadd.f32 %v2734, %v2747
    %v3003 = vadd.f32 %v2735, %v2751
    %v3004 = vadd.f32 %v2736, %v2747
    %v3005 = vadd.f32 %v2737, %v2751
    %v3006 = vadd.f32 %v2738, %v2747
    %v3007 = vadd.f32 %v2739, %v2751
    %v3008 = vadd.f32 %v2740, %v2747
    %v3009 = vadd.f32 %v2741, %v2751
    %v3010 = vpack.c.bf16 %v2756, %v2754
    %v3011 = vpack.c.bf16 %v2757, %v2755
    %v3012 = vpack.c.bf16 %v2760, %v2758
    %v3013 = vpack.c.bf16 %v2761, %v2759
    %v3014 = vpack.c.bf16 %v2764, %v2762
    %v3015 = vpack.c.bf16 %v2765, %v2763
    %v3016 = vpack.c.bf16 %v2768, %v2766
    %v3017 = vpack.c.bf16 %v2769, %v2767
    %v3018 = vpack.c.bf16 %v2772, %v2770
    %v3019 = vpack.c.bf16 %v2773, %v2771
    %v3020 = vpack.c.bf16 %v2776, %v2774
    %v3021 = vpack.c.bf16 %v2777, %v2775
    %v3022 = vpack.c.bf16 %v2780, %v2778
    %v3023 = vpack.c.bf16 %v2781, %v2779
    %v3024 = vpack.c.bf16 %v2784, %v2782
    %v3025 = vpack.c.bf16 %v2785, %v2783
    %v3026 = vpack.c.bf16 %v2788, %v2786
    %v3027 = vpack.c.bf16 %v2789, %v2787
    %v3028 = vpack.c.bf16 %v2792, %v2790
    %v3029 = vpack.c.bf16 %v2793, %v2791
    %v3030 = vpack.c.bf16 %v2796, %v2794
    %v3031 = vpack.c.bf16 %v2797, %v2795
    %v3032 = vpack.c.bf16 %v2800, %v2798
    %v3033 = vpack.c.bf16 %v2801, %v2799
    %v3034 = vpack.c.bf16 %v2804, %v2802
    %v3035 = vpack.c.bf16 %v2805, %v2803
    %v3036 = vpack.c.bf16 %v2808, %v2806
    %v3037 = vpack.c.bf16 %v2809, %v2807
    %v3038 = vpack.c.bf16 %v2812, %v2810
    %v3039 = vpack.c.bf16 %v2813, %v2811
    %v3040 = vpack.c.bf16 %v2816, %v2814
    %v3041 = vpack.c.bf16 %v2817, %v2815
    %v3042 = vpack.c.bf16 %v2820, %v2818
    %v3043 = vpack.c.bf16 %v2821, %v2819
    %v3044 = vpack.c.bf16 %v2824, %v2822
    %v3045 = vpack.c.bf16 %v2825, %v2823
    %v3046 = vpack.c.bf16 %v2828, %v2826
    %v3047 = vpack.c.bf16 %v2829, %v2827
    %v3048 = vpack.c.bf16 %v2832, %v2830
    %v3049 = vpack.c.bf16 %v2833, %v2831
    %v3050 = vpack.c.bf16 %v2836, %v2834
    %v3051 = vpack.c.bf16 %v2837, %v2835
    %v3052 = vpack.c.bf16 %v2840, %v2838
    %v3053 = vpack.c.bf16 %v2841, %v2839
    %v3054 = vpack.c.bf16 %v2844, %v2842
    %v3055 = vpack.c.bf16 %v2845, %v2843
    %v3056 = vpack.c.bf16 %v2848, %v2846
    %v3057 = vpack.c.bf16 %v2849, %v2847
    %v3058 = vpack.c.bf16 %v2852, %v2850
    %v3059 = vpack.c.bf16 %v2853, %v2851
    %v3060 = vpack.c.bf16 %v2856, %v2854
    %v3061 = vpack.c.bf16 %v2857, %v2855
    %v3062 = vpack.c.bf16 %v2860, %v2858
    %v3063 = vpack.c.bf16 %v2861, %v2859
    %v3064 = vpack.c.bf16 %v2864, %v2862
    %v3065 = vpack.c.bf16 %v2865, %v2863
    %v3066 = vpack.c.bf16 %v2868, %v2866
    %v3067 = vpack.c.bf16 %v2869, %v2867
    %v3068 = vpack.c.bf16 %v2872, %v2870
    %v3069 = vpack.c.bf16 %v2873, %v2871
    %v3070 = vpack.c.bf16 %v2876, %v2874
    %v3071 = vpack.c.bf16 %v2877, %v2875
    %v3072 = vpack.c.bf16 %v2880, %v2878
    %v3073 = vpack.c.bf16 %v2881, %v2879
    %v3074 = vpack.c.bf16 %v2884, %v2882
    %v3075 = vpack.c.bf16 %v2885, %v2883
    %v3076 = vpack.c.bf16 %v2888, %v2886
    %v3077 = vpack.c.bf16 %v2889, %v2887
    %v3078 = vpack.c.bf16 %v2892, %v2890
    %v3079 = vpack.c.bf16 %v2893, %v2891
    %v3080 = vpack.c.bf16 %v2896, %v2894
    %v3081 = vpack.c.bf16 %v2897, %v2895
    %v3082 = vpack.c.bf16 %v2900, %v2898
    %v3083 = vpack.c.bf16 %v2901, %v2899
    %v3084 = vpack.c.bf16 %v2904, %v2902
    %v3085 = vpack.c.bf16 %v2905, %v2903
    %v3086 = vpack.c.bf16 %v2908, %v2906
    %v3087 = vpack.c.bf16 %v2909, %v2907
    %v3088 = vpack.c.bf16 %v2912, %v2910
    %v3089 = vpack.c.bf16 %v2913, %v2911
    %v3090 = vpack.c.bf16 %v2916, %v2914
    %v3091 = vpack.c.bf16 %v2917, %v2915
    %v3092 = vpack.c.bf16 %v2920, %v2918
    %v3093 = vpack.c.bf16 %v2921, %v2919
    %v3094 = vpack.c.bf16 %v2924, %v2922
    %v3095 = vpack.c.bf16 %v2925, %v2923
    %v3096 = vpack.c.bf16 %v2928, %v2926
    %v3097 = vpack.c.bf16 %v2929, %v2927
    %v3098 = vpack.c.bf16 %v2932, %v2930
    %v3099 = vpack.c.bf16 %v2933, %v2931
    %v3100 = vpack.c.bf16 %v2936, %v2934
    %v3101 = vpack.c.bf16 %v2937, %v2935
    %v3102 = vpack.c.bf16 %v2940, %v2938
    %v3103 = vpack.c.bf16 %v2941, %v2939
    %v3104 = vpack.c.bf16 %v2944, %v2942
    %v3105 = vpack.c.bf16 %v2945, %v2943
    %v3106 = vpack.c.bf16 %v2948, %v2946
    %v3107 = vpack.c.bf16 %v2949, %v2947
    %v3108 = vpack.c.bf16 %v2952, %v2950
    %v3109 = vpack.c.bf16 %v2953, %v2951
    %v3110 = vpack.c.bf16 %v2956, %v2954
    %v3111 = vpack.c.bf16 %v2957, %v2955
    %v3112 = vpack.c.bf16 %v2960, %v2958
    %v3113 = vpack.c.bf16 %v2961, %v2959
    %v3114 = vpack.c.bf16 %v2964, %v2962
    %v3115 = vpack.c.bf16 %v2965, %v2963
    %v3116 = vpack.c.bf16 %v2968, %v2966
    %v3117 = vpack.c.bf16 %v2969, %v2967
    %v3118 = vpack.c.bf16 %v2972, %v2970
    %v3119 = vpack.c.bf16 %v2973, %v2971
    %v3120 = vpack.c.bf16 %v2976, %v2974
    %v3121 = vpack.c.bf16 %v2977, %v2975
    %v3122 = vpack.c.bf16 %v2980, %v2978
    %v3123 = vpack.c.bf16 %v2981, %v2979
    %v3124 = vpack.c.bf16 %v2984, %v2982
    %v3125 = vpack.c.bf16 %v2985, %v2983
    %v3126 = vpack.c.bf16 %v2988, %v2986
    %v3127 = vpack.c.bf16 %v2989, %v2987
    %v3128 = vpack.c.bf16 %v2992, %v2990
    %v3129 = vpack.c.bf16 %v2993, %v2991
    %v3130 = vpack.c.bf16 %v2996, %v2994
    %v3131 = vpack.c.bf16 %v2997, %v2995
    %v3132 = vpack.c.bf16 %v3000, %v2998
    %v3133 = vpack.c.bf16 %v3001, %v2999
    %v3134 = vpack.c.bf16 %v3004, %v3002
    %v3135 = vpack.c.bf16 %v3005, %v3003
    %v3136 = vpack.c.bf16 %v3008, %v3006
    %v3137 = vpack.c.bf16 %v3009, %v3007
    %v3266 = vunpack.c.l.b16 %v3010
    %v3267 = vunpack.c.l.b16 %v3011
    %v3268 = vunpack.c.h.b16 %v3010
    %v3269 = vunpack.c.h.b16 %v3011
    %v3270 = vunpack.c.l.b16 %v3012
    %v3271 = vunpack.c.l.b16 %v3013
    %v3272 = vunpack.c.h.b16 %v3012
    %v3273 = vunpack.c.h.b16 %v3013
    %v3274 = vunpack.c.l.b16 %v3014
    %v3275 = vunpack.c.l.b16 %v3015
    %v3276 = vunpack.c.h.b16 %v3014
    %v3277 = vunpack.c.h.b16 %v3015
    %v3278 = vunpack.c.l.b16 %v3016
    %v3279 = vunpack.c.l.b16 %v3017
    %v3280 = vunpack.c.h.b16 %v3016
    %v3281 = vunpack.c.h.b16 %v3017
    %v3282 = vunpack.c.l.b16 %v3018
    %v3283 = vunpack.c.l.b16 %v3019
    %v3284 = vunpack.c.h.b16 %v3018
    %v3285 = vunpack.c.h.b16 %v3019
    %v3286 = vunpack.c.l.b16 %v3020
    %v3287 = vunpack.c.l.b16 %v3021
    %v3288 = vunpack.c.h.b16 %v3020
    %v3289 = vunpack.c.h.b16 %v3021
    %v3290 = vunpack.c.l.b16 %v3022
    %v3291 = vunpack.c.l.b16 %v3023
    %v3292 = vunpack.c.h.b16 %v3022
    %v3293 = vunpack.c.h.b16 %v3023
    %v3294 = vunpack.c.l.b16 %v3024
    %v3295 = vunpack.c.l.b16 %v3025
    %v3296 = vunpack.c.h.b16 %v3024
    %v3297 = vunpack.c.h.b16 %v3025
    %v3298 = vunpack.c.l.b16 %v3026
    %v3299 = vunpack.c.l.b16 %v3027
    %v3300 = vunpack.c.h.b16 %v3026
    %v3301 = vunpack.c.h.b16 %v3027
    %v3302 = vunpack.c.l.b16 %v3028
    %v3303 = vunpack.c.l.b16 %v3029
    %v3304 = vunpack.c.h.b16 %v3028
    %v3305 = vunpack.c.h.b16 %v3029
    %v3306 = vunpack.c.l.b16 %v3030
    %v3307 = vunpack.c.l.b16 %v3031
    %v3308 = vunpack.c.h.b16 %v3030
    %v3309 = vunpack.c.h.b16 %v3031
    %v3310 = vunpack.c.l.b16 %v3032
    %v3311 = vunpack.c.l.b16 %v3033
    %v3312 = vunpack.c.h.b16 %v3032
    %v3313 = vunpack.c.h.b16 %v3033
    %v3314 = vunpack.c.l.b16 %v3034
    %v3315 = vunpack.c.l.b16 %v3035
    %v3316 = vunpack.c.h.b16 %v3034
    %v3317 = vunpack.c.h.b16 %v3035
    %v3318 = vunpack.c.l.b16 %v3036
    %v3319 = vunpack.c.l.b16 %v3037
    %v3320 = vunpack.c.h.b16 %v3036
    %v3321 = vunpack.c.h.b16 %v3037
    %v3322 = vunpack.c.l.b16 %v3038
    %v3323 = vunpack.c.l.b16 %v3039
    %v3324 = vunpack.c.h.b16 %v3038
    %v3325 = vunpack.c.h.b16 %v3039
    %v3326 = vunpack.c.l.b16 %v3040
    %v3327 = vunpack.c.l.b16 %v3041
    %v3328 = vunpack.c.h.b16 %v3040
    %v3329 = vunpack.c.h.b16 %v3041
    %v3330 = vunpack.c.l.b16 %v3042
    %v3331 = vunpack.c.l.b16 %v3043
    %v3332 = vunpack.c.h.b16 %v3042
    %v3333 = vunpack.c.h.b16 %v3043
    %v3334 = vunpack.c.l.b16 %v3044
    %v3335 = vunpack.c.l.b16 %v3045
    %v3336 = vunpack.c.h.b16 %v3044
    %v3337 = vunpack.c.h.b16 %v3045
    %v3338 = vunpack.c.l.b16 %v3046
    %v3339 = vunpack.c.l.b16 %v3047
    %v3340 = vunpack.c.h.b16 %v3046
    %v3341 = vunpack.c.h.b16 %v3047
    %v3342 = vunpack.c.l.b16 %v3048
    %v3343 = vunpack.c.l.b16 %v3049
    %v3344 = vunpack.c.h.b16 %v3048
    %v3345 = vunpack.c.h.b16 %v3049
    %v3346 = vunpack.c.l.b16 %v3050
    %v3347 = vunpack.c.l.b16 %v3051
    %v3348 = vunpack.c.h.b16 %v3050
    %v3349 = vunpack.c.h.b16 %v3051
    %v3350 = vunpack.c.l.b16 %v3052
    %v3351 = vunpack.c.l.b16 %v3053
    %v3352 = vunpack.c.h.b16 %v3052
    %v3353 = vunpack.c.h.b16 %v3053
    %v3354 = vunpack.c.l.b16 %v3054
    %v3355 = vunpack.c.l.b16 %v3055
    %v3356 = vunpack.c.h.b16 %v3054
    %v3357 = vunpack.c.h.b16 %v3055
    %v3358 = vunpack.c.l.b16 %v3056
    %v3359 = vunpack.c.l.b16 %v3057
    %v3360 = vunpack.c.h.b16 %v3056
    %v3361 = vunpack.c.h.b16 %v3057
    %v3362 = vunpack.c.l.b16 %v3058
    %v3363 = vunpack.c.l.b16 %v3059
    %v3364 = vunpack.c.h.b16 %v3058
    %v3365 = vunpack.c.h.b16 %v3059
    %v3366 = vunpack.c.l.b16 %v3060
    %v3367 = vunpack.c.l.b16 %v3061
    %v3368 = vunpack.c.h.b16 %v3060
    %v3369 = vunpack.c.h.b16 %v3061
    %v3370 = vunpack.c.l.b16 %v3062
    %v3371 = vunpack.c.l.b16 %v3063
    %v3372 = vunpack.c.h.b16 %v3062
    %v3373 = vunpack.c.h.b16 %v3063
    %v3374 = vunpack.c.l.b16 %v3064
    %v3375 = vunpack.c.l.b16 %v3065
    %v3376 = vunpack.c.h.b16 %v3064
    %v3377 = vunpack.c.h.b16 %v3065
    %v3378 = vunpack.c.l.b16 %v3066
    %v3379 = vunpack.c.l.b16 %v3067
    %v3380 = vunpack.c.h.b16 %v3066
    %v3381 = vunpack.c.h.b16 %v3067
    %v3382 = vunpack.c.l.b16 %v3068
    %v3383 = vunpack.c.l.b16 %v3069
    %v3384 = vunpack.c.h.b16 %v3068
    %v3385 = vunpack.c.h.b16 %v3069
    %v3386 = vunpack.c.l.b16 %v3070
    %v3387 = vunpack.c.l.b16 %v3071
    %v3388 = vunpack.c.h.b16 %v3070
    %v3389 = vunpack.c.h.b16 %v3071
    %v3390 = vunpack.c.l.b16 %v3072
    %v3391 = vunpack.c.l.b16 %v3073
    %v3392 = vunpack.c.h.b16 %v3072
    %v3393 = vunpack.c.h.b16 %v3073
    %v3394 = vunpack.c.l.b16 %v3074
    %v3395 = vunpack.c.l.b16 %v3075
    %v3396 = vunpack.c.h.b16 %v3074
    %v3397 = vunpack.c.h.b16 %v3075
    %v3398 = vunpack.c.l.b16 %v3076
    %v3399 = vunpack.c.l.b16 %v3077
    %v3400 = vunpack.c.h.b16 %v3076
    %v3401 = vunpack.c.h.b16 %v3077
    %v3402 = vunpack.c.l.b16 %v3078
    %v3403 = vunpack.c.l.b16 %v3079
    %v3404 = vunpack.c.h.b16 %v3078
    %v3405 = vunpack.c.h.b16 %v3079
    %v3406 = vunpack.c.l.b16 %v3080
    %v3407 = vunpack.c.l.b16 %v3081
    %v3408 = vunpack.c.h.b16 %v3080
    %v3409 = vunpack.c.h.b16 %v3081
    %v3410 = vunpack.c.l.b16 %v3082
    %v3411 = vunpack.c.l.b16 %v3083
    %v3412 = vunpack.c.h.b16 %v3082
    %v3413 = vunpack.c.h.b16 %v3083
    %v3414 = vunpack.c.l.b16 %v3084
    %v3415 = vunpack.c.l.b16 %v3085
    %v3416 = vunpack.c.h.b16 %v3084
    %v3417 = vunpack.c.h.b16 %v3085
    %v3418 = vunpack.c.l.b16 %v3086
    %v3419 = vunpack.c.l.b16 %v3087
    %v3420 = vunpack.c.h.b16 %v3086
    %v3421 = vunpack.c.h.b16 %v3087
    %v3422 = vunpack.c.l.b16 %v3088
    %v3423 = vunpack.c.l.b16 %v3089
    %v3424 = vunpack.c.h.b16 %v3088
    %v3425 = vunpack.c.h.b16 %v3089
    %v3426 = vunpack.c.l.b16 %v3090
    %v3427 = vunpack.c.l.b16 %v3091
    %v3428 = vunpack.c.h.b16 %v3090
    %v3429 = vunpack.c.h.b16 %v3091
    %v3430 = vunpack.c.l.b16 %v3092
    %v3431 = vunpack.c.l.b16 %v3093
    %v3432 = vunpack.c.h.b16 %v3092
    %v3433 = vunpack.c.h.b16 %v3093
    %v3434 = vunpack.c.l.b16 %v3094
    %v3435 = vunpack.c.l.b16 %v3095
    %v3436 = vunpack.c.h.b16 %v3094
    %v3437 = vunpack.c.h.b16 %v3095
    %v3438 = vunpack.c.l.b16 %v3096
    %v3439 = vunpack.c.l.b16 %v3097
    %v3440 = vunpack.c.h.b16 %v3096
    %v3441 = vunpack.c.h.b16 %v3097
    %v3442 = vunpack.c.l.b16 %v3098
    %v3443 = vunpack.c.l.b16 %v3099
    %v3444 = vunpack.c.h.b16 %v3098
    %v3445 = vunpack.c.h.b16 %v3099
    %v3446 = vunpack.c.l.b16 %v3100
    %v3447 = vunpack.c.l.b16 %v3101
    %v3448 = vunpack.c.h.b16 %v3100
    %v3449 = vunpack.c.h.b16 %v3101
    %v3450 = vunpack.c.l.b16 %v3102
    %v3451 = vunpack.c.l.b16 %v3103
    %v3452 = vunpack.c.h.b16 %v3102
    %v3453 = vunpack.c.h.b16 %v3103
    %v3454 = vunpack.c.l.b16 %v3104
    %v3455 = vunpack.c.l.b16 %v3105
    %v3456 = vunpack.c.h.b16 %v3104
    %v3457 = vunpack.c.h.b16 %v3105
    %v3458 = vunpack.c.l.b16 %v3106
    %v3459 = vunpack.c.l.b16 %v3107
    %v3460 = vunpack.c.h.b16 %v3106
    %v3461 = vunpack.c.h.b16 %v3107
    %v3462 = vunpack.c.l.b16 %v3108
    %v3463 = vunpack.c.l.b16 %v3109
    %v3464 = vunpack.c.h.b16 %v3108
    %v3465 = vunpack.c.h.b16 %v3109
    %v3466 = vunpack.c.l.b16 %v3110
    %v3467 = vunpack.c.l.b16 %v3111
    %v3468 = vunpack.c.h.b16 %v3110
    %v3469 = vunpack.c.h.b16 %v3111
    %v3470 = vunpack.c.l.b16 %v3112
    %v3471 = vunpack.c.l.b16 %v3113
    %v3472 = vunpack.c.h.b16 %v3112
    %v3473 = vunpack.c.h.b16 %v3113
    %v3474 = vunpack.c.l.b16 %v3114
    %v3475 = vunpack.c.l.b16 %v3115
    %v3476 = vunpack.c.h.b16 %v3114
    %v3477 = vunpack.c.h.b16 %v3115
    %v3478 = vunpack.c.l.b16 %v3116
    %v3479 = vunpack.c.l.b16 %v3117
    %v3480 = vunpack.c.h.b16 %v3116
    %v3481 = vunpack.c.h.b16 %v3117
    %v3482 = vunpack.c.l.b16 %v3118
    %v3483 = vunpack.c.l.b16 %v3119
    %v3484 = vunpack.c.h.b16 %v3118
    %v3485 = vunpack.c.h.b16 %v3119
    %v3486 = vunpack.c.l.b16 %v3120
    %v3487 = vunpack.c.l.b16 %v3121
    %v3488 = vunpack.c.h.b16 %v3120
    %v3489 = vunpack.c.h.b16 %v3121
    %v3490 = vunpack.c.l.b16 %v3122
    %v3491 = vunpack.c.l.b16 %v3123
    %v3492 = vunpack.c.h.b16 %v3122
    %v3493 = vunpack.c.h.b16 %v3123
    %v3494 = vunpack.c.l.b16 %v3124
    %v3495 = vunpack.c.l.b16 %v3125
    %v3496 = vunpack.c.h.b16 %v3124
    %v3497 = vunpack.c.h.b16 %v3125
    %v3498 = vunpack.c.l.b16 %v3126
    %v3499 = vunpack.c.l.b16 %v3127
    %v3500 = vunpack.c.h.b16 %v3126
    %v3501 = vunpack.c.h.b16 %v3127
    %v3502 = vunpack.c.l.b16 %v3128
    %v3503 = vunpack.c.l.b16 %v3129
    %v3504 = vunpack.c.h.b16 %v3128
    %v3505 = vunpack.c.h.b16 %v3129
    %v3506 = vunpack.c.l.b16 %v3130
    %v3507 = vunpack.c.l.b16 %v3131
    %v3508 = vunpack.c.h.b16 %v3130
    %v3509 = vunpack.c.h.b16 %v3131
    %v3510 = vunpack.c.l.b16 %v3132
    %v3511 = vunpack.c.l.b16 %v3133
    %v3512 = vunpack.c.h.b16 %v3132
    %v3513 = vunpack.c.h.b16 %v3133
    %v3514 = vunpack.c.l.b16 %v3134
    %v3515 = vunpack.c.l.b16 %v3135
    %v3516 = vunpack.c.h.b16 %v3134
    %v3517 = vunpack.c.h.b16 %v3135
    %v3518 = vunpack.c.l.b16 %v3136
    %v3519 = vunpack.c.l.b16 %v3137
    %v3520 = vunpack.c.h.b16 %v3136
    %v3521 = vunpack.c.h.b16 %v3137
    %v3522 = vpack.c.b16 %v3267, %v3266
    %v3523 = vpack.c.b16 %v3269, %v3268
    %v3524 = vpack.c.b16 %v3271, %v3270
    %v3525 = vpack.c.b16 %v3273, %v3272
    %v3526 = vpack.c.b16 %v3275, %v3274
    %v3527 = vpack.c.b16 %v3277, %v3276
    %v3528 = vpack.c.b16 %v3279, %v3278
    %v3529 = vpack.c.b16 %v3281, %v3280
    %v3530 = vpack.c.b16 %v3283, %v3282
    %v3531 = vpack.c.b16 %v3285, %v3284
    %v3532 = vpack.c.b16 %v3287, %v3286
    %v3533 = vpack.c.b16 %v3289, %v3288
    %v3534 = vpack.c.b16 %v3291, %v3290
    %v3535 = vpack.c.b16 %v3293, %v3292
    %v3536 = vpack.c.b16 %v3295, %v3294
    %v3537 = vpack.c.b16 %v3297, %v3296
    %v3538 = vpack.c.b16 %v3299, %v3298
    %v3539 = vpack.c.b16 %v3301, %v3300
    %v3540 = vpack.c.b16 %v3303, %v3302
    %v3541 = vpack.c.b16 %v3305, %v3304
    %v3542 = vpack.c.b16 %v3307, %v3306
    %v3543 = vpack.c.b16 %v3309, %v3308
    %v3544 = vpack.c.b16 %v3311, %v3310
    %v3545 = vpack.c.b16 %v3313, %v3312
    %v3546 = vpack.c.b16 %v3315, %v3314
    %v3547 = vpack.c.b16 %v3317, %v3316
    %v3548 = vpack.c.b16 %v3319, %v3318
    %v3549 = vpack.c.b16 %v3321, %v3320
    %v3550 = vpack.c.b16 %v3323, %v3322
    %v3551 = vpack.c.b16 %v3325, %v3324
    %v3552 = vpack.c.b16 %v3327, %v3326
    %v3553 = vpack.c.b16 %v3329, %v3328
    %v3554 = vpack.c.b16 %v3331, %v3330
    %v3555 = vpack.c.b16 %v3333, %v3332
    %v3556 = vpack.c.b16 %v3335, %v3334
    %v3557 = vpack.c.b16 %v3337, %v3336
    %v3558 = vpack.c.b16 %v3339, %v3338
    %v3559 = vpack.c.b16 %v3341, %v3340
    %v3560 = vpack.c.b16 %v3343, %v3342
    %v3561 = vpack.c.b16 %v3345, %v3344
    %v3562 = vpack.c.b16 %v3347, %v3346
    %v3563 = vpack.c.b16 %v3349, %v3348
    %v3564 = vpack.c.b16 %v3351, %v3350
    %v3565 = vpack.c.b16 %v3353, %v3352
    %v3566 = vpack.c.b16 %v3355, %v3354
    %v3567 = vpack.c.b16 %v3357, %v3356
    %v3568 = vpack.c.b16 %v3359, %v3358
    %v3569 = vpack.c.b16 %v3361, %v3360
    %v3570 = vpack.c.b16 %v3363, %v3362
    %v3571 = vpack.c.b16 %v3365, %v3364
    %v3572 = vpack.c.b16 %v3367, %v3366
    %v3573 = vpack.c.b16 %v3369, %v3368
    %v3574 = vpack.c.b16 %v3371, %v3370
    %v3575 = vpack.c.b16 %v3373, %v3372
    %v3576 = vpack.c.b16 %v3375, %v3374
    %v3577 = vpack.c.b16 %v3377, %v3376
    %v3578 = vpack.c.b16 %v3379, %v3378
    %v3579 = vpack.c.b16 %v3381, %v3380
    %v3580 = vpack.c.b16 %v3383, %v3382
    %v3581 = vpack.c.b16 %v3385, %v3384
    %v3582 = vpack.c.b16 %v3387, %v3386
    %v3583 = vpack.c.b16 %v3389, %v3388
    %v3584 = vpack.c.b16 %v3391, %v3390
    %v3585 = vpack.c.b16 %v3393, %v3392
    %v3586 = vpack.c.b16 %v3395, %v3394
    %v3587 = vpack.c.b16 %v3397, %v3396
    %v3588 = vpack.c.b16 %v3399, %v3398
    %v3589 = vpack.c.b16 %v3401, %v3400
    %v3590 = vpack.c.b16 %v3403, %v3402
    %v3591 = vpack.c.b16 %v3405, %v3404
    %v3592 = vpack.c.b16 %v3407, %v3406
    %v3593 = vpack.c.b16 %v3409, %v3408
    %v3594 = vpack.c.b16 %v3411, %v3410
    %v3595 = vpack.c.b16 %v3413, %v3412
    %v3596 = vpack.c.b16 %v3415, %v3414
    %v3597 = vpack.c.b16 %v3417, %v3416
    %v3598 = vpack.c.b16 %v3419, %v3418
    %v3599 = vpack.c.b16 %v3421, %v3420
    %v3600 = vpack.c.b16 %v3423, %v3422
    %v3601 = vpack.c.b16 %v3425, %v3424
    %v3602 = vpack.c.b16 %v3427, %v3426
    %v3603 = vpack.c.b16 %v3429, %v3428
    %v3604 = vpack.c.b16 %v3431, %v3430
    %v3605 = vpack.c.b16 %v3433, %v3432
    %v3606 = vpack.c.b16 %v3435, %v3434
    %v3607 = vpack.c.b16 %v3437, %v3436
    %v3608 = vpack.c.b16 %v3439, %v3438
    %v3609 = vpack.c.b16 %v3441, %v3440
    %v3610 = vpack.c.b16 %v3443, %v3442
    %v3611 = vpack.c.b16 %v3445, %v3444
    %v3612 = vpack.c.b16 %v3447, %v3446
    %v3613 = vpack.c.b16 %v3449, %v3448
    %v3614 = vpack.c.b16 %v3451, %v3450
    %v3615 = vpack.c.b16 %v3453, %v3452
    %v3616 = vpack.c.b16 %v3455, %v3454
    %v3617 = vpack.c.b16 %v3457, %v3456
    %v3618 = vpack.c.b16 %v3459, %v3458
    %v3619 = vpack.c.b16 %v3461, %v3460
    %v3620 = vpack.c.b16 %v3463, %v3462
    %v3621 = vpack.c.b16 %v3465, %v3464
    %v3622 = vpack.c.b16 %v3467, %v3466
    %v3623 = vpack.c.b16 %v3469, %v3468
    %v3624 = vpack.c.b16 %v3471, %v3470
    %v3625 = vpack.c.b16 %v3473, %v3472
    %v3626 = vpack.c.b16 %v3475, %v3474
    %v3627 = vpack.c.b16 %v3477, %v3476
    %v3628 = vpack.c.b16 %v3479, %v3478
    %v3629 = vpack.c.b16 %v3481, %v3480
    %v3630 = vpack.c.b16 %v3483, %v3482
    %v3631 = vpack.c.b16 %v3485, %v3484
    %v3632 = vpack.c.b16 %v3487, %v3486
    %v3633 = vpack.c.b16 %v3489, %v3488
    %v3634 = vpack.c.b16 %v3491, %v3490
    %v3635 = vpack.c.b16 %v3493, %v3492
    %v3636 = vpack.c.b16 %v3495, %v3494
    %v3637 = vpack.c.b16 %v3497, %v3496
    %v3638 = vpack.c.b16 %v3499, %v3498
    %v3639 = vpack.c.b16 %v3501, %v3500
    %v3640 = vpack.c.b16 %v3503, %v3502
    %v3641 = vpack.c.b16 %v3505, %v3504
    %v3642 = vpack.c.b16 %v3507, %v3506
    %v3643 = vpack.c.b16 %v3509, %v3508
    %v3644 = vpack.c.b16 %v3511, %v3510
    %v3645 = vpack.c.b16 %v3513, %v3512
    %v3646 = vpack.c.b16 %v3515, %v3514
    %v3647 = vpack.c.b16 %v3517, %v3516
    %v3648 = vpack.c.b16 %v3519, %v3518
    %v3649 = vpack.c.b16 %v3521, %v3520
    %3778 = vst [vmem:[#allocation7] sm:$0xff] %v3522
    %3779 = vst [vmem:[#allocation7 + $0x8] sm:$0xff] %v3523
    %3780 = vst [vmem:[#allocation7 + $0x10] sm:$0xff] %v3524
    %3781 = vst [vmem:[#allocation7 + $0x18] sm:$0xff] %v3525
    %3782 = vst [vmem:[#allocation7 + $0x20] sm:$0xff] %v3526
    %3783 = vst [vmem:[#allocation7 + $0x28] sm:$0xff] %v3527
    %3784 = vst [vmem:[#allocation7 + $0x30] sm:$0xff] %v3528
    %3785 = vst [vmem:[#allocation7 + $0x38] sm:$0xff] %v3529
    %3786 = vst [vmem:[#allocation7 + $0x40] sm:$0xff] %v3530
    %3787 = vst [vmem:[#allocation7 + $0x48] sm:$0xff] %v3531
    %3788 = vst [vmem:[#allocation7 + $0x50] sm:$0xff] %v3532
    %3789 = vst [vmem:[#allocation7 + $0x58] sm:$0xff] %v3533
    %3790 = vst [vmem:[#allocation7 + $0x60] sm:$0xff] %v3534
    %3791 = vst [vmem:[#allocation7 + $0x68] sm:$0xff] %v3535
    %3792 = vst [vmem:[#allocation7 + $0x70] sm:$0xff] %v3536
    %3793 = vst [vmem:[#allocation7 + $0x78] sm:$0xff] %v3537
    %3794 = vst [vmem:[#allocation7 + $0x80] sm:$0xff] %v3538
    %3795 = vst [vmem:[#allocation7 + $0x88] sm:$0xff] %v3539
    %3796 = vst [vmem:[#allocation7 + $0x90] sm:$0xff] %v3540
    %3797 = vst [vmem:[#allocation7 + $0x98] sm:$0xff] %v3541
    %3798 = vst [vmem:[#allocation7 + $0xa0] sm:$0xff] %v3542
    %3799 = vst [vmem:[#allocation7 + $0xa8] sm:$0xff] %v3543
    %3800 = vst [vmem:[#allocation7 + $0xb0] sm:$0xff] %v3544
    %3801 = vst [vmem:[#allocation7 + $0xb8] sm:$0xff] %v3545
    %3802 = vst [vmem:[#allocation7 + $0xc0] sm:$0xff] %v3546
    %3803 = vst [vmem:[#allocation7 + $0xc8] sm:$0xff] %v3547
    %3804 = vst [vmem:[#allocation7 + $0xd0] sm:$0xff] %v3548
    %3805 = vst [vmem:[#allocation7 + $0xd8] sm:$0xff] %v3549
    %3806 = vst [vmem:[#allocation7 + $0xe0] sm:$0xff] %v3550
    %3807 = vst [vmem:[#allocation7 + $0xe8] sm:$0xff] %v3551
    %3808 = vst [vmem:[#allocation7 + $0xf0] sm:$0xff] %v3552
    %3809 = vst [vmem:[#allocation7 + $0xf8] sm:$0xff] %v3553
    %3810 = vst [vmem:[#allocation7 + $0x100] sm:$0xff] %v3554
    %3811 = vst [vmem:[#allocation7 + $0x108] sm:$0xff] %v3555
    %3812 = vst [vmem:[#allocation7 + $0x110] sm:$0xff] %v3556
    %3813 = vst [vmem:[#allocation7 + $0x118] sm:$0xff] %v3557
    %3814 = vst [vmem:[#allocation7 + $0x120] sm:$0xff] %v3558
    %3815 = vst [vmem:[#allocation7 + $0x128] sm:$0xff] %v3559
    %3816 = vst [vmem:[#allocation7 + $0x130] sm:$0xff] %v3560
    %3817 = vst [vmem:[#allocation7 + $0x138] sm:$0xff] %v3561
    %3818 = vst [vmem:[#allocation7 + $0x140] sm:$0xff] %v3562
    %3819 = vst [vmem:[#allocation7 + $0x148] sm:$0xff] %v3563
    %3820 = vst [vmem:[#allocation7 + $0x150] sm:$0xff] %v3564
    %3821 = vst [vmem:[#allocation7 + $0x158] sm:$0xff] %v3565
    %3822 = vst [vmem:[#allocation7 + $0x160] sm:$0xff] %v3566
    %3823 = vst [vmem:[#allocation7 + $0x168] sm:$0xff] %v3567
    %3824 = vst [vmem:[#allocation7 + $0x170] sm:$0xff] %v3568
    %3825 = vst [vmem:[#allocation7 + $0x178] sm:$0xff] %v3569
    %3826 = vst [vmem:[#allocation7 + $0x180] sm:$0xff] %v3570
    %3827 = vst [vmem:[#allocation7 + $0x188] sm:$0xff] %v3571
    %3828 = vst [vmem:[#allocation7 + $0x190] sm:$0xff] %v3572
    %3829 = vst [vmem:[#allocation7 + $0x198] sm:$0xff] %v3573
    %3830 = vst [vmem:[#allocation7 + $0x1a0] sm:$0xff] %v3574
    %3831 = vst [vmem:[#allocation7 + $0x1a8] sm:$0xff] %v3575
    %3832 = vst [vmem:[#allocation7 + $0x1b0] sm:$0xff] %v3576
    %3833 = vst [vmem:[#allocation7 + $0x1b8] sm:$0xff] %v3577
    %3834 = vst [vmem:[#allocation7 + $0x1c0] sm:$0xff] %v3578
    %3835 = vst [vmem:[#allocation7 + $0x1c8] sm:$0xff] %v3579
    %3836 = vst [vmem:[#allocation7 + $0x1d0] sm:$0xff] %v3580
    %3837 = vst [vmem:[#allocation7 + $0x1d8] sm:$0xff] %v3581
    %3838 = vst [vmem:[#allocation7 + $0x1e0] sm:$0xff] %v3582
    %3839 = vst [vmem:[#allocation7 + $0x1e8] sm:$0xff] %v3583
    %3840 = vst [vmem:[#allocation7 + $0x1f0] sm:$0xff] %v3584
    %3841 = vst [vmem:[#allocation7 + $0x1f8] sm:$0xff] %v3585
    %3842 = vst [vmem:[#allocation7 + $0x200] sm:$0xff] %v3586
    %3843 = vst [vmem:[#allocation7 + $0x208] sm:$0xff] %v3587
    %3844 = vst [vmem:[#allocation7 + $0x210] sm:$0xff] %v3588
    %3845 = vst [vmem:[#allocation7 + $0x218] sm:$0xff] %v3589
    %3846 = vst [vmem:[#allocation7 + $0x220] sm:$0xff] %v3590
    %3847 = vst [vmem:[#allocation7 + $0x228] sm:$0xff] %v3591
    %3848 = vst [vmem:[#allocation7 + $0x230] sm:$0xff] %v3592
    %3849 = vst [vmem:[#allocation7 + $0x238] sm:$0xff] %v3593
    %3850 = vst [vmem:[#allocation7 + $0x240] sm:$0xff] %v3594
    %3851 = vst [vmem:[#allocation7 + $0x248] sm:$0xff] %v3595
    %3852 = vst [vmem:[#allocation7 + $0x250] sm:$0xff] %v3596
    %3853 = vst [vmem:[#allocation7 + $0x258] sm:$0xff] %v3597
    %3854 = vst [vmem:[#allocation7 + $0x260] sm:$0xff] %v3598
    %3855 = vst [vmem:[#allocation7 + $0x268] sm:$0xff] %v3599
    %3856 = vst [vmem:[#allocation7 + $0x270] sm:$0xff] %v3600
    %3857 = vst [vmem:[#allocation7 + $0x278] sm:$0xff] %v3601
    %3858 = vst [vmem:[#allocation7 + $0x280] sm:$0xff] %v3602
    %3859 = vst [vmem:[#allocation7 + $0x288] sm:$0xff] %v3603
    %3860 = vst [vmem:[#allocation7 + $0x290] sm:$0xff] %v3604
    %3861 = vst [vmem:[#allocation7 + $0x298] sm:$0xff] %v3605
    %3862 = vst [vmem:[#allocation7 + $0x2a0] sm:$0xff] %v3606
    %3863 = vst [vmem:[#allocation7 + $0x2a8] sm:$0xff] %v3607
    %3864 = vst [vmem:[#allocation7 + $0x2b0] sm:$0xff] %v3608
    %3865 = vst [vmem:[#allocation7 + $0x2b8] sm:$0xff] %v3609
    %3866 = vst [vmem:[#allocation7 + $0x2c0] sm:$0xff] %v3610
    %3867 = vst [vmem:[#allocation7 + $0x2c8] sm:$0xff] %v3611
    %3868 = vst [vmem:[#allocation7 + $0x2d0] sm:$0xff] %v3612
    %3869 = vst [vmem:[#allocation7 + $0x2d8] sm:$0xff] %v3613
    %3870 = vst [vmem:[#allocation7 + $0x2e0] sm:$0xff] %v3614
    %3871 = vst [vmem:[#allocation7 + $0x2e8] sm:$0xff] %v3615
    %3872 = vst [vmem:[#allocation7 + $0x2f0] sm:$0xff] %v3616
    %3873 = vst [vmem:[#allocation7 + $0x2f8] sm:$0xff] %v3617
    %3874 = vst [vmem:[#allocation7 + $0x300] sm:$0xff] %v3618
    %3875 = vst [vmem:[#allocation7 + $0x308] sm:$0xff] %v3619
    %3876 = vst [vmem:[#allocation7 + $0x310] sm:$0xff] %v3620
    %3877 = vst [vmem:[#allocation7 + $0x318] sm:$0xff] %v3621
    %3878 = vst [vmem:[#allocation7 + $0x320] sm:$0xff] %v3622
    %3879 = vst [vmem:[#allocation7 + $0x328] sm:$0xff] %v3623
    %3880 = vst [vmem:[#allocation7 + $0x330] sm:$0xff] %v3624
    %3881 = vst [vmem:[#allocation7 + $0x338] sm:$0xff] %v3625
    %3882 = vst [vmem:[#allocation7 + $0x340] sm:$0xff] %v3626
    %3883 = vst [vmem:[#allocation7 + $0x348] sm:$0xff] %v3627
    %3884 = vst [vmem:[#allocation7 + $0x350] sm:$0xff] %v3628
    %3885 = vst [vmem:[#allocation7 + $0x358] sm:$0xff] %v3629
    %3886 = vst [vmem:[#allocation7 + $0x360] sm:$0xff] %v3630
    %3887 = vst [vmem:[#allocation7 + $0x368] sm:$0xff] %v3631
    %3888 = vst [vmem:[#allocation7 + $0x370] sm:$0xff] %v3632
    %3889 = vst [vmem:[#allocation7 + $0x378] sm:$0xff] %v3633
    %3890 = vst [vmem:[#allocation7 + $0x380] sm:$0xff] %v3634
    %3891 = vst [vmem:[#allocation7 + $0x388] sm:$0xff] %v3635
    %3892 = vst [vmem:[#allocation7 + $0x390] sm:$0xff] %v3636
    %3893 = vst [vmem:[#allocation7 + $0x398] sm:$0xff] %v3637
    %3894 = vst [vmem:[#allocation7 + $0x3a0] sm:$0xff] %v3638
    %3895 = vst [vmem:[#allocation7 + $0x3a8] sm:$0xff] %v3639
    %3896 = vst [vmem:[#allocation7 + $0x3b0] sm:$0xff] %v3640
    %3897 = vst [vmem:[#allocation7 + $0x3b8] sm:$0xff] %v3641
    %3898 = vst [vmem:[#allocation7 + $0x3c0] sm:$0xff] %v3642
    %3899 = vst [vmem:[#allocation7 + $0x3c8] sm:$0xff] %v3643
    %3900 = vst [vmem:[#allocation7 + $0x3d0] sm:$0xff] %v3644
    %3901 = vst [vmem:[#allocation7 + $0x3d8] sm:$0xff] %v3645
    %3902 = vst [vmem:[#allocation7 + $0x3e0] sm:$0xff] %v3646
    %3903 = vst [vmem:[#allocation7 + $0x3e8] sm:$0xff] %v3647
    %3904 = vst [vmem:[#allocation7 + $0x3f0] sm:$0xff] %v3648
    %3905 = vst [vmem:[#allocation7 + $0x3f8] sm:$0xff] %v3649
    // Predicated region
    $region22: #{tpu_custom_call.1} parent=1 // pred_check
      _
    $region23: #{tpu_custom_call.1} parent=1 // pred_check_branch
      %3907 = sbr.rel (0) target = $region25
    $region24: #{tpu_custom_call.1} parent=1 // pred_region
      %s3909 = ssub.s32 16384, 16384
      %3910 = vsyncadd [#allocation4], %s3909
      %s3911 = sshll.u32 [#allocation7], 4
      %s3912 = int_to_ptr.vmem [resolvable:$true] %s3911
      %3917 = dma.vmem_to_hbm [thread:$0]  %s3912, 16384, %s3, [#allocation4], 128, 128, 8
    $region25: #{tpu_custom_call.1} parent=1 // pred_fallthru
      _
    // Predicated region
    $region26: #{tpu_custom_call.1} parent=1 // pred_check
      _
    $region27: #{tpu_custom_call.1} parent=1 // pred_check_branch
      %3919 = sbr.rel (0) target = $region29
    $region28: #{tpu_custom_call.1} parent=1 // pred_region
      %3920 = dma.done [#allocation4], 16384
    $region29: #{tpu_custom_call.1} parent=1 // pred_fallthru
      _
    %3921 = vsyncpa [#allocation3], 1
    %3922 = vsyncpa [#allocation6], 1
    %3923 = vsyncpa [#allocation4], 1

</llo_original>
